<compile_context>
chip_gen: v7x
topology: tpu7x:2x2x1
jax: 0.10.0
libtpu: 0.0.40
codegen_flags: <defaults>
</compile_context>

<pallas_src>
import jax
import jax.numpy as jnp
from jax.experimental import pallas as pl
from jax.experimental.pallas import tpu as pltpu

TEMPERATURE = 34.0
BN_EPS = 1e-5
_LANE = 128
_MAX_HW_TILE = 16384  # bounds the unrolled per-step chunk loop (<=128 adds/input)


def _recip(x):
    """Reciprocal via the EUP approximate op + one Newton step (~1e-7 rel err)."""
    r = pl.reciprocal(x, approx=True)
    return r * (2.0 - x * r)


def _vmem_budget_bytes():
    """Chip-aware VMEM budget, leaving headroom for compiler-internal scratch."""
    cap = 64 << 20  # conservative default: v7x has 64 MiB per TensorCore
    try:
        cap = int(getattr(pltpu.get_tpu_info(), "vmem_capacity_bytes", cap))
    except Exception:
        pass
    return int(min(cap * 4 // 5, 100 << 20))  # ~51 MiB on v7x, ~100 MiB on v5e/v6e


def _pick_b_tile(B, C, itemsize, budget_bytes):
    """Largest divisor of B whose minimum (hw_tile=128) window + scratch fits."""
    for bt in range(B, 0, -1):
        if B % bt:
            continue
        window = 2 * 2 * bt * C * _LANE * itemsize   # 2 inputs x 2 pipeline buffers
        dense_acc = 2 * bt * C * _LANE * 4           # lane-dense f32 accumulators
        if window + dense_acc <= budget_bytes:
            return bt
    # TODO(synk): if even b_tile=1 at hw_tile=128 overflows VMEM (huge C), the C
    # axis would need its own grid dimension; not implemented.
    return 1


def _pick_hw_tile(hw_pad, per_lane_bytes, budget_bytes):
    """Largest multiple-of-128 divisor of hw_pad (<= _MAX_HW_TILE) fitting budget."""
    best = _LANE
    for m in range(1, hw_pad // _LANE + 1):
        t = _LANE * m
        if t > _MAX_HW_TILE:
            break
        if hw_pad % t == 0 and t * per_lane_bytes <= budget_bytes:
            best = t
    return best


def _make_kernel(total_hw, attn_ch, ker_start, ker_num, tot, hw_tile, b_tile,
                 num_b_tiles):
    inv_hw = 1.0 / float(total_hw)
    A = attn_ch
    n_chunks = hw_tile // _LANE

    def kernel(xr_ref, xn_ref,                  # (b_tile, C, hw_tile) activations
               w_rv_ref, w_nv_ref,              # (C, 2A) fused [q | v_half] weights
               w_fc_ref,                        # (A, A)
               gamma_ref, beta_ref,             # (1, A)
               w_heads_ref, b_heads_ref,        # (A, TOT_PAD), (1, TOT_PAD); 1/T folded
               out_ref,                         # (B, TOT_PAD) packed [ch|fil|sp|ker]
               acc_r, acc_n,                    # (b_tile, C, 128) lane-dense f32 accs
               pooled_r, pooled_n):             # (B, C) f32 pooled sums (full batch)
        b = pl.program_id(0)
        t = pl.program_id(1)

        @pl.when(t == 0)
        def _init():
            acc_r[...] = jnp.zeros_like(acc_r)
            acc_n[...] = jnp.zeros_like(acc_n)

        # Lane-dense accumulation: pure VPU adds over aligned 128-lane chunks
        # (no per-step cross-lane reduce, no lane-sparse store); hides under DMA.
        ar = acc_r[...]
        an = acc_n[...]
        for j in range(n_chunks):
            lo = j * _LANE
            ar = ar + xr_ref[:, :, lo:lo + _LANE].astype(jnp.float32)
            an = an + xn_ref[:, :, lo:lo + _LANE].astype(jnp.float32)
        acc_r[...] = ar
        acc_n[...] = an

        @pl.when(t == pl.num_programs(1) - 1)
        def _finish_rows():
            # Single cross-lane reduce per b-block (runs once, not per step).
            rows_r = jnp.sum(ar, axis=-1)
            rows_n = jnp.sum(an, axis=-1)
            if num_b_tiles == 1:
                pooled_r[...] = rows_r
                pooled_n[...] = rows_n
            else:
                pooled_r[pl.ds(b * b_tile, b_tile), :] = rows_r
                pooled_n[pl.ds(b * b_tile, b_tile), :] = rows_n

        @pl.when((b == pl.num_programs(0) - 1) & (t == pl.num_programs(1) - 1))
        def _tail():
            vr = pooled_r[...] * inv_hw          # (B, C) pooled reference features
            vn = pooled_n[...] * inv_hw          # (B, C) pooled non-reference features

            # Fused 1x1 convs: one matmul per pooled vector (weights pre-transposed).
            rv = jnp.dot(vr, w_rv_ref[...], preferred_element_type=jnp.float32)
            nv = jnp.dot(vn, w_nv_ref[...], preferred_element_type=jnp.float32)
            q = rv[:, :A]
            k = nv[:, :A]
            v = rv[:, A:] + nv[:, A:]            # == cat([vr, vn]) @ w_v.T

            # attn = q @ k^T with H=W=1  ==>  elementwise product; softmax over A.
            logits = q * k
            logits = logits - jnp.max(logits, axis=1, keepdims=True)
            e = jnp.exp(logits)
            attn = e * _recip(jnp.sum(e, axis=1, keepdims=True))
            vx = attn * v                                                     # (B, A)

            # fc -> BatchNorm2d (training-mode batch stats, full batch) -> ReLU.
            h = jnp.dot(vx, w_fc_ref[...], preferred_element_type=jnp.float32)
            mu = jnp.mean(h, axis=0, keepdims=True)
            var = jnp.mean((h - mu) * (h - mu), axis=0, keepdims=True)
            xb = (h - mu) * jax.lax.rsqrt(var + BN_EPS)
            xb = jnp.maximum(xb * gamma_ref[...] + beta_ref[...], 0.0)

            # All four heads fused into one lane-dense matmul (1/T folded in).
            hl = (jnp.dot(xb, w_heads_ref[...], preferred_element_type=jnp.float32)
                  + b_heads_ref[...])                                         # (B, TOT_PAD)

            col = jax.lax.broadcasted_iota(jnp.int32, hl.shape, 1)
            is_ker = (col >= ker_start) & (col < ker_start + ker_num)
            is_valid = col < tot

            sig = _recip(1.0 + jnp.exp(-hl))     # sigmoid heads via EUP reciprocal
            kl = jnp.where(is_ker, hl, jnp.finfo(jnp.float32).min)
            kl = kl - jnp.max(kl, axis=1, keepdims=True)
            ke = jnp.where(is_ker, jnp.exp(kl), 0.0)
            ker = ke * _recip(jnp.sum(ke, axis=1, keepdims=True))

            # Single lane-dense packed store; padding lanes explicitly zeroed.
            out_ref[...] = jnp.where(is_ker, ker, jnp.where(is_valid, sig, 0.0))

    return kernel


def mutual_cross_attention(x_ref, x_nonref, params, *, kernel_size, kernel_num):
    B, C, H, W = x_ref.shape
    HW = H * W
    A = params["w_q"].shape[0]
    out_planes = params["w_fil"].shape[0]
    ks2 = kernel_size * kernel_size
    tot = C + out_planes + ks2 + kernel_num
    tot_pad = max(_LANE, ((tot + _LANE - 1) // _LANE) * _LANE)
    ker_start = C + out_planes + ks2
    # TODO(synk): the module's skip() fast-paths (in_planes==groups==out_planes,
    # kernel_size==1, kernel_num==1 return the scalar 1.0) are not implemented;
    # only the general four-head path is.

    # Keep native dtype on the wire; zero-pad HW to a multiple of 128 only when
    # needed (free for the mean: the kernel divides by the true HW).
    xr = x_ref.reshape(B, C, HW)
    xn = x_nonref.reshape(B, C, HW)
    hw_pad = ((HW + _LANE - 1) // _LANE) * _LANE
    if hw_pad != HW:
        pad = ((0, 0), (0, 0), (0, hw_pad - HW))
        xr = jnp.pad(xr, pad)
        xn = jnp.pad(xn, pad)
    itemsize = jnp.dtype(xr.dtype).itemsize

    # Trace-time weight fusion / pre-transpose / temperature folding (free).
    w_q, w_k, w_v = params["w_q"], params["w_k"], params["w_v"]
    w_rv = jnp.concatenate([w_q, w_v[:, :C]], axis=0).T.astype(jnp.float32)   # (C, 2A)
    w_nv = jnp.concatenate([w_k, w_v[:, C:]], axis=0).T.astype(jnp.float32)   # (C, 2A)
    w_fc_t = params["w_fc"].T.astype(jnp.float32)                             # (A, A)
    inv_t = 1.0 / TEMPERATURE
    w_heads = jnp.concatenate(
        [params["w_ch"], params["w_fil"], params["w_sp"], params["w_ker"]], axis=0) * inv_t
    b_heads = jnp.concatenate(
        [params["b_ch"], params["b_fil"], params["b_sp"], params["b_ker"]], axis=1) * inv_t
    w_heads_t = jnp.zeros((A, tot_pad), jnp.float32).at[:, :tot].set(
        w_heads.T.astype(jnp.float32))
    b_heads_p = jnp.zeros((1, tot_pad), jnp.float32).at[:, :tot].set(
        b_heads.astype(jnp.float32))
    gamma = params["bn_gamma"].astype(jnp.float32)
    beta = params["bn_beta"].astype(jnp.float32)

    # --- chip-aware tiling / VMEM budgeting ---------------------------------
    budget = _vmem_budget_bytes()
    weights_bytes = 2 * 4 * (w_rv.size + w_nv.size + w_fc_t.size + gamma.size
                             + beta.size + w_heads_t.size + b_heads_p.size)
    pooled_bytes = 2 * B * C * 4
    out_bytes = 2 * B * tot_pad * 4
    fixed_bytes = weights_bytes + pooled_bytes + out_bytes

    b_tile = _pick_b_tile(B, C, itemsize, budget - fixed_bytes)
    dense_acc_bytes = 2 * b_tile * C * _LANE * 4
    per_lane_bytes = 2 * 2 * b_tile * C * itemsize    # 2 inputs x 2 pipeline buffers
    hw_tile = _pick_hw_tile(hw_pad, per_lane_bytes,
                            budget - fixed_bytes - dense_acc_bytes)
    num_b_tiles = B // b_tile
    num_hw_tiles = hw_pad // hw_tile
    window_bytes = per_lane_bytes * hw_tile
    vmem_limit = int(min(max(window_bytes + dense_acc_bytes + fixed_bytes + (4 << 20),
                             32 << 20), budget))

    kernel = _make_kernel(HW, A, ker_start, kernel_num, tot, hw_tile, b_tile,
                          num_b_tiles)

    in_specs = [
        pl.BlockSpec((b_tile, C, hw_tile), lambda b, t: (b, 0, t)),
        pl.BlockSpec((b_tile, C, hw_tile), lambda b, t: (b, 0, t)),
        pl.BlockSpec((C, 2 * A), lambda b, t: (0, 0)),
        pl.BlockSpec((C, 2 * A), lambda b, t: (0, 0)),
        pl.BlockSpec((A, A), lambda b, t: (0, 0)),
        pl.BlockSpec((1, A), lambda b, t: (0, 0)),
        pl.BlockSpec((1, A), lambda b, t: (0, 0)),
        pl.BlockSpec((A, tot_pad), lambda b, t: (0, 0)),
        pl.BlockSpec((1, tot_pad), lambda b, t: (0, 0)),
    ]

    cost = pl.CostEstimate(
        flops=int(2 * B * C * hw_pad + 2 * B * C * 4 * A + 2 * B * A * A
                  + 2 * B * A * tot_pad),
        transcendentals=int(B * (A + 2 * tot_pad)),
        bytes_accessed=int(2 * B * C * hw_pad * itemsize
                           + weights_bytes // 2 + pooled_bytes + out_bytes),
    )

    packed = pl.pallas_call(
        kernel,
        out_shape=jax.ShapeDtypeStruct((B, tot_pad), jnp.float32),
        grid_spec=pltpu.PrefetchScalarGridSpec(
            num_scalar_prefetch=0,
            grid=(num_b_tiles, num_hw_tiles),
            in_specs=in_specs,
            out_specs=pl.BlockSpec((B, tot_pad), lambda b, t: (0, 0)),
            scratch_shapes=[pltpu.VMEM((b_tile, C, _LANE), jnp.float32),
                            pltpu.VMEM((b_tile, C, _LANE), jnp.float32),
                            pltpu.VMEM((B, C), jnp.float32),
                            pltpu.VMEM((B, C), jnp.float32)],
        ),
        compiler_params=pltpu.CompilerParams(
            # Both axes must stay sequential: the accumulators / pooled scratch carry
            # across steps and the batch-stat BN tail needs the full batch at the end.
            # TODO(synk): v7x two-TensorCore split (parallel pooling pass + tiny tail
            # pass) is not implemented.
            dimension_semantics=("arbitrary", "arbitrary"),
            vmem_limit_bytes=vmem_limit,
        ),
        cost_estimate=cost,
    )(xr, xn, w_rv, w_nv, w_fc_t, gamma, beta, w_heads_t, b_heads_p)

    # Split the packed lane-dense slab back into the PyTorch output views.
    channel_attention = packed[:, :C].reshape(B, C, 1, 1)
    filter_attention = packed[:, C:C + out_planes].reshape(B, out_planes, 1, 1)
    spatial_attention = packed[:, C + out_planes:ker_start].reshape(
        B, 1, 1, 1, kernel_size, kernel_size)
    kernel_attention = packed[:, ker_start:ker_start + kernel_num].reshape(
        B, kernel_num, 1, 1, 1, 1)
    return channel_attention, filter_attention, spatial_attention, kernel_attention


def init_params(key, in_planes, out_planes, attention_channel, kernel_size, kernel_num):
    """Deterministic init mirroring _initialize_weights (kaiming fan_out/relu, zero bias)."""
    A = attention_channel
    keys = jax.random.split(key, 8)

    def kaiming(k, out_c, in_c):
        std = (2.0 / out_c) ** 0.5  # fan_out = out_c * 1 * 1 for a 1x1 conv
        return std * jax.random.normal(k, (out_c, in_c), jnp.float32)

    return {
        "w_q": kaiming(keys[0], A, in_planes),
        "w_k": kaiming(keys[1], A, in_planes),
        "w_v": kaiming(keys[2], A, 2 * in_planes),
        "w_fc": kaiming(keys[3], A, A),
        "bn_gamma": jnp.ones((1, A), jnp.float32),
        "bn_beta": jnp.zeros((1, A), jnp.float32),
        "w_ch": kaiming(keys[4], in_planes, A),
        "b_ch": jnp.zeros((1, in_planes), jnp.float32),
        "w_fil": kaiming(keys[5], out_planes, A),
        "b_fil": jnp.zeros((1, out_planes), jnp.float32),
        "w_sp": kaiming(keys[6], kernel_size * kernel_size, A),
        "b_sp": jnp.zeros((1, kernel_size * kernel_size), jnp.float32),
        "w_ker": kaiming(keys[7], kernel_num, A),
        "b_ker": jnp.zeros((1, kernel_num), jnp.float32),
    }


def _reference(x_ref, x_nonref, params):
    """Plain-JAX reference of the PyTorch forward (training-mode BN)."""
    vr = jnp.mean(x_ref, axis=(2, 3))
    vn = jnp.mean(x_nonref, axis=(2, 3))
    q = vr @ params["w_q"].T
    k = vn @ params["w_k"].T
    v = jnp.concatenate([vr, vn], axis=1) @ params["w_v"].T
    attn = jax.nn.softmax(q * k, axis=1)
    vx = attn * v
    h = vx @ params["w_fc"].T
    mu = h.mean(0, keepdims=True)
    var = ((h - mu) ** 2).mean(0, keepdims=True)
    x = jnp.maximum((h - mu) / jnp.sqrt(var + BN_EPS) * params["bn_gamma"]
                    + params["bn_beta"], 0.0)
    ch = jax.nn.sigmoid((x @ params["w_ch"].T + params["b_ch"]) / TEMPERATURE)
    fil = jax.nn.sigmoid((x @ params["w_fil"].T + params["b_fil"]) / TEMPERATURE)
    sp = jax.nn.sigmoid((x @ params["w_sp"].T + params["b_sp"]) / TEMPERATURE)
    ker = jax.nn.softmax((x @ params["w_ker"].T + params["b_ker"]) / TEMPERATURE, axis=1)
    return ch, fil, sp, ker


if __name__ == "__main__":
    # f32 reference matmuls so the comparison against the kernel's f32 MXU path is tight.
    jax.config.update("jax_default_matmul_precision", "highest")

    # Small shapes consistent with the module; HW=4096 collapses to one grid step.
    B, H, W = 2, 64, 64
    in_planes, out_planes = 16, 16
    kernel_size, kernel_num = 3, 4
    reduction, min_channel = 0.0625, 16
    attention_channel = max(int(in_planes * reduction), min_channel)  # = 16

    key = jax.random.PRNGKey(0)
    kx, kp = jax.random.split(key)
    x_ref = jax.random.normal(jax.random.fold_in(kx, 0), (B, in_planes, H, W), jnp.float32)
    x_nonref = jax.random.normal(jax.random.fold_in(kx, 1), (B, in_planes, H, W), jnp.float32)
    params = init_params(kp, in_planes, out_planes, attention_channel, kernel_size, kernel_num)

    outs = mutual_cross_attention(x_ref, x_nonref, params,
                                  kernel_size=kernel_size, kernel_num=kernel_num)
    outs = jax.block_until_ready(outs)

    ch, fil, sp, ker = outs
    assert ch.shape == (B, in_planes, 1, 1)
    assert fil.shape == (B, out_planes, 1, 1)
    assert sp.shape == (B, 1, 1, 1, kernel_size, kernel_size)
    assert ker.shape == (B, kernel_num, 1, 1, 1, 1)

    ref_ch, ref_fil, ref_sp, ref_ker = _reference(x_ref, x_nonref, params)
    # 2e-5 tolerance: NR-refined approximate reciprocals + different (chunked)
    # pooling accumulation order vs. the plain-JAX reference.
    for got, ref in ((ch.reshape(B, -1), ref_ch),
                     (fil.reshape(B, -1), ref_fil),
                     (sp.reshape(B, -1), ref_sp),
                     (ker.reshape(B, -1), ref_ker)):
        assert jnp.allclose(got, ref, atol=2e-5, rtol=2e-5), (got, ref)

    print("KERNEL_OK")
</pallas_src>

<mosaic_0001>
module attributes {stable_mosaic.version = 11 : i64} {
  func.func @kernel(%arg0: i32, %arg1: i32, %arg2: memref<2x16x4096xf32, #tpu.memory_space<vmem>>, %arg3: memref<2x16x4096xf32, #tpu.memory_space<vmem>>, %arg4: memref<16x32xf32, #tpu.memory_space<vmem>>, %arg5: memref<16x32xf32, #tpu.memory_space<vmem>>, %arg6: memref<16x16xf32, #tpu.memory_space<vmem>>, %arg7: memref<1x16xf32, #tpu.memory_space<vmem>>, %arg8: memref<1x16xf32, #tpu.memory_space<vmem>>, %arg9: memref<16x128xf32, #tpu.memory_space<vmem>>, %arg10: memref<1x128xf32, #tpu.memory_space<vmem>>, %arg11: memref<2x128xf32, #tpu.memory_space<vmem>>, %arg12: memref<2x16x128xf32, #tpu.memory_space<vmem>>, %arg13: memref<2x16x128xf32, #tpu.memory_space<vmem>>, %arg14: memref<2x16xf32, #tpu.memory_space<vmem>>, %arg15: memref<2x16xf32, #tpu.memory_space<vmem>>) attributes {dimension_semantics = [#tpu.dimension_semantics<arbitrary>, #tpu.dimension_semantics<arbitrary>], iteration_bounds = array<i64: 1, 1>, scalar_prefetch = 0 : i64, scratch_operands = 4 : i64, tpu.core_type = #tpu.core_type<tc>, window_params = [{transform_indices = @transform_0, window_bounds = array<i64: 2, 16, 4096>}, {transform_indices = @transform_1, window_bounds = array<i64: 2, 16, 4096>}, {pipeline_mode = #tpu.pipeline_mode<synchronous>, transform_indices = @transform_2, window_bounds = array<i64: 16, 32>}, {pipeline_mode = #tpu.pipeline_mode<synchronous>, transform_indices = @transform_3, window_bounds = array<i64: 16, 32>}, {pipeline_mode = #tpu.pipeline_mode<synchronous>, transform_indices = @transform_4, window_bounds = array<i64: 16, 16>}, {pipeline_mode = #tpu.pipeline_mode<synchronous>, transform_indices = @transform_5, window_bounds = array<i64: 1, 16>}, {pipeline_mode = #tpu.pipeline_mode<synchronous>, transform_indices = @transform_6, window_bounds = array<i64: 1, 16>}, {pipeline_mode = #tpu.pipeline_mode<synchronous>, transform_indices = @transform_7, window_bounds = array<i64: 16, 128>}, {pipeline_mode = #tpu.pipeline_mode<synchronous>, transform_indices = @transform_8, window_bounds = array<i64: 1, 128>}, {pipeline_mode = #tpu.pipeline_mode<synchronous>, transform_indices = @transform_9, window_bounds = array<i64: 2, 128>}]} {
    %c0_i32 = arith.constant 0 : i32
    %0 = arith.cmpi eq, %arg1, %c0_i32 : i32
    %1 = arith.extui %0 : i1 to i32
    %c0_i32_0 = arith.constant 0 : i32
    %2 = arith.cmpi ne, %1, %c0_i32_0 : i32
    scf.if %2 {
      %cst = arith.constant 0.000000e+00 : f32
      %143 = vector.broadcast %cst : f32 to vector<2x16x128xf32>
      %c0_178 = arith.constant 0 : index
      %c0_179 = arith.constant 0 : index
      %c0_180 = arith.constant 0 : index
      %144 = vector.load %arg12[%c0_178, %c0_179, %c0_180] : memref<2x16x128xf32, #tpu.memory_space<vmem>>, vector<2x16x128xf32>
      tpu.vector_store %arg12[%c0_178, %c0_179, %c0_180], %143 {strides = array<i32>} : memref<2x16x128xf32, #tpu.memory_space<vmem>>, vector<2x16x128xf32>,
      %cst_181 = arith.constant 0.000000e+00 : f32
      %145 = vector.broadcast %cst_181 : f32 to vector<2x16x128xf32>
      %c0_182 = arith.constant 0 : index
      %c0_183 = arith.constant 0 : index
      %c0_184 = arith.constant 0 : index
      %146 = vector.load %arg13[%c0_182, %c0_183, %c0_184] : memref<2x16x128xf32, #tpu.memory_space<vmem>>, vector<2x16x128xf32>
      tpu.vector_store %arg13[%c0_182, %c0_183, %c0_184], %145 {strides = array<i32>} : memref<2x16x128xf32, #tpu.memory_space<vmem>>, vector<2x16x128xf32>,
    } else {
    }
    %c0 = arith.constant 0 : index
    %c0_1 = arith.constant 0 : index
    %c0_2 = arith.constant 0 : index
    %3 = vector.load %arg12[%c0, %c0_1, %c0_2] : memref<2x16x128xf32, #tpu.memory_space<vmem>>, vector<2x16x128xf32>
    %c0_3 = arith.constant 0 : index
    %c0_4 = arith.constant 0 : index
    %c0_5 = arith.constant 0 : index
    %4 = vector.load %arg13[%c0_3, %c0_4, %c0_5] : memref<2x16x128xf32, #tpu.memory_space<vmem>>, vector<2x16x128xf32>
    %c0_6 = arith.constant 0 : index
    %c0_7 = arith.constant 0 : index
    %c0_8 = arith.constant 0 : index
    %5 = vector.load %arg2[%c0_6, %c0_7, %c0_8] : memref<2x16x4096xf32, #tpu.memory_space<vmem>>, vector<2x16x128xf32>
    %6 = arith.addf %3, %5 : vector<2x16x128xf32>
    %c0_9 = arith.constant 0 : index
    %c0_10 = arith.constant 0 : index
    %c0_11 = arith.constant 0 : index
    %7 = vector.load %arg3[%c0_9, %c0_10, %c0_11] : memref<2x16x4096xf32, #tpu.memory_space<vmem>>, vector<2x16x128xf32>
    %8 = arith.addf %4, %7 : vector<2x16x128xf32>
    %c0_12 = arith.constant 0 : index
    %c0_13 = arith.constant 0 : index
    %c128 = arith.constant 128 : index
    %9 = vector.load %arg2[%c0_12, %c0_13, %c128] : memref<2x16x4096xf32, #tpu.memory_space<vmem>>, vector<2x16x128xf32>
    %10 = arith.addf %6, %9 : vector<2x16x128xf32>
    %c0_14 = arith.constant 0 : index
    %c0_15 = arith.constant 0 : index
    %c128_16 = arith.constant 128 : index
    %11 = vector.load %arg3[%c0_14, %c0_15, %c128_16] : memref<2x16x4096xf32, #tpu.memory_space<vmem>>, vector<2x16x128xf32>
    %12 = arith.addf %8, %11 : vector<2x16x128xf32>
    %c0_17 = arith.constant 0 : index
    %c0_18 = arith.constant 0 : index
    %c256 = arith.constant 256 : index
    %13 = vector.load %arg2[%c0_17, %c0_18, %c256] : memref<2x16x4096xf32, #tpu.memory_space<vmem>>, vector<2x16x128xf32>
    %14 = arith.addf %10, %13 : vector<2x16x128xf32>
    %c0_19 = arith.constant 0 : index
    %c0_20 = arith.constant 0 : index
    %c256_21 = arith.constant 256 : index
    %15 = vector.load %arg3[%c0_19, %c0_20, %c256_21] : memref<2x16x4096xf32, #tpu.memory_space<vmem>>, vector<2x16x128xf32>
    %16 = arith.addf %12, %15 : vector<2x16x128xf32>
    %c0_22 = arith.constant 0 : index
    %c0_23 = arith.constant 0 : index
    %c384 = arith.constant 384 : index
    %17 = vector.load %arg2[%c0_22, %c0_23, %c384] : memref<2x16x4096xf32, #tpu.memory_space<vmem>>, vector<2x16x128xf32>
    %18 = arith.addf %14, %17 : vector<2x16x128xf32>
    %c0_24 = arith.constant 0 : index
    %c0_25 = arith.constant 0 : index
    %c384_26 = arith.constant 384 : index
    %19 = vector.load %arg3[%c0_24, %c0_25, %c384_26] : memref<2x16x4096xf32, #tpu.memory_space<vmem>>, vector<2x16x128xf32>
    %20 = arith.addf %16, %19 : vector<2x16x128xf32>
    %c0_27 = arith.constant 0 : index
    %c0_28 = arith.constant 0 : index
    %c512 = arith.constant 512 : index
    %21 = vector.load %arg2[%c0_27, %c0_28, %c512] : memref<2x16x4096xf32, #tpu.memory_space<vmem>>, vector<2x16x128xf32>
    %22 = arith.addf %18, %21 : vector<2x16x128xf32>
    %c0_29 = arith.constant 0 : index
    %c0_30 = arith.constant 0 : index
    %c512_31 = arith.constant 512 : index
    %23 = vector.load %arg3[%c0_29, %c0_30, %c512_31] : memref<2x16x4096xf32, #tpu.memory_space<vmem>>, vector<2x16x128xf32>
    %24 = arith.addf %20, %23 : vector<2x16x128xf32>
    %c0_32 = arith.constant 0 : index
    %c0_33 = arith.constant 0 : index
    %c640 = arith.constant 640 : index
    %25 = vector.load %arg2[%c0_32, %c0_33, %c640] : memref<2x16x4096xf32, #tpu.memory_space<vmem>>, vector<2x16x128xf32>
    %26 = arith.addf %22, %25 : vector<2x16x128xf32>
    %c0_34 = arith.constant 0 : index
    %c0_35 = arith.constant 0 : index
    %c640_36 = arith.constant 640 : index
    %27 = vector.load %arg3[%c0_34, %c0_35, %c640_36] : memref<2x16x4096xf32, #tpu.memory_space<vmem>>, vector<2x16x128xf32>
    %28 = arith.addf %24, %27 : vector<2x16x128xf32>
    %c0_37 = arith.constant 0 : index
    %c0_38 = arith.constant 0 : index
    %c768 = arith.constant 768 : index
    %29 = vector.load %arg2[%c0_37, %c0_38, %c768] : memref<2x16x4096xf32, #tpu.memory_space<vmem>>, vector<2x16x128xf32>
    %30 = arith.addf %26, %29 : vector<2x16x128xf32>
    %c0_39 = arith.constant 0 : index
    %c0_40 = arith.constant 0 : index
    %c768_41 = arith.constant 768 : index
    %31 = vector.load %arg3[%c0_39, %c0_40, %c768_41] : memref<2x16x4096xf32, #tpu.memory_space<vmem>>, vector<2x16x128xf32>
    %32 = arith.addf %28, %31 : vector<2x16x128xf32>
    %c0_42 = arith.constant 0 : index
    %c0_43 = arith.constant 0 : index
    %c896 = arith.constant 896 : index
    %33 = vector.load %arg2[%c0_42, %c0_43, %c896] : memref<2x16x4096xf32, #tpu.memory_space<vmem>>, vector<2x16x128xf32>
    %34 = arith.addf %30, %33 : vector<2x16x128xf32>
    %c0_44 = arith.constant 0 : index
    %c0_45 = arith.constant 0 : index
    %c896_46 = arith.constant 896 : index
    %35 = vector.load %arg3[%c0_44, %c0_45, %c896_46] : memref<2x16x4096xf32, #tpu.memory_space<vmem>>, vector<2x16x128xf32>
    %36 = arith.addf %32, %35 : vector<2x16x128xf32>
    %c0_47 = arith.constant 0 : index
    %c0_48 = arith.constant 0 : index
    %c1024 = arith.constant 1024 : index
    %37 = vector.load %arg2[%c0_47, %c0_48, %c1024] : memref<2x16x4096xf32, #tpu.memory_space<vmem>>, vector<2x16x128xf32>
    %38 = arith.addf %34, %37 : vector<2x16x128xf32>
    %c0_49 = arith.constant 0 : index
    %c0_50 = arith.constant 0 : index
    %c1024_51 = arith.constant 1024 : index
    %39 = vector.load %arg3[%c0_49, %c0_50, %c1024_51] : memref<2x16x4096xf32, #tpu.memory_space<vmem>>, vector<2x16x128xf32>
    %40 = arith.addf %36, %39 : vector<2x16x128xf32>
    %c0_52 = arith.constant 0 : index
    %c0_53 = arith.constant 0 : index
    %c1152 = arith.constant 1152 : index
    %41 = vector.load %arg2[%c0_52, %c0_53, %c1152] : memref<2x16x4096xf32, #tpu.memory_space<vmem>>, vector<2x16x128xf32>
    %42 = arith.addf %38, %41 : vector<2x16x128xf32>
    %c0_54 = arith.constant 0 : index
    %c0_55 = arith.constant 0 : index
    %c1152_56 = arith.constant 1152 : index
    %43 = vector.load %arg3[%c0_54, %c0_55, %c1152_56] : memref<2x16x4096xf32, #tpu.memory_space<vmem>>, vector<2x16x128xf32>
    %44 = arith.addf %40, %43 : vector<2x16x128xf32>
    %c0_57 = arith.constant 0 : index
    %c0_58 = arith.constant 0 : index
    %c1280 = arith.constant 1280 : index
    %45 = vector.load %arg2[%c0_57, %c0_58, %c1280] : memref<2x16x4096xf32, #tpu.memory_space<vmem>>, vector<2x16x128xf32>
    %46 = arith.addf %42, %45 : vector<2x16x128xf32>
    %c0_59 = arith.constant 0 : index
    %c0_60 = arith.constant 0 : index
    %c1280_61 = arith.constant 1280 : index
    %47 = vector.load %arg3[%c0_59, %c0_60, %c1280_61] : memref<2x16x4096xf32, #tpu.memory_space<vmem>>, vector<2x16x128xf32>
    %48 = arith.addf %44, %47 : vector<2x16x128xf32>
    %c0_62 = arith.constant 0 : index
    %c0_63 = arith.constant 0 : index
    %c1408 = arith.constant 1408 : index
    %49 = vector.load %arg2[%c0_62, %c0_63, %c1408] : memref<2x16x4096xf32, #tpu.memory_space<vmem>>, vector<2x16x128xf32>
    %50 = arith.addf %46, %49 : vector<2x16x128xf32>
    %c0_64 = arith.constant 0 : index
    %c0_65 = arith.constant 0 : index
    %c1408_66 = arith.constant 1408 : index
    %51 = vector.load %arg3[%c0_64, %c0_65, %c1408_66] : memref<2x16x4096xf32, #tpu.memory_space<vmem>>, vector<2x16x128xf32>
    %52 = arith.addf %48, %51 : vector<2x16x128xf32>
    %c0_67 = arith.constant 0 : index
    %c0_68 = arith.constant 0 : index
    %c1536 = arith.constant 1536 : index
    %53 = vector.load %arg2[%c0_67, %c0_68, %c1536] : memref<2x16x4096xf32, #tpu.memory_space<vmem>>, vector<2x16x128xf32>
    %54 = arith.addf %50, %53 : vector<2x16x128xf32>
    %c0_69 = arith.constant 0 : index
    %c0_70 = arith.constant 0 : index
    %c1536_71 = arith.constant 1536 : index
    %55 = vector.load %arg3[%c0_69, %c0_70, %c1536_71] : memref<2x16x4096xf32, #tpu.memory_space<vmem>>, vector<2x16x128xf32>
    %56 = arith.addf %52, %55 : vector<2x16x128xf32>
    %c0_72 = arith.constant 0 : index
    %c0_73 = arith.constant 0 : index
    %c1664 = arith.constant 1664 : index
    %57 = vector.load %arg2[%c0_72, %c0_73, %c1664] : memref<2x16x4096xf32, #tpu.memory_space<vmem>>, vector<2x16x128xf32>
    %58 = arith.addf %54, %57 : vector<2x16x128xf32>
    %c0_74 = arith.constant 0 : index
    %c0_75 = arith.constant 0 : index
    %c1664_76 = arith.constant 1664 : index
    %59 = vector.load %arg3[%c0_74, %c0_75, %c1664_76] : memref<2x16x4096xf32, #tpu.memory_space<vmem>>, vector<2x16x128xf32>
    %60 = arith.addf %56, %59 : vector<2x16x128xf32>
    %c0_77 = arith.constant 0 : index
    %c0_78 = arith.constant 0 : index
    %c1792 = arith.constant 1792 : index
    %61 = vector.load %arg2[%c0_77, %c0_78, %c1792] : memref<2x16x4096xf32, #tpu.memory_space<vmem>>, vector<2x16x128xf32>
    %62 = arith.addf %58, %61 : vector<2x16x128xf32>
    %c0_79 = arith.constant 0 : index
    %c0_80 = arith.constant 0 : index
    %c1792_81 = arith.constant 1792 : index
    %63 = vector.load %arg3[%c0_79, %c0_80, %c1792_81] : memref<2x16x4096xf32, #tpu.memory_space<vmem>>, vector<2x16x128xf32>
    %64 = arith.addf %60, %63 : vector<2x16x128xf32>
    %c0_82 = arith.constant 0 : index
    %c0_83 = arith.constant 0 : index
    %c1920 = arith.constant 1920 : index
    %65 = vector.load %arg2[%c0_82, %c0_83, %c1920] : memref<2x16x4096xf32, #tpu.memory_space<vmem>>, vector<2x16x128xf32>
    %66 = arith.addf %62, %65 : vector<2x16x128xf32>
    %c0_84 = arith.constant 0 : index
    %c0_85 = arith.constant 0 : index
    %c1920_86 = arith.constant 1920 : index
    %67 = vector.load %arg3[%c0_84, %c0_85, %c1920_86] : memref<2x16x4096xf32, #tpu.memory_space<vmem>>, vector<2x16x128xf32>
    %68 = arith.addf %64, %67 : vector<2x16x128xf32>
    %c0_87 = arith.constant 0 : index
    %c0_88 = arith.constant 0 : index
    %c2048 = arith.constant 2048 : index
    %69 = vector.load %arg2[%c0_87, %c0_88, %c2048] : memref<2x16x4096xf32, #tpu.memory_space<vmem>>, vector<2x16x128xf32>
    %70 = arith.addf %66, %69 : vector<2x16x128xf32>
    %c0_89 = arith.constant 0 : index
    %c0_90 = arith.constant 0 : index
    %c2048_91 = arith.constant 2048 : index
    %71 = vector.load %arg3[%c0_89, %c0_90, %c2048_91] : memref<2x16x4096xf32, #tpu.memory_space<vmem>>, vector<2x16x128xf32>
    %72 = arith.addf %68, %71 : vector<2x16x128xf32>
    %c0_92 = arith.constant 0 : index
    %c0_93 = arith.constant 0 : index
    %c2176 = arith.constant 2176 : index
    %73 = vector.load %arg2[%c0_92, %c0_93, %c2176] : memref<2x16x4096xf32, #tpu.memory_space<vmem>>, vector<2x16x128xf32>
    %74 = arith.addf %70, %73 : vector<2x16x128xf32>
    %c0_94 = arith.constant 0 : index
    %c0_95 = arith.constant 0 : index
    %c2176_96 = arith.constant 2176 : index
    %75 = vector.load %arg3[%c0_94, %c0_95, %c2176_96] : memref<2x16x4096xf32, #tpu.memory_space<vmem>>, vector<2x16x128xf32>
    %76 = arith.addf %72, %75 : vector<2x16x128xf32>
    %c0_97 = arith.constant 0 : index
    %c0_98 = arith.constant 0 : index
    %c2304 = arith.constant 2304 : index
    %77 = vector.load %arg2[%c0_97, %c0_98, %c2304] : memref<2x16x4096xf32, #tpu.memory_space<vmem>>, vector<2x16x128xf32>
    %78 = arith.addf %74, %77 : vector<2x16x128xf32>
    %c0_99 = arith.constant 0 : index
    %c0_100 = arith.constant 0 : index
    %c2304_101 = arith.constant 2304 : index
    %79 = vector.load %arg3[%c0_99, %c0_100, %c2304_101] : memref<2x16x4096xf32, #tpu.memory_space<vmem>>, vector<2x16x128xf32>
    %80 = arith.addf %76, %79 : vector<2x16x128xf32>
    %c0_102 = arith.constant 0 : index
    %c0_103 = arith.constant 0 : index
    %c2432 = arith.constant 2432 : index
    %81 = vector.load %arg2[%c0_102, %c0_103, %c2432] : memref<2x16x4096xf32, #tpu.memory_space<vmem>>, vector<2x16x128xf32>
    %82 = arith.addf %78, %81 : vector<2x16x128xf32>
    %c0_104 = arith.constant 0 : index
    %c0_105 = arith.constant 0 : index
    %c2432_106 = arith.constant 2432 : index
    %83 = vector.load %arg3[%c0_104, %c0_105, %c2432_106] : memref<2x16x4096xf32, #tpu.memory_space<vmem>>, vector<2x16x128xf32>
    %84 = arith.addf %80, %83 : vector<2x16x128xf32>
    %c0_107 = arith.constant 0 : index
    %c0_108 = arith.constant 0 : index
    %c2560 = arith.constant 2560 : index
    %85 = vector.load %arg2[%c0_107, %c0_108, %c2560] : memref<2x16x4096xf32, #tpu.memory_space<vmem>>, vector<2x16x128xf32>
    %86 = arith.addf %82, %85 : vector<2x16x128xf32>
    %c0_109 = arith.constant 0 : index
    %c0_110 = arith.constant 0 : index
    %c2560_111 = arith.constant 2560 : index
    %87 = vector.load %arg3[%c0_109, %c0_110, %c2560_111] : memref<2x16x4096xf32, #tpu.memory_space<vmem>>, vector<2x16x128xf32>
    %88 = arith.addf %84, %87 : vector<2x16x128xf32>
    %c0_112 = arith.constant 0 : index
    %c0_113 = arith.constant 0 : index
    %c2688 = arith.constant 2688 : index
    %89 = vector.load %arg2[%c0_112, %c0_113, %c2688] : memref<2x16x4096xf32, #tpu.memory_space<vmem>>, vector<2x16x128xf32>
    %90 = arith.addf %86, %89 : vector<2x16x128xf32>
    %c0_114 = arith.constant 0 : index
    %c0_115 = arith.constant 0 : index
    %c2688_116 = arith.constant 2688 : index
    %91 = vector.load %arg3[%c0_114, %c0_115, %c2688_116] : memref<2x16x4096xf32, #tpu.memory_space<vmem>>, vector<2x16x128xf32>
    %92 = arith.addf %88, %91 : vector<2x16x128xf32>
    %c0_117 = arith.constant 0 : index
    %c0_118 = arith.constant 0 : index
    %c2816 = arith.constant 2816 : index
    %93 = vector.load %arg2[%c0_117, %c0_118, %c2816] : memref<2x16x4096xf32, #tpu.memory_space<vmem>>, vector<2x16x128xf32>
    %94 = arith.addf %90, %93 : vector<2x16x128xf32>
    %c0_119 = arith.constant 0 : index
    %c0_120 = arith.constant 0 : index
    %c2816_121 = arith.constant 2816 : index
    %95 = vector.load %arg3[%c0_119, %c0_120, %c2816_121] : memref<2x16x4096xf32, #tpu.memory_space<vmem>>, vector<2x16x128xf32>
    %96 = arith.addf %92, %95 : vector<2x16x128xf32>
    %c0_122 = arith.constant 0 : index
    %c0_123 = arith.constant 0 : index
    %c2944 = arith.constant 2944 : index
    %97 = vector.load %arg2[%c0_122, %c0_123, %c2944] : memref<2x16x4096xf32, #tpu.memory_space<vmem>>, vector<2x16x128xf32>
    %98 = arith.addf %94, %97 : vector<2x16x128xf32>
    %c0_124 = arith.constant 0 : index
    %c0_125 = arith.constant 0 : index
    %c2944_126 = arith.constant 2944 : index
    %99 = vector.load %arg3[%c0_124, %c0_125, %c2944_126] : memref<2x16x4096xf32, #tpu.memory_space<vmem>>, vector<2x16x128xf32>
    %100 = arith.addf %96, %99 : vector<2x16x128xf32>
    %c0_127 = arith.constant 0 : index
    %c0_128 = arith.constant 0 : index
    %c3072 = arith.constant 3072 : index
    %101 = vector.load %arg2[%c0_127, %c0_128, %c3072] : memref<2x16x4096xf32, #tpu.memory_space<vmem>>, vector<2x16x128xf32>
    %102 = arith.addf %98, %101 : vector<2x16x128xf32>
    %c0_129 = arith.constant 0 : index
    %c0_130 = arith.constant 0 : index
    %c3072_131 = arith.constant 3072 : index
    %103 = vector.load %arg3[%c0_129, %c0_130, %c3072_131] : memref<2x16x4096xf32, #tpu.memory_space<vmem>>, vector<2x16x128xf32>
    %104 = arith.addf %100, %103 : vector<2x16x128xf32>
    %c0_132 = arith.constant 0 : index
    %c0_133 = arith.constant 0 : index
    %c3200 = arith.constant 3200 : index
    %105 = vector.load %arg2[%c0_132, %c0_133, %c3200] : memref<2x16x4096xf32, #tpu.memory_space<vmem>>, vector<2x16x128xf32>
    %106 = arith.addf %102, %105 : vector<2x16x128xf32>
    %c0_134 = arith.constant 0 : index
    %c0_135 = arith.constant 0 : index
    %c3200_136 = arith.constant 3200 : index
    %107 = vector.load %arg3[%c0_134, %c0_135, %c3200_136] : memref<2x16x4096xf32, #tpu.memory_space<vmem>>, vector<2x16x128xf32>
    %108 = arith.addf %104, %107 : vector<2x16x128xf32>
    %c0_137 = arith.constant 0 : index
    %c0_138 = arith.constant 0 : index
    %c3328 = arith.constant 3328 : index
    %109 = vector.load %arg2[%c0_137, %c0_138, %c3328] : memref<2x16x4096xf32, #tpu.memory_space<vmem>>, vector<2x16x128xf32>
    %110 = arith.addf %106, %109 : vector<2x16x128xf32>
    %c0_139 = arith.constant 0 : index
    %c0_140 = arith.constant 0 : index
    %c3328_141 = arith.constant 3328 : index
    %111 = vector.load %arg3[%c0_139, %c0_140, %c3328_141] : memref<2x16x4096xf32, #tpu.memory_space<vmem>>, vector<2x16x128xf32>
    %112 = arith.addf %108, %111 : vector<2x16x128xf32>
    %c0_142 = arith.constant 0 : index
    %c0_143 = arith.constant 0 : index
    %c3456 = arith.constant 3456 : index
    %113 = vector.load %arg2[%c0_142, %c0_143, %c3456] : memref<2x16x4096xf32, #tpu.memory_space<vmem>>, vector<2x16x128xf32>
    %114 = arith.addf %110, %113 : vector<2x16x128xf32>
    %c0_144 = arith.constant 0 : index
    %c0_145 = arith.constant 0 : index
    %c3456_146 = arith.constant 3456 : index
    %115 = vector.load %arg3[%c0_144, %c0_145, %c3456_146] : memref<2x16x4096xf32, #tpu.memory_space<vmem>>, vector<2x16x128xf32>
    %116 = arith.addf %112, %115 : vector<2x16x128xf32>
    %c0_147 = arith.constant 0 : index
    %c0_148 = arith.constant 0 : index
    %c3584 = arith.constant 3584 : index
    %117 = vector.load %arg2[%c0_147, %c0_148, %c3584] : memref<2x16x4096xf32, #tpu.memory_space<vmem>>, vector<2x16x128xf32>
    %118 = arith.addf %114, %117 : vector<2x16x128xf32>
    %c0_149 = arith.constant 0 : index
    %c0_150 = arith.constant 0 : index
    %c3584_151 = arith.constant 3584 : index
    %119 = vector.load %arg3[%c0_149, %c0_150, %c3584_151] : memref<2x16x4096xf32, #tpu.memory_space<vmem>>, vector<2x16x128xf32>
    %120 = arith.addf %116, %119 : vector<2x16x128xf32>
    %c0_152 = arith.constant 0 : index
    %c0_153 = arith.constant 0 : index
    %c3712 = arith.constant 3712 : index
    %121 = vector.load %arg2[%c0_152, %c0_153, %c3712] : memref<2x16x4096xf32, #tpu.memory_space<vmem>>, vector<2x16x128xf32>
    %122 = arith.addf %118, %121 : vector<2x16x128xf32>
    %c0_154 = arith.constant 0 : index
    %c0_155 = arith.constant 0 : index
    %c3712_156 = arith.constant 3712 : index
    %123 = vector.load %arg3[%c0_154, %c0_155, %c3712_156] : memref<2x16x4096xf32, #tpu.memory_space<vmem>>, vector<2x16x128xf32>
    %124 = arith.addf %120, %123 : vector<2x16x128xf32>
    %c0_157 = arith.constant 0 : index
    %c0_158 = arith.constant 0 : index
    %c3840 = arith.constant 3840 : index
    %125 = vector.load %arg2[%c0_157, %c0_158, %c3840] : memref<2x16x4096xf32, #tpu.memory_space<vmem>>, vector<2x16x128xf32>
    %126 = arith.addf %122, %125 : vector<2x16x128xf32>
    %c0_159 = arith.constant 0 : index
    %c0_160 = arith.constant 0 : index
    %c3840_161 = arith.constant 3840 : index
    %127 = vector.load %arg3[%c0_159, %c0_160, %c3840_161] : memref<2x16x4096xf32, #tpu.memory_space<vmem>>, vector<2x16x128xf32>
    %128 = arith.addf %124, %127 : vector<2x16x128xf32>
    %c0_162 = arith.constant 0 : index
    %c0_163 = arith.constant 0 : index
    %c3968 = arith.constant 3968 : index
    %129 = vector.load %arg2[%c0_162, %c0_163, %c3968] : memref<2x16x4096xf32, #tpu.memory_space<vmem>>, vector<2x16x128xf32>
    %130 = arith.addf %126, %129 : vector<2x16x128xf32>
    %c0_164 = arith.constant 0 : index
    %c0_165 = arith.constant 0 : index
    %c3968_166 = arith.constant 3968 : index
    %131 = vector.load %arg3[%c0_164, %c0_165, %c3968_166] : memref<2x16x4096xf32, #tpu.memory_space<vmem>>, vector<2x16x128xf32>
    %132 = arith.addf %128, %131 : vector<2x16x128xf32>
    %c0_167 = arith.constant 0 : index
    %c0_168 = arith.constant 0 : index
    %c0_169 = arith.constant 0 : index
    %133 = vector.load %arg12[%c0_167, %c0_168, %c0_169] : memref<2x16x128xf32, #tpu.memory_space<vmem>>, vector<2x16x128xf32>
    tpu.vector_store %arg12[%c0_167, %c0_168, %c0_169], %130 {strides = array<i32>} : memref<2x16x128xf32, #tpu.memory_space<vmem>>, vector<2x16x128xf32>,
    %c0_170 = arith.constant 0 : index
    %c0_171 = arith.constant 0 : index
    %c0_172 = arith.constant 0 : index
    %134 = vector.load %arg13[%c0_170, %c0_171, %c0_172] : memref<2x16x128xf32, #tpu.memory_space<vmem>>, vector<2x16x128xf32>
    tpu.vector_store %arg13[%c0_170, %c0_171, %c0_172], %132 {strides = array<i32>} : memref<2x16x128xf32, #tpu.memory_space<vmem>>, vector<2x16x128xf32>,
    %c0_i32_173 = arith.constant 0 : i32
    %135 = arith.cmpi eq, %arg1, %c0_i32_173 : i32
    %136 = arith.extui %135 : i1 to i32
    %c0_i32_174 = arith.constant 0 : i32
    %137 = arith.cmpi ne, %136, %c0_i32_174 : i32
    scf.if %137 {
      %cst = arith.constant dense<0.000000e+00> : vector<2x16xf32>
      %143 = vector.multi_reduction <add>, %130, %cst [2] : vector<2x16x128xf32> to vector<2x16xf32>
      %cst_178 = arith.constant dense<0.000000e+00> : vector<2x16xf32>
      %144 = vector.multi_reduction <add>, %132, %cst_178 [2] : vector<2x16x128xf32> to vector<2x16xf32>
      %c0_179 = arith.constant 0 : index
      %c0_180 = arith.constant 0 : index
      %145 = vector.load %arg14[%c0_179, %c0_180] : memref<2x16xf32, #tpu.memory_space<vmem>>, vector<2x16xf32>
      tpu.vector_store %arg14[%c0_179, %c0_180], %143 {strides = array<i32>} : memref<2x16xf32, #tpu.memory_space<vmem>>, vector<2x16xf32>,
      %c0_181 = arith.constant 0 : index
      %c0_182 = arith.constant 0 : index
      %146 = vector.load %arg15[%c0_181, %c0_182] : memref<2x16xf32, #tpu.memory_space<vmem>>, vector<2x16xf32>
      tpu.vector_store %arg15[%c0_181, %c0_182], %144 {strides = array<i32>} : memref<2x16xf32, #tpu.memory_space<vmem>>, vector<2x16xf32>,
    } else {
    }
    %c0_i32_175 = arith.constant 0 : i32
    %138 = arith.cmpi eq, %arg0, %c0_i32_175 : i32
    %c0_i32_176 = arith.constant 0 : i32
    %139 = arith.cmpi eq, %arg1, %c0_i32_176 : i32
    %140 = arith.andi %138, %139 : i1
    %141 = arith.extui %140 : i1 to i32
    %c0_i32_177 = arith.constant 0 : i32
    %142 = arith.cmpi ne, %141, %c0_i32_177 : i32
    scf.if %142 {
      %c0_178 = arith.constant 0 : index
      %c0_179 = arith.constant 0 : index
      %143 = vector.load %arg14[%c0_178, %c0_179] : memref<2x16xf32, #tpu.memory_space<vmem>>, vector<2x16xf32>
      %cst = arith.constant 2.44140625E-4 : f32
      %144 = vector.broadcast %cst : f32 to vector<2x16xf32>
      %145 = arith.mulf %143, %144 : vector<2x16xf32>
      %c0_180 = arith.constant 0 : index
      %c0_181 = arith.constant 0 : index
      %146 = vector.load %arg15[%c0_180, %c0_181] : memref<2x16xf32, #tpu.memory_space<vmem>>, vector<2x16xf32>
      %cst_182 = arith.constant 2.44140625E-4 : f32
      %147 = vector.broadcast %cst_182 : f32 to vector<2x16xf32>
      %148 = arith.mulf %146, %147 : vector<2x16xf32>
      %c0_183 = arith.constant 0 : index
      %c0_184 = arith.constant 0 : index
      %149 = vector.load %arg4[%c0_183, %c0_184] : memref<16x32xf32, #tpu.memory_space<vmem>>, vector<16x32xf32>
      %cst_185 = arith.constant dense<0.000000e+00> : vector<2x32xf32>
      %150 = tpu.matmul %145, %149, %cst_185 {dimension_numbers = #tpu.dot_dimension_numbers<[1], [0], [0], [1], [0, 0, 1, 1], [], []>, precision = #tpu.contract_precision<fp32>} : vector<2x16xf32>, vector<16x32xf32>, vector<2x32xf32> -> vector<2x32xf32>
      %c0_186 = arith.constant 0 : index
      %c0_187 = arith.constant 0 : index
      %151 = vector.load %arg5[%c0_186, %c0_187] : memref<16x32xf32, #tpu.memory_space<vmem>>, vector<16x32xf32>
      %cst_188 = arith.constant dense<0.000000e+00> : vector<2x32xf32>
      %152 = tpu.matmul %148, %151, %cst_188 {dimension_numbers = #tpu.dot_dimension_numbers<[1], [0], [0], [1], [0, 0, 1, 1], [], []>, precision = #tpu.contract_precision<fp32>} : vector<2x16xf32>, vector<16x32xf32>, vector<2x32xf32> -> vector<2x32xf32>
      %153 = vector.extract_strided_slice %150 {offsets = [0, 0], sizes = [2, 16], strides = [1, 1]} : vector<2x32xf32> to vector<2x16xf32>
      %154 = vector.extract_strided_slice %152 {offsets = [0, 0], sizes = [2, 16], strides = [1, 1]} : vector<2x32xf32> to vector<2x16xf32>
      %155 = vector.extract_strided_slice %150 {offsets = [0, 16], sizes = [2, 16], strides = [1, 1]} : vector<2x32xf32> to vector<2x16xf32>
      %156 = vector.extract_strided_slice %152 {offsets = [0, 16], sizes = [2, 16], strides = [1, 1]} : vector<2x32xf32> to vector<2x16xf32>
      %157 = arith.addf %155, %156 : vector<2x16xf32>
      %158 = arith.mulf %153, %154 : vector<2x16xf32>
      %cst_189 = arith.constant dense<0xFF800000> : vector<2xf32>
      %159 = vector.multi_reduction <maximumf>, %158, %cst_189 [1] : vector<2x16xf32> to vector<2xf32>
      %160 = vector.shape_cast %159 : vector<2xf32> to vector<2x1xf32>
      %161 = vector.broadcast %160 : vector<2x1xf32> to vector<2x16xf32>
      %162 = arith.subf %158, %161 : vector<2x16xf32>
      %163 = math.exp %162 : vector<2x16xf32>
      %cst_190 = arith.constant dense<0.000000e+00> : vector<2xf32>
      %164 = vector.multi_reduction <add>, %163, %cst_190 [1] : vector<2x16xf32> to vector<2xf32>
      %165 = vector.shape_cast %164 : vector<2xf32> to vector<2x1xf32>
      %166 = tpu.reciprocal %165 {approx = true} : vector<2x1xf32> -> vector<2x1xf32>
      %167 = arith.mulf %165, %166 : vector<2x1xf32>
      %cst_191 = arith.constant 2.000000e+00 : f32
      %168 = vector.broadcast %cst_191 : f32 to vector<2x1xf32>
      %169 = arith.subf %168, %167 : vector<2x1xf32>
      %170 = arith.mulf %166, %169 : vector<2x1xf32>
      %171 = vector.broadcast %170 : vector<2x1xf32> to vector<2x16xf32>
      %172 = arith.mulf %163, %171 : vector<2x16xf32>
      %173 = arith.mulf %172, %157 : vector<2x16xf32>
      %c0_192 = arith.constant 0 : index
      %c0_193 = arith.constant 0 : index
      %174 = vector.load %arg6[%c0_192, %c0_193] : memref<16x16xf32, #tpu.memory_space<vmem>>, vector<16x16xf32>
      %cst_194 = arith.constant dense<0.000000e+00> : vector<2x16xf32>
      %175 = tpu.matmul %173, %174, %cst_194 {dimension_numbers = #tpu.dot_dimension_numbers<[1], [0], [0], [1], [0, 0, 1, 1], [], []>, precision = #tpu.contract_precision<fp32>} : vector<2x16xf32>, vector<16x16xf32>, vector<2x16xf32> -> vector<2x16xf32>
      %cst_195 = arith.constant dense<0.000000e+00> : vector<16xf32>
      %176 = vector.multi_reduction <add>, %175, %cst_195 [0] : vector<2x16xf32> to vector<16xf32>
      %177 = vector.shape_cast %176 : vector<16xf32> to vector<1x16xf32>
      %cst_196 = arith.constant 2.000000e+00 : f32
      %178 = vector.broadcast %cst_196 : f32 to vector<1x16xf32>
      %179 = arith.divf %177, %178 : vector<1x16xf32>
      %180 = vector.broadcast %179 : vector<1x16xf32> to vector<2x16xf32>
      %181 = arith.subf %175, %180 : vector<2x16xf32>
      %182 = vector.broadcast %179 : vector<1x16xf32> to vector<2x16xf32>
      %183 = arith.subf %175, %182 : vector<2x16xf32>
      %184 = arith.mulf %181, %183 : vector<2x16xf32>
      %cst_197 = arith.constant dense<0.000000e+00> : vector<16xf32>
      %185 = vector.multi_reduction <add>, %184, %cst_197 [0] : vector<2x16xf32> to vector<16xf32>
      %186 = vector.shape_cast %185 : vector<16xf32> to vector<1x16xf32>
      %cst_198 = arith.constant 2.000000e+00 : f32
      %187 = vector.broadcast %cst_198 : f32 to vector<1x16xf32>
      %188 = arith.divf %186, %187 : vector<1x16xf32>
      %189 = vector.broadcast %179 : vector<1x16xf32> to vector<2x16xf32>
      %190 = arith.subf %175, %189 : vector<2x16xf32>
      %cst_199 = arith.constant 9.99999974E-6 : f32
      %191 = vector.broadcast %cst_199 : f32 to vector<1x16xf32>
      %192 = arith.addf %188, %191 : vector<1x16xf32>
      %193 = math.rsqrt %192 : vector<1x16xf32>
      %194 = vector.broadcast %193 : vector<1x16xf32> to vector<2x16xf32>
      %195 = arith.mulf %190, %194 : vector<2x16xf32>
      %c0_200 = arith.constant 0 : index
      %c0_201 = arith.constant 0 : index
      %196 = vector.load %arg7[%c0_200, %c0_201] : memref<1x16xf32, #tpu.memory_space<vmem>>, vector<1x16xf32>
      %197 = vector.broadcast %196 : vector<1x16xf32> to vector<2x16xf32>
      %198 = arith.mulf %195, %197 : vector<2x16xf32>
      %c0_202 = arith.constant 0 : index
      %c0_203 = arith.constant 0 : index
      %199 = vector.load %arg8[%c0_202, %c0_203] : memref<1x16xf32, #tpu.memory_space<vmem>>, vector<1x16xf32>
      %200 = vector.broadcast %199 : vector<1x16xf32> to vector<2x16xf32>
      %201 = arith.addf %198, %200 : vector<2x16xf32>
      %cst_204 = arith.constant 0.000000e+00 : f32
      %202 = vector.broadcast %cst_204 : f32 to vector<2x16xf32>
      %203 = arith.maximumf %201, %202 : vector<2x16xf32>
      %c0_205 = arith.constant 0 : index
      %c0_206 = arith.constant 0 : index
      %204 = vector.load %arg9[%c0_205, %c0_206] : memref<16x128xf32, #tpu.memory_space<vmem>>, vector<16x128xf32>
      %cst_207 = arith.constant dense<0.000000e+00> : vector<2x128xf32>
      %205 = tpu.matmul %203, %204, %cst_207 {dimension_numbers = #tpu.dot_dimension_numbers<[1], [0], [0], [1], [0, 0, 1, 1], [], []>, precision = #tpu.contract_precision<fp32>} : vector<2x16xf32>, vector<16x128xf32>, vector<2x128xf32> -> vector<2x128xf32>
      %c0_208 = arith.constant 0 : index
      %c0_209 = arith.constant 0 : index
      %206 = vector.load %arg10[%c0_208, %c0_209] : memref<1x128xf32, #tpu.memory_space<vmem>>, vector<1x128xf32>
      %207 = vector.broadcast %206 : vector<1x128xf32> to vector<2x128xf32>
      %208 = arith.addf %205, %207 : vector<2x128xf32>
      %209 = tpu.iota {dimensions = array<i32: 1>} : vector<2x128xi32>
      %c41_i32 = arith.constant 41 : i32
      %210 = vector.broadcast %c41_i32 : i32 to vector<2x128xi32>
      %211 = arith.cmpi sge, %209, %210 : vector<2x128xi32>
      %c45_i32 = arith.constant 45 : i32
      %212 = vector.broadcast %c45_i32 : i32 to vector<2x128xi32>
      %213 = arith.cmpi slt, %209, %212 : vector<2x128xi32>
      %214 = arith.andi %211, %213 : vector<2x128xi1>
      %c45_i32_210 = arith.constant 45 : i32
      %215 = vector.broadcast %c45_i32_210 : i32 to vector<2x128xi32>
      %216 = arith.cmpi slt, %209, %215 : vector<2x128xi32>
      %cst_211 = arith.constant 0.000000e+00 : f32
      %217 = vector.broadcast %cst_211 : f32 to vector<2x128xf32>
      %218 = arith.subf %217, %208 : vector<2x128xf32>
      %219 = math.exp %218 : vector<2x128xf32>
      %cst_212 = arith.constant 1.000000e+00 : f32
      %220 = vector.broadcast %cst_212 : f32 to vector<2x128xf32>
      %221 = arith.addf %220, %219 : vector<2x128xf32>
      %222 = tpu.reciprocal %221 {approx = true} : vector<2x128xf32> -> vector<2x128xf32>
      %223 = arith.mulf %221, %222 : vector<2x128xf32>
      %cst_213 = arith.constant 2.000000e+00 : f32
      %224 = vector.broadcast %cst_213 : f32 to vector<2x128xf32>
      %225 = arith.subf %224, %223 : vector<2x128xf32>
      %226 = arith.mulf %222, %225 : vector<2x128xf32>
      %cst_214 = arith.constant -3.40282347E+38 : f32
      %227 = vector.broadcast %cst_214 : f32 to vector<2x128xf32>
      %228 = arith.select %214, %208, %227 : vector<2x128xi1>, vector<2x128xf32>
      %cst_215 = arith.constant dense<0xFF800000> : vector<2xf32>
      %229 = vector.multi_reduction <maximumf>, %228, %cst_215 [1] : vector<2x128xf32> to vector<2xf32>
      %230 = vector.shape_cast %229 : vector<2xf32> to vector<2x1xf32>
      %231 = vector.broadcast %230 : vector<2x1xf32> to vector<2x128xf32>
      %232 = arith.subf %228, %231 : vector<2x128xf32>
      %233 = math.exp %232 : vector<2x128xf32>
      %cst_216 = arith.constant 0.000000e+00 : f32
      %234 = vector.broadcast %cst_216 : f32 to vector<2x128xf32>
      %235 = arith.select %214, %233, %234 : vector<2x128xi1>, vector<2x128xf32>
      %cst_217 = arith.constant dense<0.000000e+00> : vector<2xf32>
      %236 = vector.multi_reduction <add>, %235, %cst_217 [1] : vector<2x128xf32> to vector<2xf32>
      %237 = vector.shape_cast %236 : vector<2xf32> to vector<2x1xf32>
      %238 = tpu.reciprocal %237 {approx = true} : vector<2x1xf32> -> vector<2x1xf32>
      %239 = arith.mulf %237, %238 : vector<2x1xf32>
      %cst_218 = arith.constant 2.000000e+00 : f32
      %240 = vector.broadcast %cst_218 : f32 to vector<2x1xf32>
      %241 = arith.subf %240, %239 : vector<2x1xf32>
      %242 = arith.mulf %238, %241 : vector<2x1xf32>
      %243 = vector.broadcast %242 : vector<2x1xf32> to vector<2x128xf32>
      %244 = arith.mulf %235, %243 : vector<2x128xf32>
      %cst_219 = arith.constant 0.000000e+00 : f32
      %245 = vector.broadcast %cst_219 : f32 to vector<2x128xf32>
      %246 = arith.select %216, %226, %245 : vector<2x128xi1>, vector<2x128xf32>
      %247 = arith.select %214, %244, %246 : vector<2x128xi1>, vector<2x128xf32>
      %c0_220 = arith.constant 0 : index
      %c0_221 = arith.constant 0 : index
      %248 = vector.load %arg11[%c0_220, %c0_221] : memref<2x128xf32, #tpu.memory_space<vmem>>, vector<2x128xf32>
      tpu.vector_store %arg11[%c0_220, %c0_221], %247 {strides = array<i32>} : memref<2x128xf32, #tpu.memory_space<vmem>>, vector<2x128xf32>,
    } else {
    }
    return
  }
  func.func @transform_0(%arg0: i32, %arg1: i32) -> (i32, i32, i32) {
    %c0_i32 = arith.constant 0 : i32
    %c0_i32_0 = arith.constant 0 : i32
    return %arg0, %c0_i32, %arg1 : i32, i32, i32
  }
  func.func @transform_1(%arg0: i32, %arg1: i32) -> (i32, i32, i32) {
    %c0_i32 = arith.constant 0 : i32
    %c0_i32_0 = arith.constant 0 : i32
    return %arg0, %c0_i32, %arg1 : i32, i32, i32
  }
  func.func @transform_2(%arg0: i32, %arg1: i32) -> (i32, i32) {
    %c0_i32 = arith.constant 0 : i32
    %c0_i32_0 = arith.constant 0 : i32
    %c0_i32_1 = arith.constant 0 : i32
    return %c0_i32, %c0_i32_0 : i32, i32
  }
  func.func @transform_3(%arg0: i32, %arg1: i32) -> (i32, i32) {
    %c0_i32 = arith.constant 0 : i32
    %c0_i32_0 = arith.constant 0 : i32
    %c0_i32_1 = arith.constant 0 : i32
    return %c0_i32, %c0_i32_0 : i32, i32
  }
  func.func @transform_4(%arg0: i32, %arg1: i32) -> (i32, i32) {
    %c0_i32 = arith.constant 0 : i32
    %c0_i32_0 = arith.constant 0 : i32
    %c0_i32_1 = arith.constant 0 : i32
    return %c0_i32, %c0_i32_0 : i32, i32
  }
  func.func @transform_5(%arg0: i32, %arg1: i32) -> (i32, i32) {
    %c0_i32 = arith.constant 0 : i32
    %c0_i32_0 = arith.constant 0 : i32
    %c0_i32_1 = arith.constant 0 : i32
    return %c0_i32, %c0_i32_0 : i32, i32
  }
  func.func @transform_6(%arg0: i32, %arg1: i32) -> (i32, i32) {
    %c0_i32 = arith.constant 0 : i32
    %c0_i32_0 = arith.constant 0 : i32
    %c0_i32_1 = arith.constant 0 : i32
    return %c0_i32, %c0_i32_0 : i32, i32
  }
  func.func @transform_7(%arg0: i32, %arg1: i32) -> (i32, i32) {
    %c0_i32 = arith.constant 0 : i32
    %c0_i32_0 = arith.constant 0 : i32
    %c0_i32_1 = arith.constant 0 : i32
    return %c0_i32, %c0_i32_0 : i32, i32
  }
  func.func @transform_8(%arg0: i32, %arg1: i32) -> (i32, i32) {
    %c0_i32 = arith.constant 0 : i32
    %c0_i32_0 = arith.constant 0 : i32
    %c0_i32_1 = arith.constant 0 : i32
    return %c0_i32, %c0_i32_0 : i32, i32
  }
  func.func @transform_9(%arg0: i32, %arg1: i32) -> (i32, i32) {
    %c0_i32 = arith.constant 0 : i32
    %c0_i32_0 = arith.constant 0 : i32
    %c0_i32_1 = arith.constant 0 : i32
    return %c0_i32, %c0_i32_0 : i32, i32
  }
}

</mosaic_0001>

<llo_original>
// kernel: tpu_custom_call.1
$region0: #{tpu_custom_call.1}
  #allocation0 [shape = 'u32[]', space=smem, size = 0x4, offset = 0x4, fixed_abs, tag = 'smem constant byte address 0x4 - core index']
  #allocation1 [shape = 'u32[144,128]{1,0:T(1,128)}', space=vmem, size = 0x12000, scoped, tag = 'internal scratch']
  #allocation2 [shape = 'f32[2,16,128]{2,1,0:T(8,128)}', space=vmem, size = 0x4000, scoped, tag = 'scratch operand']
  #allocation3 [shape = 'f32[2,16,128]{2,1,0:T(8,128)}', space=vmem, size = 0x4000, scoped, tag = 'scratch operand']
  #allocation4 [shape = 'f32[2,16]{1,0:T(2,128)}', space=vmem, size = 0x400, scoped, tag = 'scratch operand']
  #allocation5 [shape = 'f32[2,16]{1,0:T(2,128)}', space=vmem, size = 0x400, scoped, tag = 'scratch operand']
  %s0 = inlined_call_operand.hbm [shape: f32[2,16,4096], index: 0, kind: input, shape index: {}]
  %s1 = inlined_call_operand.hbm [shape: f32[2,16,4096], index: 1, kind: input, shape index: {}]
  %s2 = inlined_call_operand.hbm [shape: f32[16,32], index: 2, kind: input, shape index: {}]
  %s3 = inlined_call_operand.hbm [shape: f32[16,32], index: 3, kind: input, shape index: {}]
  %s4 = inlined_call_operand.hbm [shape: f32[16,16], index: 4, kind: input, shape index: {}]
  %s5 = inlined_call_operand.vmem [shape: f32[1,16], index: 5, kind: input, shape index: {}]
  %s6 = inlined_call_operand.vmem [shape: f32[1,16], index: 6, kind: input, shape index: {}]
  %s7 = inlined_call_operand.vmem [shape: f32[16,128], index: 7, kind: input, shape index: {}]
  %s8 = inlined_call_operand.vmem [shape: f32[1,128], index: 8, kind: input, shape index: {}]
  %s9 = inlined_call_operand.hbm [shape: f32[2,128], index: 9, kind: output, shape index: {}]
  %s10 = sld [smem:[#allocation0]]
  $region78: #{tpu_custom_call.1} parent=0
    _
  %s12 = ssub.s32 1, %s10
  %s13 = scalar_select 0, %s12, %s10
  $region1: #{tpu_custom_call.1} parent=0
    #allocation6 [shape = 'u8[524288]{0}', space=vmem, size = 0x80000, scoped, tag = 'input window, operand 0, single buffered']
    #allocation7 [shape = 's32[1]{0}', space=sflag, size = 0x4, scoped, tag = 'scoped memory for tpu_custom_call.1']
    #allocation8 [shape = 's32[1]{0}', space=sflag, size = 0x4, scoped, tag = 'scoped memory for tpu_custom_call.1']
    #allocation9 [shape = 'u8[524288]{0}', space=vmem, size = 0x80000, scoped, tag = 'input window, operand 1, single buffered']
    #allocation10 [shape = 's32[1]{0}', space=sflag, size = 0x4, scoped, tag = 'scoped memory for tpu_custom_call.1']
    #allocation11 [shape = 'u8[8192]{0}', space=vmem, size = 0x2000, scoped, tag = 'input window, operand 2, single buffered']
    #allocation12 [shape = 'u8[8192]{0}', space=vmem, size = 0x2000, scoped, tag = 'input window, operand 3, single buffered']
    #allocation13 [shape = 's32[1]{0}', space=sflag, size = 0x4, scoped, tag = 'scoped memory for tpu_custom_call.1']
    #allocation14 [shape = 'u8[8192]{0}', space=vmem, size = 0x2000, scoped, tag = 'input window, operand 4, single buffered']
    #allocation15 [shape = 'u8[1024]{0}', space=vmem, size = 0x400, scoped, tag = 'output window, operand 0, single buffered']
    %14 = vsyncpa [#allocation7], 0
    %15 = vsyncpa [#allocation10], 0
    %16 = vsyncpa [#allocation13], 0
    %17 = vsyncpa [#allocation8], 0
    // Predicated region
    $region2: #{tpu_custom_call.1} parent=1 // pred_check
      _
    $region3: #{tpu_custom_call.1} parent=1 // pred_check_branch
      %19 = sbr.rel (0) target = $region5
    $region4: #{tpu_custom_call.1} parent=1 // pred_region
      %s21 = ssub.s32 16384, 16384
      %22 = vsyncadd [#allocation7], %s21
      %s23 = sshll.u32 [#allocation6], 4
      %s24 = int_to_ptr.vmem [resolvable:$true] %s23
      %29 = dma.hbm_to_vmem [thread:$0]  %s0, 16384, %s24, [#allocation7], 4096, 4096, 256
    $region5: #{tpu_custom_call.1} parent=1 // pred_fallthru
      _
    // Predicated region
    $region6: #{tpu_custom_call.1} parent=1 // pred_check
      _
    $region7: #{tpu_custom_call.1} parent=1 // pred_check_branch
      %31 = sbr.rel (0) target = $region9
    $region8: #{tpu_custom_call.1} parent=1 // pred_region
      %s33 = ssub.s32 16384, 16384
      %34 = vsyncadd [#allocation10], %s33
      %s35 = sshll.u32 [#allocation9], 4
      %s36 = int_to_ptr.vmem [resolvable:$true] %s35
      %41 = dma.hbm_to_vmem [thread:$0]  %s1, 16384, %s36, [#allocation10], 4096, 4096, 256
    $region9: #{tpu_custom_call.1} parent=1 // pred_fallthru
      _
    // Predicated region
    $region10: #{tpu_custom_call.1} parent=1 // pred_check
      _
    $region11: #{tpu_custom_call.1} parent=1 // pred_check_branch
      %43 = sbr.rel (0) target = $region13
    $region12: #{tpu_custom_call.1} parent=1 // pred_region
      %s45 = ssub.s32 256, 256
      %46 = vsyncadd [#allocation10], %s45
      %s47 = sshll.u32 [#allocation11], 4
      %s48 = int_to_ptr.vmem [resolvable:$true] %s47
      %53 = dma.hbm_to_vmem [thread:$0]  %s2, 256, %s48, [#allocation10], 128, 128, 8
    $region13: #{tpu_custom_call.1} parent=1 // pred_fallthru
      _
    // Predicated region
    $region14: #{tpu_custom_call.1} parent=1 // pred_check
      _
    $region15: #{tpu_custom_call.1} parent=1 // pred_check_branch
      %55 = sbr.rel (0) target = $region17
    $region16: #{tpu_custom_call.1} parent=1 // pred_region
      %s57 = ssub.s32 256, 256
      %58 = vsyncadd [#allocation13], %s57
      %s59 = sshll.u32 [#allocation12], 4
      %s60 = int_to_ptr.vmem [resolvable:$true] %s59
      %65 = dma.hbm_to_vmem [thread:$0]  %s3, 256, %s60, [#allocation13], 128, 128, 8
    $region17: #{tpu_custom_call.1} parent=1 // pred_fallthru
      _
    // Predicated region
    $region18: #{tpu_custom_call.1} parent=1 // pred_check
      _
    $region19: #{tpu_custom_call.1} parent=1 // pred_check_branch
      %67 = sbr.rel (0) target = $region21
    $region20: #{tpu_custom_call.1} parent=1 // pred_region
      %s69 = ssub.s32 256, 256
      %70 = vsyncadd [#allocation13], %s69
      %s71 = sshll.u32 [#allocation14], 4
      %s72 = int_to_ptr.vmem [resolvable:$true] %s71
      %77 = dma.hbm_to_vmem [thread:$0]  %s4, 256, %s72, [#allocation13], 128, 128, 8
    $region21: #{tpu_custom_call.1} parent=1 // pred_fallthru
      _
    // Predicated region
    $region22: #{tpu_custom_call.1} parent=1 // pred_check
      _
    $region23: #{tpu_custom_call.1} parent=1 // pred_check_branch
      %79 = sbr.rel (0) target = $region25
    $region24: #{tpu_custom_call.1} parent=1 // pred_region
      _
    $region25: #{tpu_custom_call.1} parent=1 // pred_fallthru
      _
    // Predicated region
    $region26: #{tpu_custom_call.1} parent=1 // pred_check
      _
    $region27: #{tpu_custom_call.1} parent=1 // pred_check_branch
      %81 = sbr.rel (0) target = $region29
    $region28: #{tpu_custom_call.1} parent=1 // pred_region
      _
    $region29: #{tpu_custom_call.1} parent=1 // pred_fallthru
      _
    // Predicated region
    $region30: #{tpu_custom_call.1} parent=1 // pred_check
      _
    $region31: #{tpu_custom_call.1} parent=1 // pred_check_branch
      %83 = sbr.rel (0) target = $region33
    $region32: #{tpu_custom_call.1} parent=1 // pred_region
      _
    $region33: #{tpu_custom_call.1} parent=1 // pred_fallthru
      _
    // Predicated region
    $region34: #{tpu_custom_call.1} parent=1 // pred_check
      _
    $region35: #{tpu_custom_call.1} parent=1 // pred_check_branch
      %85 = sbr.rel (0) target = $region37
    $region36: #{tpu_custom_call.1} parent=1 // pred_region
      _
    $region37: #{tpu_custom_call.1} parent=1 // pred_fallthru
      _
    // Predicated region
    $region38: #{tpu_custom_call.1} parent=1 // pred_check
      _
    $region39: #{tpu_custom_call.1} parent=1 // pred_check_branch
      %87 = sbr.rel (0) target = $region41
    $region40: #{tpu_custom_call.1} parent=1 // pred_region
      %88 = dma.done [#allocation7], 16384
    $region41: #{tpu_custom_call.1} parent=1 // pred_fallthru
      _
    // Predicated region
    $region42: #{tpu_custom_call.1} parent=1 // pred_check
      _
    $region43: #{tpu_custom_call.1} parent=1 // pred_check_branch
      %90 = sbr.rel (0) target = $region45
    $region44: #{tpu_custom_call.1} parent=1 // pred_region
      %91 = dma.done [#allocation10], 16384
    $region45: #{tpu_custom_call.1} parent=1 // pred_fallthru
      _
    // Predicated region
    $region46: #{tpu_custom_call.1} parent=1 // pred_check
      _
    $region47: #{tpu_custom_call.1} parent=1 // pred_check_branch
      %93 = sbr.rel (0) target = $region49
    $region48: #{tpu_custom_call.1} parent=1 // pred_region
      %94 = dma.done [#allocation10], 256
    $region49: #{tpu_custom_call.1} parent=1 // pred_fallthru
      _
    // Predicated region
    $region50: #{tpu_custom_call.1} parent=1 // pred_check
      _
    $region51: #{tpu_custom_call.1} parent=1 // pred_check_branch
      %96 = sbr.rel (0) target = $region53
    $region52: #{tpu_custom_call.1} parent=1 // pred_region
      %97 = dma.done [#allocation13], 256
    $region53: #{tpu_custom_call.1} parent=1 // pred_fallthru
      _
    // Predicated region
    $region54: #{tpu_custom_call.1} parent=1 // pred_check
      _
    $region55: #{tpu_custom_call.1} parent=1 // pred_check_branch
      %99 = sbr.rel (0) target = $region57
    $region56: #{tpu_custom_call.1} parent=1 // pred_region
      %100 = dma.done [#allocation13], 256
    $region57: #{tpu_custom_call.1} parent=1 // pred_fallthru
      _
    %p101 = scmp.eq.s32.totalorder 0, 0
    // Predicated region
    $region58: #{tpu_custom_call.1} parent=1 // pred_check
      %p102 = pneg %p101
    $region59: #{tpu_custom_call.1} parent=1 // pred_check_branch
      %104 = sbr.rel (%p102) target = $region61
    $region60: #{tpu_custom_call.1} parent=1 // pred_region
      %105 = vst [vmem:[#allocation2] sm:$0xff] 0.0
      %106 = vst [vmem:[#allocation2 + $0x8] sm:$0xff] 0.0
      %107 = vst [vmem:[#allocation2 + $0x10] sm:$0xff] 0.0
      %108 = vst [vmem:[#allocation2 + $0x18] sm:$0xff] 0.0
      %109 = vst [vmem:[#allocation3] sm:$0xff] 0.0
      %110 = vst [vmem:[#allocation3 + $0x8] sm:$0xff] 0.0
      %111 = vst [vmem:[#allocation3 + $0x10] sm:$0xff] 0.0
      %112 = vst [vmem:[#allocation3 + $0x18] sm:$0xff] 0.0
    $region61: #{tpu_custom_call.1} parent=1 // pred_fallthru
      _
    %v113 = vld [vmem:[#allocation2] sm:$0xff]
    %v114 = vld [vmem:[#allocation2 + $0x8] sm:$0xff]
    %v115 = vld [vmem:[#allocation2 + $0x10] sm:$0xff]
    %v116 = vld [vmem:[#allocation2 + $0x18] sm:$0xff]
    %v117 = vld [vmem:[#allocation3] sm:$0xff]
    %v118 = vld [vmem:[#allocation3 + $0x8] sm:$0xff]
    %v119 = vld [vmem:[#allocation3 + $0x10] sm:$0xff]
    %v120 = vld [vmem:[#allocation3 + $0x18] sm:$0xff]
    %v121 = vld [vmem:[#allocation6] sm:$0xff]
    %v122 = vld [vmem:[#allocation6 + $0x100] sm:$0xff]
    %v123 = vld [vmem:[#allocation6 + $0x200] sm:$0xff]
    %v124 = vld [vmem:[#allocation6 + $0x300] sm:$0xff]
    %v125 = vadd.f32 %v113, %v121
    %v126 = vadd.f32 %v114, %v122
    %v127 = vadd.f32 %v115, %v123
    %v128 = vadd.f32 %v116, %v124
    %v129 = vld [vmem:[#allocation9] sm:$0xff]
    %v130 = vld [vmem:[#allocation9 + $0x100] sm:$0xff]
    %v131 = vld [vmem:[#allocation9 + $0x200] sm:$0xff]
    %v132 = vld [vmem:[#allocation9 + $0x300] sm:$0xff]
    %v133 = vadd.f32 %v117, %v129
    %v134 = vadd.f32 %v118, %v130
    %v135 = vadd.f32 %v119, %v131
    %v136 = vadd.f32 %v120, %v132
    %v137 = vld [vmem:[#allocation6 + $0x8] sm:$0xff]
    %v138 = vld [vmem:[#allocation6 + $0x108] sm:$0xff]
    %v139 = vld [vmem:[#allocation6 + $0x208] sm:$0xff]
    %v140 = vld [vmem:[#allocation6 + $0x308] sm:$0xff]
    %v141 = vadd.f32 %v125, %v137
    %v142 = vadd.f32 %v126, %v138
    %v143 = vadd.f32 %v127, %v139
    %v144 = vadd.f32 %v128, %v140
    %v145 = vld [vmem:[#allocation9 + $0x8] sm:$0xff]
    %v146 = vld [vmem:[#allocation9 + $0x108] sm:$0xff]
    %v147 = vld [vmem:[#allocation9 + $0x208] sm:$0xff]
    %v148 = vld [vmem:[#allocation9 + $0x308] sm:$0xff]
    %v149 = vadd.f32 %v133, %v145
    %v150 = vadd.f32 %v134, %v146
    %v151 = vadd.f32 %v135, %v147
    %v152 = vadd.f32 %v136, %v148
    %v153 = vld [vmem:[#allocation6 + $0x10] sm:$0xff]
    %v154 = vld [vmem:[#allocation6 + $0x110] sm:$0xff]
    %v155 = vld [vmem:[#allocation6 + $0x210] sm:$0xff]
    %v156 = vld [vmem:[#allocation6 + $0x310] sm:$0xff]
    %v157 = vadd.f32 %v141, %v153
    %v158 = vadd.f32 %v142, %v154
    %v159 = vadd.f32 %v143, %v155
    %v160 = vadd.f32 %v144, %v156
    %v161 = vld [vmem:[#allocation9 + $0x10] sm:$0xff]
    %v162 = vld [vmem:[#allocation9 + $0x110] sm:$0xff]
    %v163 = vld [vmem:[#allocation9 + $0x210] sm:$0xff]
    %v164 = vld [vmem:[#allocation9 + $0x310] sm:$0xff]
    %v165 = vadd.f32 %v149, %v161
    %v166 = vadd.f32 %v150, %v162
    %v167 = vadd.f32 %v151, %v163
    %v168 = vadd.f32 %v152, %v164
    %v169 = vld [vmem:[#allocation6 + $0x18] sm:$0xff]
    %v170 = vld [vmem:[#allocation6 + $0x118] sm:$0xff]
    %v171 = vld [vmem:[#allocation6 + $0x218] sm:$0xff]
    %v172 = vld [vmem:[#allocation6 + $0x318] sm:$0xff]
    %v173 = vadd.f32 %v157, %v169
    %v174 = vadd.f32 %v158, %v170
    %v175 = vadd.f32 %v159, %v171
    %v176 = vadd.f32 %v160, %v172
    %v177 = vld [vmem:[#allocation9 + $0x18] sm:$0xff]
    %v178 = vld [vmem:[#allocation9 + $0x118] sm:$0xff]
    %v179 = vld [vmem:[#allocation9 + $0x218] sm:$0xff]
    %v180 = vld [vmem:[#allocation9 + $0x318] sm:$0xff]
    %v181 = vadd.f32 %v165, %v177
    %v182 = vadd.f32 %v166, %v178
    %v183 = vadd.f32 %v167, %v179
    %v184 = vadd.f32 %v168, %v180
    %v185 = vld [vmem:[#allocation6 + $0x20] sm:$0xff]
    %v186 = vld [vmem:[#allocation6 + $0x120] sm:$0xff]
    %v187 = vld [vmem:[#allocation6 + $0x220] sm:$0xff]
    %v188 = vld [vmem:[#allocation6 + $0x320] sm:$0xff]
    %v189 = vadd.f32 %v173, %v185
    %v190 = vadd.f32 %v174, %v186
    %v191 = vadd.f32 %v175, %v187
    %v192 = vadd.f32 %v176, %v188
    %v193 = vld [vmem:[#allocation9 + $0x20] sm:$0xff]
    %v194 = vld [vmem:[#allocation9 + $0x120] sm:$0xff]
    %v195 = vld [vmem:[#allocation9 + $0x220] sm:$0xff]
    %v196 = vld [vmem:[#allocation9 + $0x320] sm:$0xff]
    %v197 = vadd.f32 %v181, %v193
    %v198 = vadd.f32 %v182, %v194
    %v199 = vadd.f32 %v183, %v195
    %v200 = vadd.f32 %v184, %v196
    %v201 = vld [vmem:[#allocation6 + $0x28] sm:$0xff]
    %v202 = vld [vmem:[#allocation6 + $0x128] sm:$0xff]
    %v203 = vld [vmem:[#allocation6 + $0x228] sm:$0xff]
    %v204 = vld [vmem:[#allocation6 + $0x328] sm:$0xff]
    %v205 = vadd.f32 %v189, %v201
    %v206 = vadd.f32 %v190, %v202
    %v207 = vadd.f32 %v191, %v203
    %v208 = vadd.f32 %v192, %v204
    %v209 = vld [vmem:[#allocation9 + $0x28] sm:$0xff]
    %v210 = vld [vmem:[#allocation9 + $0x128] sm:$0xff]
    %v211 = vld [vmem:[#allocation9 + $0x228] sm:$0xff]
    %v212 = vld [vmem:[#allocation9 + $0x328] sm:$0xff]
    %v213 = vadd.f32 %v197, %v209
    %v214 = vadd.f32 %v198, %v210
    %v215 = vadd.f32 %v199, %v211
    %v216 = vadd.f32 %v200, %v212
    %v217 = vld [vmem:[#allocation6 + $0x30] sm:$0xff]
    %v218 = vld [vmem:[#allocation6 + $0x130] sm:$0xff]
    %v219 = vld [vmem:[#allocation6 + $0x230] sm:$0xff]
    %v220 = vld [vmem:[#allocation6 + $0x330] sm:$0xff]
    %v221 = vadd.f32 %v205, %v217
    %v222 = vadd.f32 %v206, %v218
    %v223 = vadd.f32 %v207, %v219
    %v224 = vadd.f32 %v208, %v220
    %v225 = vld [vmem:[#allocation9 + $0x30] sm:$0xff]
    %v226 = vld [vmem:[#allocation9 + $0x130] sm:$0xff]
    %v227 = vld [vmem:[#allocation9 + $0x230] sm:$0xff]
    %v228 = vld [vmem:[#allocation9 + $0x330] sm:$0xff]
    %v229 = vadd.f32 %v213, %v225
    %v230 = vadd.f32 %v214, %v226
    %v231 = vadd.f32 %v215, %v227
    %v232 = vadd.f32 %v216, %v228
    %v233 = vld [vmem:[#allocation6 + $0x38] sm:$0xff]
    %v234 = vld [vmem:[#allocation6 + $0x138] sm:$0xff]
    %v235 = vld [vmem:[#allocation6 + $0x238] sm:$0xff]
    %v236 = vld [vmem:[#allocation6 + $0x338] sm:$0xff]
    %v237 = vadd.f32 %v221, %v233
    %v238 = vadd.f32 %v222, %v234
    %v239 = vadd.f32 %v223, %v235
    %v240 = vadd.f32 %v224, %v236
    %v241 = vld [vmem:[#allocation9 + $0x38] sm:$0xff]
    %v242 = vld [vmem:[#allocation9 + $0x138] sm:$0xff]
    %v243 = vld [vmem:[#allocation9 + $0x238] sm:$0xff]
    %v244 = vld [vmem:[#allocation9 + $0x338] sm:$0xff]
    %v245 = vadd.f32 %v229, %v241
    %v246 = vadd.f32 %v230, %v242
    %v247 = vadd.f32 %v231, %v243
    %v248 = vadd.f32 %v232, %v244
    %v249 = vld [vmem:[#allocation6 + $0x40] sm:$0xff]
    %v250 = vld [vmem:[#allocation6 + $0x140] sm:$0xff]
    %v251 = vld [vmem:[#allocation6 + $0x240] sm:$0xff]
    %v252 = vld [vmem:[#allocation6 + $0x340] sm:$0xff]
    %v253 = vadd.f32 %v237, %v249
    %v254 = vadd.f32 %v238, %v250
    %v255 = vadd.f32 %v239, %v251
    %v256 = vadd.f32 %v240, %v252
    %v257 = vld [vmem:[#allocation9 + $0x40] sm:$0xff]
    %v258 = vld [vmem:[#allocation9 + $0x140] sm:$0xff]
    %v259 = vld [vmem:[#allocation9 + $0x240] sm:$0xff]
    %v260 = vld [vmem:[#allocation9 + $0x340] sm:$0xff]
    %v261 = vadd.f32 %v245, %v257
    %v262 = vadd.f32 %v246, %v258
    %v263 = vadd.f32 %v247, %v259
    %v264 = vadd.f32 %v248, %v260
    %v265 = vld [vmem:[#allocation6 + $0x48] sm:$0xff]
    %v266 = vld [vmem:[#allocation6 + $0x148] sm:$0xff]
    %v267 = vld [vmem:[#allocation6 + $0x248] sm:$0xff]
    %v268 = vld [vmem:[#allocation6 + $0x348] sm:$0xff]
    %v269 = vadd.f32 %v253, %v265
    %v270 = vadd.f32 %v254, %v266
    %v271 = vadd.f32 %v255, %v267
    %v272 = vadd.f32 %v256, %v268
    %v273 = vld [vmem:[#allocation9 + $0x48] sm:$0xff]
    %v274 = vld [vmem:[#allocation9 + $0x148] sm:$0xff]
    %v275 = vld [vmem:[#allocation9 + $0x248] sm:$0xff]
    %v276 = vld [vmem:[#allocation9 + $0x348] sm:$0xff]
    %v277 = vadd.f32 %v261, %v273
    %v278 = vadd.f32 %v262, %v274
    %v279 = vadd.f32 %v263, %v275
    %v280 = vadd.f32 %v264, %v276
    %v281 = vld [vmem:[#allocation6 + $0x50] sm:$0xff]
    %v282 = vld [vmem:[#allocation6 + $0x150] sm:$0xff]
    %v283 = vld [vmem:[#allocation6 + $0x250] sm:$0xff]
    %v284 = vld [vmem:[#allocation6 + $0x350] sm:$0xff]
    %v285 = vadd.f32 %v269, %v281
    %v286 = vadd.f32 %v270, %v282
    %v287 = vadd.f32 %v271, %v283
    %v288 = vadd.f32 %v272, %v284
    %v289 = vld [vmem:[#allocation9 + $0x50] sm:$0xff]
    %v290 = vld [vmem:[#allocation9 + $0x150] sm:$0xff]
    %v291 = vld [vmem:[#allocation9 + $0x250] sm:$0xff]
    %v292 = vld [vmem:[#allocation9 + $0x350] sm:$0xff]
    %v293 = vadd.f32 %v277, %v289
    %v294 = vadd.f32 %v278, %v290
    %v295 = vadd.f32 %v279, %v291
    %v296 = vadd.f32 %v280, %v292
    %v297 = vld [vmem:[#allocation6 + $0x58] sm:$0xff]
    %v298 = vld [vmem:[#allocation6 + $0x158] sm:$0xff]
    %v299 = vld [vmem:[#allocation6 + $0x258] sm:$0xff]
    %v300 = vld [vmem:[#allocation6 + $0x358] sm:$0xff]
    %v301 = vadd.f32 %v285, %v297
    %v302 = vadd.f32 %v286, %v298
    %v303 = vadd.f32 %v287, %v299
    %v304 = vadd.f32 %v288, %v300
    %v305 = vld [vmem:[#allocation9 + $0x58] sm:$0xff]
    %v306 = vld [vmem:[#allocation9 + $0x158] sm:$0xff]
    %v307 = vld [vmem:[#allocation9 + $0x258] sm:$0xff]
    %v308 = vld [vmem:[#allocation9 + $0x358] sm:$0xff]
    %v309 = vadd.f32 %v293, %v305
    %v310 = vadd.f32 %v294, %v306
    %v311 = vadd.f32 %v295, %v307
    %v312 = vadd.f32 %v296, %v308
    %v313 = vld [vmem:[#allocation6 + $0x60] sm:$0xff]
    %v314 = vld [vmem:[#allocation6 + $0x160] sm:$0xff]
    %v315 = vld [vmem:[#allocation6 + $0x260] sm:$0xff]
    %v316 = vld [vmem:[#allocation6 + $0x360] sm:$0xff]
    %v317 = vadd.f32 %v301, %v313
    %v318 = vadd.f32 %v302, %v314
    %v319 = vadd.f32 %v303, %v315
    %v320 = vadd.f32 %v304, %v316
    %v321 = vld [vmem:[#allocation9 + $0x60] sm:$0xff]
    %v322 = vld [vmem:[#allocation9 + $0x160] sm:$0xff]
    %v323 = vld [vmem:[#allocation9 + $0x260] sm:$0xff]
    %v324 = vld [vmem:[#allocation9 + $0x360] sm:$0xff]
    %v325 = vadd.f32 %v309, %v321
    %v326 = vadd.f32 %v310, %v322
    %v327 = vadd.f32 %v311, %v323
    %v328 = vadd.f32 %v312, %v324
    %v329 = vld [vmem:[#allocation6 + $0x68] sm:$0xff]
    %v330 = vld [vmem:[#allocation6 + $0x168] sm:$0xff]
    %v331 = vld [vmem:[#allocation6 + $0x268] sm:$0xff]
    %v332 = vld [vmem:[#allocation6 + $0x368] sm:$0xff]
    %v333 = vadd.f32 %v317, %v329
    %v334 = vadd.f32 %v318, %v330
    %v335 = vadd.f32 %v319, %v331
    %v336 = vadd.f32 %v320, %v332
    %v337 = vld [vmem:[#allocation9 + $0x68] sm:$0xff]
    %v338 = vld [vmem:[#allocation9 + $0x168] sm:$0xff]
    %v339 = vld [vmem:[#allocation9 + $0x268] sm:$0xff]
    %v340 = vld [vmem:[#allocation9 + $0x368] sm:$0xff]
    %v341 = vadd.f32 %v325, %v337
    %v342 = vadd.f32 %v326, %v338
    %v343 = vadd.f32 %v327, %v339
    %v344 = vadd.f32 %v328, %v340
    %v345 = vld [vmem:[#allocation6 + $0x70] sm:$0xff]
    %v346 = vld [vmem:[#allocation6 + $0x170] sm:$0xff]
    %v347 = vld [vmem:[#allocation6 + $0x270] sm:$0xff]
    %v348 = vld [vmem:[#allocation6 + $0x370] sm:$0xff]
    %v349 = vadd.f32 %v333, %v345
    %v350 = vadd.f32 %v334, %v346
    %v351 = vadd.f32 %v335, %v347
    %v352 = vadd.f32 %v336, %v348
    %v353 = vld [vmem:[#allocation9 + $0x70] sm:$0xff]
    %v354 = vld [vmem:[#allocation9 + $0x170] sm:$0xff]
    %v355 = vld [vmem:[#allocation9 + $0x270] sm:$0xff]
    %v356 = vld [vmem:[#allocation9 + $0x370] sm:$0xff]
    %v357 = vadd.f32 %v341, %v353
    %v358 = vadd.f32 %v342, %v354
    %v359 = vadd.f32 %v343, %v355
    %v360 = vadd.f32 %v344, %v356
    %v361 = vld [vmem:[#allocation6 + $0x78] sm:$0xff]
    %v362 = vld [vmem:[#allocation6 + $0x178] sm:$0xff]
    %v363 = vld [vmem:[#allocation6 + $0x278] sm:$0xff]
    %v364 = vld [vmem:[#allocation6 + $0x378] sm:$0xff]
    %v365 = vadd.f32 %v349, %v361
    %v366 = vadd.f32 %v350, %v362
    %v367 = vadd.f32 %v351, %v363
    %v368 = vadd.f32 %v352, %v364
    %v369 = vld [vmem:[#allocation9 + $0x78] sm:$0xff]
    %v370 = vld [vmem:[#allocation9 + $0x178] sm:$0xff]
    %v371 = vld [vmem:[#allocation9 + $0x278] sm:$0xff]
    %v372 = vld [vmem:[#allocation9 + $0x378] sm:$0xff]
    %v373 = vadd.f32 %v357, %v369
    %v374 = vadd.f32 %v358, %v370
    %v375 = vadd.f32 %v359, %v371
    %v376 = vadd.f32 %v360, %v372
    %v377 = vld [vmem:[#allocation6 + $0x80] sm:$0xff]
    %v378 = vld [vmem:[#allocation6 + $0x180] sm:$0xff]
    %v379 = vld [vmem:[#allocation6 + $0x280] sm:$0xff]
    %v380 = vld [vmem:[#allocation6 + $0x380] sm:$0xff]
    %v381 = vadd.f32 %v365, %v377
    %v382 = vadd.f32 %v366, %v378
    %v383 = vadd.f32 %v367, %v379
    %v384 = vadd.f32 %v368, %v380
    %v385 = vld [vmem:[#allocation9 + $0x80] sm:$0xff]
    %v386 = vld [vmem:[#allocation9 + $0x180] sm:$0xff]
    %v387 = vld [vmem:[#allocation9 + $0x280] sm:$0xff]
    %v388 = vld [vmem:[#allocation9 + $0x380] sm:$0xff]
    %v389 = vadd.f32 %v373, %v385
    %v390 = vadd.f32 %v374, %v386
    %v391 = vadd.f32 %v375, %v387
    %v392 = vadd.f32 %v376, %v388
    %v393 = vld [vmem:[#allocation6 + $0x88] sm:$0xff]
    %v394 = vld [vmem:[#allocation6 + $0x188] sm:$0xff]
    %v395 = vld [vmem:[#allocation6 + $0x288] sm:$0xff]
    %v396 = vld [vmem:[#allocation6 + $0x388] sm:$0xff]
    %v397 = vadd.f32 %v381, %v393
    %v398 = vadd.f32 %v382, %v394
    %v399 = vadd.f32 %v383, %v395
    %v400 = vadd.f32 %v384, %v396
    %v401 = vld [vmem:[#allocation9 + $0x88] sm:$0xff]
    %v402 = vld [vmem:[#allocation9 + $0x188] sm:$0xff]
    %v403 = vld [vmem:[#allocation9 + $0x288] sm:$0xff]
    %v404 = vld [vmem:[#allocation9 + $0x388] sm:$0xff]
    %v405 = vadd.f32 %v389, %v401
    %v406 = vadd.f32 %v390, %v402
    %v407 = vadd.f32 %v391, %v403
    %v408 = vadd.f32 %v392, %v404
    %v409 = vld [vmem:[#allocation6 + $0x90] sm:$0xff]
    %v410 = vld [vmem:[#allocation6 + $0x190] sm:$0xff]
    %v411 = vld [vmem:[#allocation6 + $0x290] sm:$0xff]
    %v412 = vld [vmem:[#allocation6 + $0x390] sm:$0xff]
    %v413 = vadd.f32 %v397, %v409
    %v414 = vadd.f32 %v398, %v410
    %v415 = vadd.f32 %v399, %v411
    %v416 = vadd.f32 %v400, %v412
    %v417 = vld [vmem:[#allocation9 + $0x90] sm:$0xff]
    %v418 = vld [vmem:[#allocation9 + $0x190] sm:$0xff]
    %v419 = vld [vmem:[#allocation9 + $0x290] sm:$0xff]
    %v420 = vld [vmem:[#allocation9 + $0x390] sm:$0xff]
    %v421 = vadd.f32 %v405, %v417
    %v422 = vadd.f32 %v406, %v418
    %v423 = vadd.f32 %v407, %v419
    %v424 = vadd.f32 %v408, %v420
    %v425 = vld [vmem:[#allocation6 + $0x98] sm:$0xff]
    %v426 = vld [vmem:[#allocation6 + $0x198] sm:$0xff]
    %v427 = vld [vmem:[#allocation6 + $0x298] sm:$0xff]
    %v428 = vld [vmem:[#allocation6 + $0x398] sm:$0xff]
    %v429 = vadd.f32 %v413, %v425
    %v430 = vadd.f32 %v414, %v426
    %v431 = vadd.f32 %v415, %v427
    %v432 = vadd.f32 %v416, %v428
    %v433 = vld [vmem:[#allocation9 + $0x98] sm:$0xff]
    %v434 = vld [vmem:[#allocation9 + $0x198] sm:$0xff]
    %v435 = vld [vmem:[#allocation9 + $0x298] sm:$0xff]
    %v436 = vld [vmem:[#allocation9 + $0x398] sm:$0xff]
    %v437 = vadd.f32 %v421, %v433
    %v438 = vadd.f32 %v422, %v434
    %v439 = vadd.f32 %v423, %v435
    %v440 = vadd.f32 %v424, %v436
    %v441 = vld [vmem:[#allocation6 + $0xa0] sm:$0xff]
    %v442 = vld [vmem:[#allocation6 + $0x1a0] sm:$0xff]
    %v443 = vld [vmem:[#allocation6 + $0x2a0] sm:$0xff]
    %v444 = vld [vmem:[#allocation6 + $0x3a0] sm:$0xff]
    %v445 = vadd.f32 %v429, %v441
    %v446 = vadd.f32 %v430, %v442
    %v447 = vadd.f32 %v431, %v443
    %v448 = vadd.f32 %v432, %v444
    %v449 = vld [vmem:[#allocation9 + $0xa0] sm:$0xff]
    %v450 = vld [vmem:[#allocation9 + $0x1a0] sm:$0xff]
    %v451 = vld [vmem:[#allocation9 + $0x2a0] sm:$0xff]
    %v452 = vld [vmem:[#allocation9 + $0x3a0] sm:$0xff]
    %v453 = vadd.f32 %v437, %v449
    %v454 = vadd.f32 %v438, %v450
    %v455 = vadd.f32 %v439, %v451
    %v456 = vadd.f32 %v440, %v452
    %v457 = vld [vmem:[#allocation6 + $0xa8] sm:$0xff]
    %v458 = vld [vmem:[#allocation6 + $0x1a8] sm:$0xff]
    %v459 = vld [vmem:[#allocation6 + $0x2a8] sm:$0xff]
    %v460 = vld [vmem:[#allocation6 + $0x3a8] sm:$0xff]
    %v461 = vadd.f32 %v445, %v457
    %v462 = vadd.f32 %v446, %v458
    %v463 = vadd.f32 %v447, %v459
    %v464 = vadd.f32 %v448, %v460
    %v465 = vld [vmem:[#allocation9 + $0xa8] sm:$0xff]
    %v466 = vld [vmem:[#allocation9 + $0x1a8] sm:$0xff]
    %v467 = vld [vmem:[#allocation9 + $0x2a8] sm:$0xff]
    %v468 = vld [vmem:[#allocation9 + $0x3a8] sm:$0xff]
    %v469 = vadd.f32 %v453, %v465
    %v470 = vadd.f32 %v454, %v466
    %v471 = vadd.f32 %v455, %v467
    %v472 = vadd.f32 %v456, %v468
    %v473 = vld [vmem:[#allocation6 + $0xb0] sm:$0xff]
    %v474 = vld [vmem:[#allocation6 + $0x1b0] sm:$0xff]
    %v475 = vld [vmem:[#allocation6 + $0x2b0] sm:$0xff]
    %v476 = vld [vmem:[#allocation6 + $0x3b0] sm:$0xff]
    %v477 = vadd.f32 %v461, %v473
    %v478 = vadd.f32 %v462, %v474
    %v479 = vadd.f32 %v463, %v475
    %v480 = vadd.f32 %v464, %v476
    %v481 = vld [vmem:[#allocation9 + $0xb0] sm:$0xff]
    %v482 = vld [vmem:[#allocation9 + $0x1b0] sm:$0xff]
    %v483 = vld [vmem:[#allocation9 + $0x2b0] sm:$0xff]
    %v484 = vld [vmem:[#allocation9 + $0x3b0] sm:$0xff]
    %v485 = vadd.f32 %v469, %v481
    %v486 = vadd.f32 %v470, %v482
    %v487 = vadd.f32 %v471, %v483
    %v488 = vadd.f32 %v472, %v484
    %v489 = vld [vmem:[#allocation6 + $0xb8] sm:$0xff]
    %v490 = vld [vmem:[#allocation6 + $0x1b8] sm:$0xff]
    %v491 = vld [vmem:[#allocation6 + $0x2b8] sm:$0xff]
    %v492 = vld [vmem:[#allocation6 + $0x3b8] sm:$0xff]
    %v493 = vadd.f32 %v477, %v489
    %v494 = vadd.f32 %v478, %v490
    %v495 = vadd.f32 %v479, %v491
    %v496 = vadd.f32 %v480, %v492
    %v497 = vld [vmem:[#allocation9 + $0xb8] sm:$0xff]
    %v498 = vld [vmem:[#allocation9 + $0x1b8] sm:$0xff]
    %v499 = vld [vmem:[#allocation9 + $0x2b8] sm:$0xff]
    %v500 = vld [vmem:[#allocation9 + $0x3b8] sm:$0xff]
    %v501 = vadd.f32 %v485, %v497
    %v502 = vadd.f32 %v486, %v498
    %v503 = vadd.f32 %v487, %v499
    %v504 = vadd.f32 %v488, %v500
    %v505 = vld [vmem:[#allocation6 + $0xc0] sm:$0xff]
    %v506 = vld [vmem:[#allocation6 + $0x1c0] sm:$0xff]
    %v507 = vld [vmem:[#allocation6 + $0x2c0] sm:$0xff]
    %v508 = vld [vmem:[#allocation6 + $0x3c0] sm:$0xff]
    %v509 = vadd.f32 %v493, %v505
    %v510 = vadd.f32 %v494, %v506
    %v511 = vadd.f32 %v495, %v507
    %v512 = vadd.f32 %v496, %v508
    %v513 = vld [vmem:[#allocation9 + $0xc0] sm:$0xff]
    %v514 = vld [vmem:[#allocation9 + $0x1c0] sm:$0xff]
    %v515 = vld [vmem:[#allocation9 + $0x2c0] sm:$0xff]
    %v516 = vld [vmem:[#allocation9 + $0x3c0] sm:$0xff]
    %v517 = vadd.f32 %v501, %v513
    %v518 = vadd.f32 %v502, %v514
    %v519 = vadd.f32 %v503, %v515
    %v520 = vadd.f32 %v504, %v516
    %v521 = vld [vmem:[#allocation6 + $0xc8] sm:$0xff]
    %v522 = vld [vmem:[#allocation6 + $0x1c8] sm:$0xff]
    %v523 = vld [vmem:[#allocation6 + $0x2c8] sm:$0xff]
    %v524 = vld [vmem:[#allocation6 + $0x3c8] sm:$0xff]
    %v525 = vadd.f32 %v509, %v521
    %v526 = vadd.f32 %v510, %v522
    %v527 = vadd.f32 %v511, %v523
    %v528 = vadd.f32 %v512, %v524
    %v529 = vld [vmem:[#allocation9 + $0xc8] sm:$0xff]
    %v530 = vld [vmem:[#allocation9 + $0x1c8] sm:$0xff]
    %v531 = vld [vmem:[#allocation9 + $0x2c8] sm:$0xff]
    %v532 = vld [vmem:[#allocation9 + $0x3c8] sm:$0xff]
    %v533 = vadd.f32 %v517, %v529
    %v534 = vadd.f32 %v518, %v530
    %v535 = vadd.f32 %v519, %v531
    %v536 = vadd.f32 %v520, %v532
    %v537 = vld [vmem:[#allocation6 + $0xd0] sm:$0xff]
    %v538 = vld [vmem:[#allocation6 + $0x1d0] sm:$0xff]
    %v539 = vld [vmem:[#allocation6 + $0x2d0] sm:$0xff]
    %v540 = vld [vmem:[#allocation6 + $0x3d0] sm:$0xff]
    %v541 = vadd.f32 %v525, %v537
    %v542 = vadd.f32 %v526, %v538
    %v543 = vadd.f32 %v527, %v539
    %v544 = vadd.f32 %v528, %v540
    %v545 = vld [vmem:[#allocation9 + $0xd0] sm:$0xff]
    %v546 = vld [vmem:[#allocation9 + $0x1d0] sm:$0xff]
    %v547 = vld [vmem:[#allocation9 + $0x2d0] sm:$0xff]
    %v548 = vld [vmem:[#allocation9 + $0x3d0] sm:$0xff]
    %v549 = vadd.f32 %v533, %v545
    %v550 = vadd.f32 %v534, %v546
    %v551 = vadd.f32 %v535, %v547
    %v552 = vadd.f32 %v536, %v548
    %v553 = vld [vmem:[#allocation6 + $0xd8] sm:$0xff]
    %v554 = vld [vmem:[#allocation6 + $0x1d8] sm:$0xff]
    %v555 = vld [vmem:[#allocation6 + $0x2d8] sm:$0xff]
    %v556 = vld [vmem:[#allocation6 + $0x3d8] sm:$0xff]
    %v557 = vadd.f32 %v541, %v553
    %v558 = vadd.f32 %v542, %v554
    %v559 = vadd.f32 %v543, %v555
    %v560 = vadd.f32 %v544, %v556
    %v561 = vld [vmem:[#allocation9 + $0xd8] sm:$0xff]
    %v562 = vld [vmem:[#allocation9 + $0x1d8] sm:$0xff]
    %v563 = vld [vmem:[#allocation9 + $0x2d8] sm:$0xff]
    %v564 = vld [vmem:[#allocation9 + $0x3d8] sm:$0xff]
    %v565 = vadd.f32 %v549, %v561
    %v566 = vadd.f32 %v550, %v562
    %v567 = vadd.f32 %v551, %v563
    %v568 = vadd.f32 %v552, %v564
    %v569 = vld [vmem:[#allocation6 + $0xe0] sm:$0xff]
    %v570 = vld [vmem:[#allocation6 + $0x1e0] sm:$0xff]
    %v571 = vld [vmem:[#allocation6 + $0x2e0] sm:$0xff]
    %v572 = vld [vmem:[#allocation6 + $0x3e0] sm:$0xff]
    %v573 = vadd.f32 %v557, %v569
    %v574 = vadd.f32 %v558, %v570
    %v575 = vadd.f32 %v559, %v571
    %v576 = vadd.f32 %v560, %v572
    %v577 = vld [vmem:[#allocation9 + $0xe0] sm:$0xff]
    %v578 = vld [vmem:[#allocation9 + $0x1e0] sm:$0xff]
    %v579 = vld [vmem:[#allocation9 + $0x2e0] sm:$0xff]
    %v580 = vld [vmem:[#allocation9 + $0x3e0] sm:$0xff]
    %v581 = vadd.f32 %v565, %v577
    %v582 = vadd.f32 %v566, %v578
    %v583 = vadd.f32 %v567, %v579
    %v584 = vadd.f32 %v568, %v580
    %v585 = vld [vmem:[#allocation6 + $0xe8] sm:$0xff]
    %v586 = vld [vmem:[#allocation6 + $0x1e8] sm:$0xff]
    %v587 = vld [vmem:[#allocation6 + $0x2e8] sm:$0xff]
    %v588 = vld [vmem:[#allocation6 + $0x3e8] sm:$0xff]
    %v589 = vadd.f32 %v573, %v585
    %v590 = vadd.f32 %v574, %v586
    %v591 = vadd.f32 %v575, %v587
    %v592 = vadd.f32 %v576, %v588
    %v593 = vld [vmem:[#allocation9 + $0xe8] sm:$0xff]
    %v594 = vld [vmem:[#allocation9 + $0x1e8] sm:$0xff]
    %v595 = vld [vmem:[#allocation9 + $0x2e8] sm:$0xff]
    %v596 = vld [vmem:[#allocation9 + $0x3e8] sm:$0xff]
    %v597 = vadd.f32 %v581, %v593
    %v598 = vadd.f32 %v582, %v594
    %v599 = vadd.f32 %v583, %v595
    %v600 = vadd.f32 %v584, %v596
    %v601 = vld [vmem:[#allocation6 + $0xf0] sm:$0xff]
    %v602 = vld [vmem:[#allocation6 + $0x1f0] sm:$0xff]
    %v603 = vld [vmem:[#allocation6 + $0x2f0] sm:$0xff]
    %v604 = vld [vmem:[#allocation6 + $0x3f0] sm:$0xff]
    %v605 = vadd.f32 %v589, %v601
    %v606 = vadd.f32 %v590, %v602
    %v607 = vadd.f32 %v591, %v603
    %v608 = vadd.f32 %v592, %v604
    %v609 = vld [vmem:[#allocation9 + $0xf0] sm:$0xff]
    %v610 = vld [vmem:[#allocation9 + $0x1f0] sm:$0xff]
    %v611 = vld [vmem:[#allocation9 + $0x2f0] sm:$0xff]
    %v612 = vld [vmem:[#allocation9 + $0x3f0] sm:$0xff]
    %v613 = vadd.f32 %v597, %v609
    %v614 = vadd.f32 %v598, %v610
    %v615 = vadd.f32 %v599, %v611
    %v616 = vadd.f32 %v600, %v612
    %v617 = vld [vmem:[#allocation6 + $0xf8] sm:$0xff]
    %v618 = vld [vmem:[#allocation6 + $0x1f8] sm:$0xff]
    %v619 = vld [vmem:[#allocation6 + $0x2f8] sm:$0xff]
    %v620 = vld [vmem:[#allocation6 + $0x3f8] sm:$0xff]
    %v621 = vadd.f32 %v605, %v617
    %v622 = vadd.f32 %v606, %v618
    %v623 = vadd.f32 %v607, %v619
    %v624 = vadd.f32 %v608, %v620
    %v625 = vld [vmem:[#allocation9 + $0xf8] sm:$0xff]
    %v626 = vld [vmem:[#allocation9 + $0x1f8] sm:$0xff]
    %v627 = vld [vmem:[#allocation9 + $0x2f8] sm:$0xff]
    %v628 = vld [vmem:[#allocation9 + $0x3f8] sm:$0xff]
    %v629 = vadd.f32 %v613, %v625
    %v630 = vadd.f32 %v614, %v626
    %v631 = vadd.f32 %v615, %v627
    %v632 = vadd.f32 %v616, %v628
    %633 = vst [vmem:[#allocation2] sm:$0xff] %v621
    %634 = vst [vmem:[#allocation2 + $0x8] sm:$0xff] %v622
    %635 = vst [vmem:[#allocation2 + $0x10] sm:$0xff] %v623
    %636 = vst [vmem:[#allocation2 + $0x18] sm:$0xff] %v624
    %637 = vst [vmem:[#allocation3] sm:$0xff] %v629
    %638 = vst [vmem:[#allocation3 + $0x8] sm:$0xff] %v630
    %639 = vst [vmem:[#allocation3 + $0x10] sm:$0xff] %v631
    %640 = vst [vmem:[#allocation3 + $0x18] sm:$0xff] %v632
    // Predicated region
    $region62: #{tpu_custom_call.1} parent=1 // pred_check
      %p641 = pneg %p101
    $region63: #{tpu_custom_call.1} parent=1 // pred_check_branch
      %643 = sbr.rel (%p641) target = $region65
    $region64: #{tpu_custom_call.1} parent=1 // pred_region
      %644 = vadd.xlane.f32.xlu0 %v621
      %v645 = vpop.xlane.xlu0 %644
      %646 = vadd.xlane.f32.xlu0 %v622
      %v647 = vpop.xlane.xlu0 %646
      %648 = vadd.xlane.f32.xlu0 %v623
      %v649 = vpop.xlane.xlu0 %648
      %650 = vadd.xlane.f32.xlu0 %v624
      %v651 = vpop.xlane.xlu0 %650
      %652 = vadd.xlane.f32.xlu0 %v629
      %v653 = vpop.xlane.xlu0 %652
      %654 = vadd.xlane.f32.xlu0 %v630
      %v655 = vpop.xlane.xlu0 %654
      %656 = vadd.xlane.f32.xlu0 %v631
      %v657 = vpop.xlane.xlu0 %656
      %658 = vadd.xlane.f32.xlu0 %v632
      %v659 = vpop.xlane.xlu0 %658
      %v664 = vlaneseq
      %v665 = vand.u32 %v664, 127
      %v666 = vlaneseq
      %v667 = vshrl.u32 %v666, 7
      %v668 = vsub.s32 %v665, %v667
      %v669 = vrot.slane %v645, %v668
      %v670 = vadd.s32 %v665, 4294967288
      %v671 = vlaneseq
      %v672 = vshrl.u32 %v671, 7
      %v673 = vsub.s32 %v670, %v672
      %v674 = vrot.slane %v647, %v673
      %vm675 = vcmask 130112
      %v676 = vsel %vm675, %v674, %v669
      %v677 = vlaneseq
      %v678 = vshrl.u32 %v677, 7
      %v679 = vsub.s32 %v665, %v678
      %v680 = vrot.slane %v649, %v679
      %v681 = vlaneseq
      %v682 = vshrl.u32 %v681, 7
      %v683 = vsub.s32 %v670, %v682
      %v684 = vrot.slane %v651, %v683
      %v685 = vsel %vm675, %v684, %v680
      %vm686 = vcmask 1041409
      %v687 = vsel %vm686, %v685, %v676
      %vm689 = vcmask 123904
      %690 = vst.msk [vmem:[#allocation4] sm:$0x3] %vm689, %v687
      %v695 = vlaneseq
      %v696 = vshrl.u32 %v695, 7
      %v697 = vsub.s32 %v665, %v696
      %v698 = vrot.slane %v653, %v697
      %v699 = vlaneseq
      %v700 = vshrl.u32 %v699, 7
      %v701 = vsub.s32 %v670, %v700
      %v702 = vrot.slane %v655, %v701
      %v703 = vsel %vm675, %v702, %v698
      %v704 = vlaneseq
      %v705 = vshrl.u32 %v704, 7
      %v706 = vsub.s32 %v665, %v705
      %v707 = vrot.slane %v657, %v706
      %v708 = vlaneseq
      %v709 = vshrl.u32 %v708, 7
      %v710 = vsub.s32 %v670, %v709
      %v711 = vrot.slane %v659, %v710
      %v712 = vsel %vm675, %v711, %v707
      %v713 = vsel %vm686, %v712, %v703
      %715 = vst.msk [vmem:[#allocation5] sm:$0x3] %vm689, %v713
    $region65: #{tpu_custom_call.1} parent=1 // pred_fallthru
      _
    %p716 = scmp.eq.s32.totalorder 0, 0
    %p717 = pnand %p716, %p101
    %p718 = pneg %p717
    // Predicated region
    $region66: #{tpu_custom_call.1} parent=1 // pred_check
      _
    $region67: #{tpu_custom_call.1} parent=1 // pred_check_branch
      %720 = sbr.rel (%p717) target = $region69
    $region68: #{tpu_custom_call.1} parent=1 // pred_region
      %v721 = vld [vmem:[#allocation4] sm:$0x3]
      %v722 = vmul.f32 %v721, 0.00024414063
      %v723 = vld [vmem:[#allocation5] sm:$0x3]
      %v724 = vmul.f32 %v723, 0.00024414063
      %v725 = vld [vmem:[#allocation11] sm:$0xff]
      %v726 = vld [vmem:[#allocation11 + $0x8] sm:$0xff]
      %vm727 = vcmask 130048
      %v729 = vsel %vm727, %v722, 0
      %731 = vmatprep.subr.mxu0 0.0
      %v732 = vand.u32 %v725, 4294901760
      %733 = vmatpush1.msra.mxu0 %v732
      %734 = vmatprep.subr.mxu0 0.0
      %v735 = vand.u32 %v726, 4294901760
      %736 = vmatpush1.msra.mxu0 %v735
      %737 = vmatprep.subr.mxu0 0.0
      %738 = vmatpush1.msra.mxu0 0.0
      %739 = vmatprep.subr.mxu0 0.0
      %740 = vmatpush1.msra.mxu0 0.0
      %741 = vmatprep.subr.mxu0 0.0
      %742 = vmatpush1.msra.mxu0 0.0
      %743 = vmatprep.subr.mxu0 0.0
      %744 = vmatpush1.msra.mxu0 0.0
      %745 = vmatprep.subr.mxu0 0.0
      %746 = vmatpush1.msra.mxu0 0.0
      %747 = vmatprep.subr.mxu0 0.0
      %748 = vmatpush1.msra.mxu0 0.0
      %749 = vmatprep.subr.mxu0 0.0
      %750 = vmatpush1.msra.mxu0 0.0
      %751 = vmatprep.subr.mxu0 0.0
      %752 = vmatpush1.msra.mxu0 0.0
      %753 = vmatprep.subr.mxu0 0.0
      %754 = vmatpush1.msra.mxu0 0.0
      %755 = vmatprep.subr.mxu0 0.0
      %756 = vmatpush1.msra.mxu0 0.0
      %757 = vmatprep.subr.mxu0 0.0
      %758 = vmatpush1.msra.mxu0 0.0
      %759 = vmatprep.subr.mxu0 0.0
      %760 = vmatpush1.msra.mxu0 0.0
      %761 = vmatprep.subr.mxu0 0.0
      %762 = vmatpush1.msra.mxu0 0.0
      %763 = vmatprep.subr.mxu0 0.0
      %764 = vmatpush1.msra.mxu0 0.0
      %765 = vmatprep.subr.mxu0 0.0
      %766 = vmatpush1.msra.mxu0 0.0
      %767 = vmatprep.subr.mxu0 0.0
      %768 = vmatpush1.msra.mxu0 0.0
      %769 = vmatprep.subr.mxu0 0.0
      %770 = vmatpush1.msra.mxu0 0.0
      %771 = vmatprep.subr.mxu0 0.0
      %772 = vmatpush1.msra.mxu0 0.0
      %773 = vmatprep.subr.mxu0 0.0
      %774 = vmatpush1.msra.mxu0 0.0
      %775 = vmatprep.subr.mxu0 0.0
      %776 = vmatpush1.msra.mxu0 0.0
      %777 = vmatprep.subr.mxu0 0.0
      %778 = vmatpush1.msra.mxu0 0.0
      %779 = vmatprep.subr.mxu0 0.0
      %780 = vmatpush1.msra.mxu0 0.0
      %781 = vmatprep.subr.mxu0 0.0
      %782 = vmatpush1.msra.mxu0 0.0
      %783 = vmatprep.subr.mxu0 0.0
      %784 = vmatpush1.msra.mxu0 0.0
      %785 = vmatprep.subr.mxu0 0.0
      %786 = vmatpush1.msra.mxu0 0.0
      %787 = vmatprep.subr.mxu0 0.0
      %788 = vmatpush1.msra.mxu0 0.0
      %789 = vmatprep.subr.mxu0 0.0
      %790 = vmatpush1.msra.mxu0 0.0
      %791 = vmatprep.subr.mxu0 0.0
      %792 = vmatpush1.msra.mxu0 0.0
      %793 = vmatprep.subr.mxu0 0.0
      %794 = vmatpush1.msra.mxu0 0.0
      %795 = vmatprep.subr.mxu0 0.0
      %796 = vmatpush1.msra.mxu0 0.0
      %797 = vmatprep.mubr.f32.mxu0 0.0
      %v798 = vand.u32 %v729, 4294901760
      %v799 = vsub.f32 %v729, %v798
      %v800 = vand.u32 %v799, 4294901760
      %v801 = vsub.f32 %v799, %v800
      %v802 = vand.u32 %v801, 4294901760
      %803 = vmatmul.mubr.f32.gmra.mrb[0].mxu0 %v802
      %v804 = vpop.f32.mrb[0].mxu0
      %v805 = vadd.f32 0.0, %v804
      %v806 = vpop.f32.mrb[0].mxu0
      %807 = vdwg.mxu0
      %808 = vmatprep.subr.mxu0 0.0
      %v809 = vand.u32 %v725, 4294901760
      %v810 = vsub.f32 %v725, %v809
      %v811 = vand.u32 %v810, 4294901760
      %v812 = vsub.f32 %v810, %v811
      %v813 = vand.u32 %v812, 4294901760
      %814 = vmatpush1.msra.mxu0 %v813
      %815 = vmatprep.subr.mxu0 0.0
      %v816 = vand.u32 %v726, 4294901760
      %v817 = vsub.f32 %v726, %v816
      %v818 = vand.u32 %v817, 4294901760
      %v819 = vsub.f32 %v817, %v818
      %v820 = vand.u32 %v819, 4294901760
      %821 = vmatpush1.msra.mxu0 %v820
      %822 = vmatprep.subr.mxu0 0.0
      %823 = vmatpush1.msra.mxu0 0.0
      %824 = vmatprep.subr.mxu0 0.0
      %825 = vmatpush1.msra.mxu0 0.0
      %826 = vmatprep.subr.mxu0 0.0
      %827 = vmatpush1.msra.mxu0 0.0
      %828 = vmatprep.subr.mxu0 0.0
      %829 = vmatpush1.msra.mxu0 0.0
      %830 = vmatprep.subr.mxu0 0.0
      %831 = vmatpush1.msra.mxu0 0.0
      %832 = vmatprep.subr.mxu0 0.0
      %833 = vmatpush1.msra.mxu0 0.0
      %834 = vmatprep.subr.mxu0 0.0
      %835 = vmatpush1.msra.mxu0 0.0
      %836 = vmatprep.subr.mxu0 0.0
      %837 = vmatpush1.msra.mxu0 0.0
      %838 = vmatprep.subr.mxu0 0.0
      %839 = vmatpush1.msra.mxu0 0.0
      %840 = vmatprep.subr.mxu0 0.0
      %841 = vmatpush1.msra.mxu0 0.0
      %842 = vmatprep.subr.mxu0 0.0
      %843 = vmatpush1.msra.mxu0 0.0
      %844 = vmatprep.subr.mxu0 0.0
      %845 = vmatpush1.msra.mxu0 0.0
      %846 = vmatprep.subr.mxu0 0.0
      %847 = vmatpush1.msra.mxu0 0.0
      %848 = vmatprep.subr.mxu0 0.0
      %849 = vmatpush1.msra.mxu0 0.0
      %850 = vmatprep.subr.mxu0 0.0
      %851 = vmatpush1.msra.mxu0 0.0
      %852 = vmatprep.subr.mxu0 0.0
      %853 = vmatpush1.msra.mxu0 0.0
      %854 = vmatprep.subr.mxu0 0.0
      %855 = vmatpush1.msra.mxu0 0.0
      %856 = vmatprep.subr.mxu0 0.0
      %857 = vmatpush1.msra.mxu0 0.0
      %858 = vmatprep.subr.mxu0 0.0
      %859 = vmatpush1.msra.mxu0 0.0
      %860 = vmatprep.subr.mxu0 0.0
      %861 = vmatpush1.msra.mxu0 0.0
      %862 = vmatprep.subr.mxu0 0.0
      %863 = vmatpush1.msra.mxu0 0.0
      %864 = vmatprep.subr.mxu0 0.0
      %865 = vmatpush1.msra.mxu0 0.0
      %866 = vmatprep.subr.mxu0 0.0
      %867 = vmatpush1.msra.mxu0 0.0
      %868 = vmatprep.subr.mxu0 0.0
      %869 = vmatpush1.msra.mxu0 0.0
      %870 = vmatprep.subr.mxu0 0.0
      %871 = vmatpush1.msra.mxu0 0.0
      %872 = vmatprep.subr.mxu0 0.0
      %873 = vmatpush1.msra.mxu0 0.0
      %874 = vmatprep.subr.mxu0 0.0
      %875 = vmatpush1.msra.mxu0 0.0
      %876 = vmatprep.subr.mxu0 0.0
      %877 = vmatpush1.msra.mxu0 0.0
      %878 = vmatprep.subr.mxu0 0.0
      %879 = vmatpush1.msra.mxu0 0.0
      %880 = vmatprep.subr.mxu0 0.0
      %881 = vmatpush1.msra.mxu0 0.0
      %882 = vmatprep.mubr.f32.mxu0 0.0
      %v883 = vand.u32 %v729, 4294901760
      %884 = vmatmul.mubr.f32.gmra.mrb[0].mxu0 %v883
      %v885 = vpop.f32.mrb[0].mxu0
      %v886 = vadd.f32 %v805, %v885
      %v887 = vpop.f32.mrb[0].mxu0
      %888 = vdwg.mxu0
      %889 = vmatprep.subr.mxu0 0.0
      %v890 = vand.u32 %v725, 4294901760
      %v891 = vsub.f32 %v725, %v890
      %892 = vmatpush1.msra.mxu0 %v891
      %893 = vmatprep.subr.mxu0 0.0
      %v894 = vand.u32 %v726, 4294901760
      %v895 = vsub.f32 %v726, %v894
      %896 = vmatpush1.msra.mxu0 %v895
      %897 = vmatprep.subr.mxu0 0.0
      %898 = vmatpush1.msra.mxu0 0.0
      %899 = vmatprep.subr.mxu0 0.0
      %900 = vmatpush1.msra.mxu0 0.0
      %901 = vmatprep.subr.mxu0 0.0
      %902 = vmatpush1.msra.mxu0 0.0
      %903 = vmatprep.subr.mxu0 0.0
      %904 = vmatpush1.msra.mxu0 0.0
      %905 = vmatprep.subr.mxu0 0.0
      %906 = vmatpush1.msra.mxu0 0.0
      %907 = vmatprep.subr.mxu0 0.0
      %908 = vmatpush1.msra.mxu0 0.0
      %909 = vmatprep.subr.mxu0 0.0
      %910 = vmatpush1.msra.mxu0 0.0
      %911 = vmatprep.subr.mxu0 0.0
      %912 = vmatpush1.msra.mxu0 0.0
      %913 = vmatprep.subr.mxu0 0.0
      %914 = vmatpush1.msra.mxu0 0.0
      %915 = vmatprep.subr.mxu0 0.0
      %916 = vmatpush1.msra.mxu0 0.0
      %917 = vmatprep.subr.mxu0 0.0
      %918 = vmatpush1.msra.mxu0 0.0
      %919 = vmatprep.subr.mxu0 0.0
      %920 = vmatpush1.msra.mxu0 0.0
      %921 = vmatprep.subr.mxu0 0.0
      %922 = vmatpush1.msra.mxu0 0.0
      %923 = vmatprep.subr.mxu0 0.0
      %924 = vmatpush1.msra.mxu0 0.0
      %925 = vmatprep.subr.mxu0 0.0
      %926 = vmatpush1.msra.mxu0 0.0
      %927 = vmatprep.subr.mxu0 0.0
      %928 = vmatpush1.msra.mxu0 0.0
      %929 = vmatprep.subr.mxu0 0.0
      %930 = vmatpush1.msra.mxu0 0.0
      %931 = vmatprep.subr.mxu0 0.0
      %932 = vmatpush1.msra.mxu0 0.0
      %933 = vmatprep.subr.mxu0 0.0
      %934 = vmatpush1.msra.mxu0 0.0
      %935 = vmatprep.subr.mxu0 0.0
      %936 = vmatpush1.msra.mxu0 0.0
      %937 = vmatprep.subr.mxu0 0.0
      %938 = vmatpush1.msra.mxu0 0.0
      %939 = vmatprep.subr.mxu0 0.0
      %940 = vmatpush1.msra.mxu0 0.0
      %941 = vmatprep.subr.mxu0 0.0
      %942 = vmatpush1.msra.mxu0 0.0
      %943 = vmatprep.subr.mxu0 0.0
      %944 = vmatpush1.msra.mxu0 0.0
      %945 = vmatprep.subr.mxu0 0.0
      %946 = vmatpush1.msra.mxu0 0.0
      %947 = vmatprep.subr.mxu0 0.0
      %948 = vmatpush1.msra.mxu0 0.0
      %949 = vmatprep.subr.mxu0 0.0
      %950 = vmatpush1.msra.mxu0 0.0
      %951 = vmatprep.subr.mxu0 0.0
      %952 = vmatpush1.msra.mxu0 0.0
      %953 = vmatprep.subr.mxu0 0.0
      %954 = vmatpush1.msra.mxu0 0.0
      %955 = vmatprep.subr.mxu0 0.0
      %956 = vmatpush1.msra.mxu0 0.0
      %957 = vmatprep.mubr.f32.mxu0 0.0
      %v958 = vand.u32 %v729, 4294901760
      %v959 = vsub.f32 %v729, %v958
      %960 = vmatmul.mubr.f32.gmra.mrb[0].mxu0 %v959
      %v961 = vpop.f32.mrb[0].mxu0
      %v962 = vadd.f32 %v886, %v961
      %v963 = vpop.f32.mrb[0].mxu0
      %964 = vdwg.mxu0
      %965 = vmatprep.subr.mxu0 0.0
      %v966 = vand.u32 %v725, 4294901760
      %967 = vmatpush1.msra.mxu0 %v966
      %968 = vmatprep.subr.mxu0 0.0
      %v969 = vand.u32 %v726, 4294901760
      %970 = vmatpush1.msra.mxu0 %v969
      %971 = vmatprep.subr.mxu0 0.0
      %972 = vmatpush1.msra.mxu0 0.0
      %973 = vmatprep.subr.mxu0 0.0
      %974 = vmatpush1.msra.mxu0 0.0
      %975 = vmatprep.subr.mxu0 0.0
      %976 = vmatpush1.msra.mxu0 0.0
      %977 = vmatprep.subr.mxu0 0.0
      %978 = vmatpush1.msra.mxu0 0.0
      %979 = vmatprep.subr.mxu0 0.0
      %980 = vmatpush1.msra.mxu0 0.0
      %981 = vmatprep.subr.mxu0 0.0
      %982 = vmatpush1.msra.mxu0 0.0
      %983 = vmatprep.subr.mxu0 0.0
      %984 = vmatpush1.msra.mxu0 0.0
      %985 = vmatprep.subr.mxu0 0.0
      %986 = vmatpush1.msra.mxu0 0.0
      %987 = vmatprep.subr.mxu0 0.0
      %988 = vmatpush1.msra.mxu0 0.0
      %989 = vmatprep.subr.mxu0 0.0
      %990 = vmatpush1.msra.mxu0 0.0
      %991 = vmatprep.subr.mxu0 0.0
      %992 = vmatpush1.msra.mxu0 0.0
      %993 = vmatprep.subr.mxu0 0.0
      %994 = vmatpush1.msra.mxu0 0.0
      %995 = vmatprep.subr.mxu0 0.0
      %996 = vmatpush1.msra.mxu0 0.0
      %997 = vmatprep.subr.mxu0 0.0
      %998 = vmatpush1.msra.mxu0 0.0
      %999 = vmatprep.subr.mxu0 0.0
      %1000 = vmatpush1.msra.mxu0 0.0
      %1001 = vmatprep.subr.mxu0 0.0
      %1002 = vmatpush1.msra.mxu0 0.0
      %1003 = vmatprep.subr.mxu0 0.0
      %1004 = vmatpush1.msra.mxu0 0.0
      %1005 = vmatprep.subr.mxu0 0.0
      %1006 = vmatpush1.msra.mxu0 0.0
      %1007 = vmatprep.subr.mxu0 0.0
      %1008 = vmatpush1.msra.mxu0 0.0
      %1009 = vmatprep.subr.mxu0 0.0
      %1010 = vmatpush1.msra.mxu0 0.0
      %1011 = vmatprep.subr.mxu0 0.0
      %1012 = vmatpush1.msra.mxu0 0.0
      %1013 = vmatprep.subr.mxu0 0.0
      %1014 = vmatpush1.msra.mxu0 0.0
      %1015 = vmatprep.subr.mxu0 0.0
      %1016 = vmatpush1.msra.mxu0 0.0
      %1017 = vmatprep.subr.mxu0 0.0
      %1018 = vmatpush1.msra.mxu0 0.0
      %1019 = vmatprep.subr.mxu0 0.0
      %1020 = vmatpush1.msra.mxu0 0.0
      %1021 = vmatprep.subr.mxu0 0.0
      %1022 = vmatpush1.msra.mxu0 0.0
      %1023 = vmatprep.subr.mxu0 0.0
      %1024 = vmatpush1.msra.mxu0 0.0
      %1025 = vmatprep.subr.mxu0 0.0
      %1026 = vmatpush1.msra.mxu0 0.0
      %1027 = vmatprep.subr.mxu0 0.0
      %1028 = vmatpush1.msra.mxu0 0.0
      %1029 = vmatprep.subr.mxu0 0.0
      %1030 = vmatpush1.msra.mxu0 0.0
      %1031 = vmatprep.mubr.f32.mxu0 0.0
      %v1032 = vand.u32 %v729, 4294901760
      %v1033 = vsub.f32 %v729, %v1032
      %v1034 = vand.u32 %v1033, 4294901760
      %1035 = vmatmul.mubr.f32.gmra.mrb[0].mxu0 %v1034
      %v1036 = vpop.f32.mrb[0].mxu0
      %v1037 = vadd.f32 %v962, %v1036
      %v1038 = vpop.f32.mrb[0].mxu0
      %1039 = vdwg.mxu0
      %1040 = vmatprep.subr.mxu0 0.0
      %v1041 = vand.u32 %v725, 4294901760
      %v1042 = vsub.f32 %v725, %v1041
      %v1043 = vand.u32 %v1042, 4294901760
      %1044 = vmatpush1.msra.mxu0 %v1043
      %1045 = vmatprep.subr.mxu0 0.0
      %v1046 = vand.u32 %v726, 4294901760
      %v1047 = vsub.f32 %v726, %v1046
      %v1048 = vand.u32 %v1047, 4294901760
      %1049 = vmatpush1.msra.mxu0 %v1048
      %1050 = vmatprep.subr.mxu0 0.0
      %1051 = vmatpush1.msra.mxu0 0.0
      %1052 = vmatprep.subr.mxu0 0.0
      %1053 = vmatpush1.msra.mxu0 0.0
      %1054 = vmatprep.subr.mxu0 0.0
      %1055 = vmatpush1.msra.mxu0 0.0
      %1056 = vmatprep.subr.mxu0 0.0
      %1057 = vmatpush1.msra.mxu0 0.0
      %1058 = vmatprep.subr.mxu0 0.0
      %1059 = vmatpush1.msra.mxu0 0.0
      %1060 = vmatprep.subr.mxu0 0.0
      %1061 = vmatpush1.msra.mxu0 0.0
      %1062 = vmatprep.subr.mxu0 0.0
      %1063 = vmatpush1.msra.mxu0 0.0
      %1064 = vmatprep.subr.mxu0 0.0
      %1065 = vmatpush1.msra.mxu0 0.0
      %1066 = vmatprep.subr.mxu0 0.0
      %1067 = vmatpush1.msra.mxu0 0.0
      %1068 = vmatprep.subr.mxu0 0.0
      %1069 = vmatpush1.msra.mxu0 0.0
      %1070 = vmatprep.subr.mxu0 0.0
      %1071 = vmatpush1.msra.mxu0 0.0
      %1072 = vmatprep.subr.mxu0 0.0
      %1073 = vmatpush1.msra.mxu0 0.0
      %1074 = vmatprep.subr.mxu0 0.0
      %1075 = vmatpush1.msra.mxu0 0.0
      %1076 = vmatprep.subr.mxu0 0.0
      %1077 = vmatpush1.msra.mxu0 0.0
      %1078 = vmatprep.subr.mxu0 0.0
      %1079 = vmatpush1.msra.mxu0 0.0
      %1080 = vmatprep.subr.mxu0 0.0
      %1081 = vmatpush1.msra.mxu0 0.0
      %1082 = vmatprep.subr.mxu0 0.0
      %1083 = vmatpush1.msra.mxu0 0.0
      %1084 = vmatprep.subr.mxu0 0.0
      %1085 = vmatpush1.msra.mxu0 0.0
      %1086 = vmatprep.subr.mxu0 0.0
      %1087 = vmatpush1.msra.mxu0 0.0
      %1088 = vmatprep.subr.mxu0 0.0
      %1089 = vmatpush1.msra.mxu0 0.0
      %1090 = vmatprep.subr.mxu0 0.0
      %1091 = vmatpush1.msra.mxu0 0.0
      %1092 = vmatprep.subr.mxu0 0.0
      %1093 = vmatpush1.msra.mxu0 0.0
      %1094 = vmatprep.subr.mxu0 0.0
      %1095 = vmatpush1.msra.mxu0 0.0
      %1096 = vmatprep.subr.mxu0 0.0
      %1097 = vmatpush1.msra.mxu0 0.0
      %1098 = vmatprep.subr.mxu0 0.0
      %1099 = vmatpush1.msra.mxu0 0.0
      %1100 = vmatprep.subr.mxu0 0.0
      %1101 = vmatpush1.msra.mxu0 0.0
      %1102 = vmatprep.subr.mxu0 0.0
      %1103 = vmatpush1.msra.mxu0 0.0
      %1104 = vmatprep.subr.mxu0 0.0
      %1105 = vmatpush1.msra.mxu0 0.0
      %1106 = vmatprep.subr.mxu0 0.0
      %1107 = vmatpush1.msra.mxu0 0.0
      %1108 = vmatprep.subr.mxu0 0.0
      %1109 = vmatpush1.msra.mxu0 0.0
      %1110 = vmatprep.mubr.f32.mxu0 0.0
      %v1111 = vand.u32 %v729, 4294901760
      %1112 = vmatmul.mubr.f32.gmra.mrb[0].mxu0 %v1111
      %v1113 = vpop.f32.mrb[0].mxu0
      %v1114 = vadd.f32 %v1037, %v1113
      %v1115 = vpop.f32.mrb[0].mxu0
      %1116 = vdwg.mxu0
      %1117 = vmatprep.subr.mxu0 0.0
      %v1118 = vand.u32 %v725, 4294901760
      %1119 = vmatpush1.msra.mxu0 %v1118
      %1120 = vmatprep.subr.mxu0 0.0
      %v1121 = vand.u32 %v726, 4294901760
      %1122 = vmatpush1.msra.mxu0 %v1121
      %1123 = vmatprep.subr.mxu0 0.0
      %1124 = vmatpush1.msra.mxu0 0.0
      %1125 = vmatprep.subr.mxu0 0.0
      %1126 = vmatpush1.msra.mxu0 0.0
      %1127 = vmatprep.subr.mxu0 0.0
      %1128 = vmatpush1.msra.mxu0 0.0
      %1129 = vmatprep.subr.mxu0 0.0
      %1130 = vmatpush1.msra.mxu0 0.0
      %1131 = vmatprep.subr.mxu0 0.0
      %1132 = vmatpush1.msra.mxu0 0.0
      %1133 = vmatprep.subr.mxu0 0.0
      %1134 = vmatpush1.msra.mxu0 0.0
      %1135 = vmatprep.subr.mxu0 0.0
      %1136 = vmatpush1.msra.mxu0 0.0
      %1137 = vmatprep.subr.mxu0 0.0
      %1138 = vmatpush1.msra.mxu0 0.0
      %1139 = vmatprep.subr.mxu0 0.0
      %1140 = vmatpush1.msra.mxu0 0.0
      %1141 = vmatprep.subr.mxu0 0.0
      %1142 = vmatpush1.msra.mxu0 0.0
      %1143 = vmatprep.subr.mxu0 0.0
      %1144 = vmatpush1.msra.mxu0 0.0
      %1145 = vmatprep.subr.mxu0 0.0
      %1146 = vmatpush1.msra.mxu0 0.0
      %1147 = vmatprep.subr.mxu0 0.0
      %1148 = vmatpush1.msra.mxu0 0.0
      %1149 = vmatprep.subr.mxu0 0.0
      %1150 = vmatpush1.msra.mxu0 0.0
      %1151 = vmatprep.subr.mxu0 0.0
      %1152 = vmatpush1.msra.mxu0 0.0
      %1153 = vmatprep.subr.mxu0 0.0
      %1154 = vmatpush1.msra.mxu0 0.0
      %1155 = vmatprep.subr.mxu0 0.0
      %1156 = vmatpush1.msra.mxu0 0.0
      %1157 = vmatprep.subr.mxu0 0.0
      %1158 = vmatpush1.msra.mxu0 0.0
      %1159 = vmatprep.subr.mxu0 0.0
      %1160 = vmatpush1.msra.mxu0 0.0
      %1161 = vmatprep.subr.mxu0 0.0
      %1162 = vmatpush1.msra.mxu0 0.0
      %1163 = vmatprep.subr.mxu0 0.0
      %1164 = vmatpush1.msra.mxu0 0.0
      %1165 = vmatprep.subr.mxu0 0.0
      %1166 = vmatpush1.msra.mxu0 0.0
      %1167 = vmatprep.subr.mxu0 0.0
      %1168 = vmatpush1.msra.mxu0 0.0
      %1169 = vmatprep.subr.mxu0 0.0
      %1170 = vmatpush1.msra.mxu0 0.0
      %1171 = vmatprep.subr.mxu0 0.0
      %1172 = vmatpush1.msra.mxu0 0.0
      %1173 = vmatprep.subr.mxu0 0.0
      %1174 = vmatpush1.msra.mxu0 0.0
      %1175 = vmatprep.subr.mxu0 0.0
      %1176 = vmatpush1.msra.mxu0 0.0
      %1177 = vmatprep.subr.mxu0 0.0
      %1178 = vmatpush1.msra.mxu0 0.0
      %1179 = vmatprep.subr.mxu0 0.0
      %1180 = vmatpush1.msra.mxu0 0.0
      %1181 = vmatprep.subr.mxu0 0.0
      %1182 = vmatpush1.msra.mxu0 0.0
      %1183 = vmatprep.mubr.f32.mxu0 0.0
      %v1184 = vand.u32 %v729, 4294901760
      %1185 = vmatmul.mubr.f32.gmra.mrb[0].mxu0 %v1184
      %v1186 = vpop.f32.mrb[0].mxu0
      %v1187 = vadd.f32 %v1114, %v1186
      %v1188 = vpop.f32.mrb[0].mxu0
      %1189 = vdwg.mxu0
      %v1190 = vld [vmem:[#allocation12] sm:$0xff]
      %v1191 = vld [vmem:[#allocation12 + $0x8] sm:$0xff]
      %v1193 = vsel %vm727, %v724, 0
      %1195 = vmatprep.subr.mxu0 0.0
      %v1196 = vand.u32 %v1190, 4294901760
      %1197 = vmatpush1.msra.mxu0 %v1196
      %1198 = vmatprep.subr.mxu0 0.0
      %v1199 = vand.u32 %v1191, 4294901760
      %1200 = vmatpush1.msra.mxu0 %v1199
      %1201 = vmatprep.subr.mxu0 0.0
      %1202 = vmatpush1.msra.mxu0 0.0
      %1203 = vmatprep.subr.mxu0 0.0
      %1204 = vmatpush1.msra.mxu0 0.0
      %1205 = vmatprep.subr.mxu0 0.0
      %1206 = vmatpush1.msra.mxu0 0.0
      %1207 = vmatprep.subr.mxu0 0.0
      %1208 = vmatpush1.msra.mxu0 0.0
      %1209 = vmatprep.subr.mxu0 0.0
      %1210 = vmatpush1.msra.mxu0 0.0
      %1211 = vmatprep.subr.mxu0 0.0
      %1212 = vmatpush1.msra.mxu0 0.0
      %1213 = vmatprep.subr.mxu0 0.0
      %1214 = vmatpush1.msra.mxu0 0.0
      %1215 = vmatprep.subr.mxu0 0.0
      %1216 = vmatpush1.msra.mxu0 0.0
      %1217 = vmatprep.subr.mxu0 0.0
      %1218 = vmatpush1.msra.mxu0 0.0
      %1219 = vmatprep.subr.mxu0 0.0
      %1220 = vmatpush1.msra.mxu0 0.0
      %1221 = vmatprep.subr.mxu0 0.0
      %1222 = vmatpush1.msra.mxu0 0.0
      %1223 = vmatprep.subr.mxu0 0.0
      %1224 = vmatpush1.msra.mxu0 0.0
      %1225 = vmatprep.subr.mxu0 0.0
      %1226 = vmatpush1.msra.mxu0 0.0
      %1227 = vmatprep.subr.mxu0 0.0
      %1228 = vmatpush1.msra.mxu0 0.0
      %1229 = vmatprep.subr.mxu0 0.0
      %1230 = vmatpush1.msra.mxu0 0.0
      %1231 = vmatprep.subr.mxu0 0.0
      %1232 = vmatpush1.msra.mxu0 0.0
      %1233 = vmatprep.subr.mxu0 0.0
      %1234 = vmatpush1.msra.mxu0 0.0
      %1235 = vmatprep.subr.mxu0 0.0
      %1236 = vmatpush1.msra.mxu0 0.0
      %1237 = vmatprep.subr.mxu0 0.0
      %1238 = vmatpush1.msra.mxu0 0.0
      %1239 = vmatprep.subr.mxu0 0.0
      %1240 = vmatpush1.msra.mxu0 0.0
      %1241 = vmatprep.subr.mxu0 0.0
      %1242 = vmatpush1.msra.mxu0 0.0
      %1243 = vmatprep.subr.mxu0 0.0
      %1244 = vmatpush1.msra.mxu0 0.0
      %1245 = vmatprep.subr.mxu0 0.0
      %1246 = vmatpush1.msra.mxu0 0.0
      %1247 = vmatprep.subr.mxu0 0.0
      %1248 = vmatpush1.msra.mxu0 0.0
      %1249 = vmatprep.subr.mxu0 0.0
      %1250 = vmatpush1.msra.mxu0 0.0
      %1251 = vmatprep.subr.mxu0 0.0
      %1252 = vmatpush1.msra.mxu0 0.0
      %1253 = vmatprep.subr.mxu0 0.0
      %1254 = vmatpush1.msra.mxu0 0.0
      %1255 = vmatprep.subr.mxu0 0.0
      %1256 = vmatpush1.msra.mxu0 0.0
      %1257 = vmatprep.subr.mxu0 0.0
      %1258 = vmatpush1.msra.mxu0 0.0
      %1259 = vmatprep.subr.mxu0 0.0
      %1260 = vmatpush1.msra.mxu0 0.0
      %1261 = vmatprep.mubr.f32.mxu0 0.0
      %v1262 = vand.u32 %v1193, 4294901760
      %v1263 = vsub.f32 %v1193, %v1262
      %v1264 = vand.u32 %v1263, 4294901760
      %v1265 = vsub.f32 %v1263, %v1264
      %v1266 = vand.u32 %v1265, 4294901760
      %1267 = vmatmul.mubr.f32.gmra.mrb[0].mxu0 %v1266
      %v1268 = vpop.f32.mrb[0].mxu0
      %v1269 = vadd.f32 0.0, %v1268
      %v1270 = vpop.f32.mrb[0].mxu0
      %1271 = vdwg.mxu0
      %1272 = vmatprep.subr.mxu0 0.0
      %v1273 = vand.u32 %v1190, 4294901760
      %v1274 = vsub.f32 %v1190, %v1273
      %v1275 = vand.u32 %v1274, 4294901760
      %v1276 = vsub.f32 %v1274, %v1275
      %v1277 = vand.u32 %v1276, 4294901760
      %1278 = vmatpush1.msra.mxu0 %v1277
      %1279 = vmatprep.subr.mxu0 0.0
      %v1280 = vand.u32 %v1191, 4294901760
      %v1281 = vsub.f32 %v1191, %v1280
      %v1282 = vand.u32 %v1281, 4294901760
      %v1283 = vsub.f32 %v1281, %v1282
      %v1284 = vand.u32 %v1283, 4294901760
      %1285 = vmatpush1.msra.mxu0 %v1284
      %1286 = vmatprep.subr.mxu0 0.0
      %1287 = vmatpush1.msra.mxu0 0.0
      %1288 = vmatprep.subr.mxu0 0.0
      %1289 = vmatpush1.msra.mxu0 0.0
      %1290 = vmatprep.subr.mxu0 0.0
      %1291 = vmatpush1.msra.mxu0 0.0
      %1292 = vmatprep.subr.mxu0 0.0
      %1293 = vmatpush1.msra.mxu0 0.0
      %1294 = vmatprep.subr.mxu0 0.0
      %1295 = vmatpush1.msra.mxu0 0.0
      %1296 = vmatprep.subr.mxu0 0.0
      %1297 = vmatpush1.msra.mxu0 0.0
      %1298 = vmatprep.subr.mxu0 0.0
      %1299 = vmatpush1.msra.mxu0 0.0
      %1300 = vmatprep.subr.mxu0 0.0
      %1301 = vmatpush1.msra.mxu0 0.0
      %1302 = vmatprep.subr.mxu0 0.0
      %1303 = vmatpush1.msra.mxu0 0.0
      %1304 = vmatprep.subr.mxu0 0.0
      %1305 = vmatpush1.msra.mxu0 0.0
      %1306 = vmatprep.subr.mxu0 0.0
      %1307 = vmatpush1.msra.mxu0 0.0
      %1308 = vmatprep.subr.mxu0 0.0
      %1309 = vmatpush1.msra.mxu0 0.0
      %1310 = vmatprep.subr.mxu0 0.0
      %1311 = vmatpush1.msra.mxu0 0.0
      %1312 = vmatprep.subr.mxu0 0.0
      %1313 = vmatpush1.msra.mxu0 0.0
      %1314 = vmatprep.subr.mxu0 0.0
      %1315 = vmatpush1.msra.mxu0 0.0
      %1316 = vmatprep.subr.mxu0 0.0
      %1317 = vmatpush1.msra.mxu0 0.0
      %1318 = vmatprep.subr.mxu0 0.0
      %1319 = vmatpush1.msra.mxu0 0.0
      %1320 = vmatprep.subr.mxu0 0.0
      %1321 = vmatpush1.msra.mxu0 0.0
      %1322 = vmatprep.subr.mxu0 0.0
      %1323 = vmatpush1.msra.mxu0 0.0
      %1324 = vmatprep.subr.mxu0 0.0
      %1325 = vmatpush1.msra.mxu0 0.0
      %1326 = vmatprep.subr.mxu0 0.0
      %1327 = vmatpush1.msra.mxu0 0.0
      %1328 = vmatprep.subr.mxu0 0.0
      %1329 = vmatpush1.msra.mxu0 0.0
      %1330 = vmatprep.subr.mxu0 0.0
      %1331 = vmatpush1.msra.mxu0 0.0
      %1332 = vmatprep.subr.mxu0 0.0
      %1333 = vmatpush1.msra.mxu0 0.0
      %1334 = vmatprep.subr.mxu0 0.0
      %1335 = vmatpush1.msra.mxu0 0.0
      %1336 = vmatprep.subr.mxu0 0.0
      %1337 = vmatpush1.msra.mxu0 0.0
      %1338 = vmatprep.subr.mxu0 0.0
      %1339 = vmatpush1.msra.mxu0 0.0
      %1340 = vmatprep.subr.mxu0 0.0
      %1341 = vmatpush1.msra.mxu0 0.0
      %1342 = vmatprep.subr.mxu0 0.0
      %1343 = vmatpush1.msra.mxu0 0.0
      %1344 = vmatprep.subr.mxu0 0.0
      %1345 = vmatpush1.msra.mxu0 0.0
      %1346 = vmatprep.mubr.f32.mxu0 0.0
      %v1347 = vand.u32 %v1193, 4294901760
      %1348 = vmatmul.mubr.f32.gmra.mrb[0].mxu0 %v1347
      %v1349 = vpop.f32.mrb[0].mxu0
      %v1350 = vadd.f32 %v1269, %v1349
      %v1351 = vpop.f32.mrb[0].mxu0
      %1352 = vdwg.mxu0
      %1353 = vmatprep.subr.mxu0 0.0
      %v1354 = vand.u32 %v1190, 4294901760
      %v1355 = vsub.f32 %v1190, %v1354
      %1356 = vmatpush1.msra.mxu0 %v1355
      %1357 = vmatprep.subr.mxu0 0.0
      %v1358 = vand.u32 %v1191, 4294901760
      %v1359 = vsub.f32 %v1191, %v1358
      %1360 = vmatpush1.msra.mxu0 %v1359
      %1361 = vmatprep.subr.mxu0 0.0
      %1362 = vmatpush1.msra.mxu0 0.0
      %1363 = vmatprep.subr.mxu0 0.0
      %1364 = vmatpush1.msra.mxu0 0.0
      %1365 = vmatprep.subr.mxu0 0.0
      %1366 = vmatpush1.msra.mxu0 0.0
      %1367 = vmatprep.subr.mxu0 0.0
      %1368 = vmatpush1.msra.mxu0 0.0
      %1369 = vmatprep.subr.mxu0 0.0
      %1370 = vmatpush1.msra.mxu0 0.0
      %1371 = vmatprep.subr.mxu0 0.0
      %1372 = vmatpush1.msra.mxu0 0.0
      %1373 = vmatprep.subr.mxu0 0.0
      %1374 = vmatpush1.msra.mxu0 0.0
      %1375 = vmatprep.subr.mxu0 0.0
      %1376 = vmatpush1.msra.mxu0 0.0
      %1377 = vmatprep.subr.mxu0 0.0
      %1378 = vmatpush1.msra.mxu0 0.0
      %1379 = vmatprep.subr.mxu0 0.0
      %1380 = vmatpush1.msra.mxu0 0.0
      %1381 = vmatprep.subr.mxu0 0.0
      %1382 = vmatpush1.msra.mxu0 0.0
      %1383 = vmatprep.subr.mxu0 0.0
      %1384 = vmatpush1.msra.mxu0 0.0
      %1385 = vmatprep.subr.mxu0 0.0
      %1386 = vmatpush1.msra.mxu0 0.0
      %1387 = vmatprep.subr.mxu0 0.0
      %1388 = vmatpush1.msra.mxu0 0.0
      %1389 = vmatprep.subr.mxu0 0.0
      %1390 = vmatpush1.msra.mxu0 0.0
      %1391 = vmatprep.subr.mxu0 0.0
      %1392 = vmatpush1.msra.mxu0 0.0
      %1393 = vmatprep.subr.mxu0 0.0
      %1394 = vmatpush1.msra.mxu0 0.0
      %1395 = vmatprep.subr.mxu0 0.0
      %1396 = vmatpush1.msra.mxu0 0.0
      %1397 = vmatprep.subr.mxu0 0.0
      %1398 = vmatpush1.msra.mxu0 0.0
      %1399 = vmatprep.subr.mxu0 0.0
      %1400 = vmatpush1.msra.mxu0 0.0
      %1401 = vmatprep.subr.mxu0 0.0
      %1402 = vmatpush1.msra.mxu0 0.0
      %1403 = vmatprep.subr.mxu0 0.0
      %1404 = vmatpush1.msra.mxu0 0.0
      %1405 = vmatprep.subr.mxu0 0.0
      %1406 = vmatpush1.msra.mxu0 0.0
      %1407 = vmatprep.subr.mxu0 0.0
      %1408 = vmatpush1.msra.mxu0 0.0
      %1409 = vmatprep.subr.mxu0 0.0
      %1410 = vmatpush1.msra.mxu0 0.0
      %1411 = vmatprep.subr.mxu0 0.0
      %1412 = vmatpush1.msra.mxu0 0.0
      %1413 = vmatprep.subr.mxu0 0.0
      %1414 = vmatpush1.msra.mxu0 0.0
      %1415 = vmatprep.subr.mxu0 0.0
      %1416 = vmatpush1.msra.mxu0 0.0
      %1417 = vmatprep.subr.mxu0 0.0
      %1418 = vmatpush1.msra.mxu0 0.0
      %1419 = vmatprep.subr.mxu0 0.0
      %1420 = vmatpush1.msra.mxu0 0.0
      %1421 = vmatprep.mubr.f32.mxu0 0.0
      %v1422 = vand.u32 %v1193, 4294901760
      %v1423 = vsub.f32 %v1193, %v1422
      %1424 = vmatmul.mubr.f32.gmra.mrb[0].mxu0 %v1423
      %v1425 = vpop.f32.mrb[0].mxu0
      %v1426 = vadd.f32 %v1350, %v1425
      %v1427 = vpop.f32.mrb[0].mxu0
      %1428 = vdwg.mxu0
      %1429 = vmatprep.subr.mxu0 0.0
      %v1430 = vand.u32 %v1190, 4294901760
      %1431 = vmatpush1.msra.mxu0 %v1430
      %1432 = vmatprep.subr.mxu0 0.0
      %v1433 = vand.u32 %v1191, 4294901760
      %1434 = vmatpush1.msra.mxu0 %v1433
      %1435 = vmatprep.subr.mxu0 0.0
      %1436 = vmatpush1.msra.mxu0 0.0
      %1437 = vmatprep.subr.mxu0 0.0
      %1438 = vmatpush1.msra.mxu0 0.0
      %1439 = vmatprep.subr.mxu0 0.0
      %1440 = vmatpush1.msra.mxu0 0.0
      %1441 = vmatprep.subr.mxu0 0.0
      %1442 = vmatpush1.msra.mxu0 0.0
      %1443 = vmatprep.subr.mxu0 0.0
      %1444 = vmatpush1.msra.mxu0 0.0
      %1445 = vmatprep.subr.mxu0 0.0
      %1446 = vmatpush1.msra.mxu0 0.0
      %1447 = vmatprep.subr.mxu0 0.0
      %1448 = vmatpush1.msra.mxu0 0.0
      %1449 = vmatprep.subr.mxu0 0.0
      %1450 = vmatpush1.msra.mxu0 0.0
      %1451 = vmatprep.subr.mxu0 0.0
      %1452 = vmatpush1.msra.mxu0 0.0
      %1453 = vmatprep.subr.mxu0 0.0
      %1454 = vmatpush1.msra.mxu0 0.0
      %1455 = vmatprep.subr.mxu0 0.0
      %1456 = vmatpush1.msra.mxu0 0.0
      %1457 = vmatprep.subr.mxu0 0.0
      %1458 = vmatpush1.msra.mxu0 0.0
      %1459 = vmatprep.subr.mxu0 0.0
      %1460 = vmatpush1.msra.mxu0 0.0
      %1461 = vmatprep.subr.mxu0 0.0
      %1462 = vmatpush1.msra.mxu0 0.0
      %1463 = vmatprep.subr.mxu0 0.0
      %1464 = vmatpush1.msra.mxu0 0.0
      %1465 = vmatprep.subr.mxu0 0.0
      %1466 = vmatpush1.msra.mxu0 0.0
      %1467 = vmatprep.subr.mxu0 0.0
      %1468 = vmatpush1.msra.mxu0 0.0
      %1469 = vmatprep.subr.mxu0 0.0
      %1470 = vmatpush1.msra.mxu0 0.0
      %1471 = vmatprep.subr.mxu0 0.0
      %1472 = vmatpush1.msra.mxu0 0.0
      %1473 = vmatprep.subr.mxu0 0.0
      %1474 = vmatpush1.msra.mxu0 0.0
      %1475 = vmatprep.subr.mxu0 0.0
      %1476 = vmatpush1.msra.mxu0 0.0
      %1477 = vmatprep.subr.mxu0 0.0
      %1478 = vmatpush1.msra.mxu0 0.0
      %1479 = vmatprep.subr.mxu0 0.0
      %1480 = vmatpush1.msra.mxu0 0.0
      %1481 = vmatprep.subr.mxu0 0.0
      %1482 = vmatpush1.msra.mxu0 0.0
      %1483 = vmatprep.subr.mxu0 0.0
      %1484 = vmatpush1.msra.mxu0 0.0
      %1485 = vmatprep.subr.mxu0 0.0
      %1486 = vmatpush1.msra.mxu0 0.0
      %1487 = vmatprep.subr.mxu0 0.0
      %1488 = vmatpush1.msra.mxu0 0.0
      %1489 = vmatprep.subr.mxu0 0.0
      %1490 = vmatpush1.msra.mxu0 0.0
      %1491 = vmatprep.subr.mxu0 0.0
      %1492 = vmatpush1.msra.mxu0 0.0
      %1493 = vmatprep.subr.mxu0 0.0
      %1494 = vmatpush1.msra.mxu0 0.0
      %1495 = vmatprep.mubr.f32.mxu0 0.0
      %v1496 = vand.u32 %v1193, 4294901760
      %v1497 = vsub.f32 %v1193, %v1496
      %v1498 = vand.u32 %v1497, 4294901760
      %1499 = vmatmul.mubr.f32.gmra.mrb[0].mxu0 %v1498
      %v1500 = vpop.f32.mrb[0].mxu0
      %v1501 = vadd.f32 %v1426, %v1500
      %v1502 = vpop.f32.mrb[0].mxu0
      %1503 = vdwg.mxu0
      %1504 = vmatprep.subr.mxu0 0.0
      %v1505 = vand.u32 %v1190, 4294901760
      %v1506 = vsub.f32 %v1190, %v1505
      %v1507 = vand.u32 %v1506, 4294901760
      %1508 = vmatpush1.msra.mxu0 %v1507
      %1509 = vmatprep.subr.mxu0 0.0
      %v1510 = vand.u32 %v1191, 4294901760
      %v1511 = vsub.f32 %v1191, %v1510
      %v1512 = vand.u32 %v1511, 4294901760
      %1513 = vmatpush1.msra.mxu0 %v1512
      %1514 = vmatprep.subr.mxu0 0.0
      %1515 = vmatpush1.msra.mxu0 0.0
      %1516 = vmatprep.subr.mxu0 0.0
      %1517 = vmatpush1.msra.mxu0 0.0
      %1518 = vmatprep.subr.mxu0 0.0
      %1519 = vmatpush1.msra.mxu0 0.0
      %1520 = vmatprep.subr.mxu0 0.0
      %1521 = vmatpush1.msra.mxu0 0.0
      %1522 = vmatprep.subr.mxu0 0.0
      %1523 = vmatpush1.msra.mxu0 0.0
      %1524 = vmatprep.subr.mxu0 0.0
      %1525 = vmatpush1.msra.mxu0 0.0
      %1526 = vmatprep.subr.mxu0 0.0
      %1527 = vmatpush1.msra.mxu0 0.0
      %1528 = vmatprep.subr.mxu0 0.0
      %1529 = vmatpush1.msra.mxu0 0.0
      %1530 = vmatprep.subr.mxu0 0.0
      %1531 = vmatpush1.msra.mxu0 0.0
      %1532 = vmatprep.subr.mxu0 0.0
      %1533 = vmatpush1.msra.mxu0 0.0
      %1534 = vmatprep.subr.mxu0 0.0
      %1535 = vmatpush1.msra.mxu0 0.0
      %1536 = vmatprep.subr.mxu0 0.0
      %1537 = vmatpush1.msra.mxu0 0.0
      %1538 = vmatprep.subr.mxu0 0.0
      %1539 = vmatpush1.msra.mxu0 0.0
      %1540 = vmatprep.subr.mxu0 0.0
      %1541 = vmatpush1.msra.mxu0 0.0
      %1542 = vmatprep.subr.mxu0 0.0
      %1543 = vmatpush1.msra.mxu0 0.0
      %1544 = vmatprep.subr.mxu0 0.0
      %1545 = vmatpush1.msra.mxu0 0.0
      %1546 = vmatprep.subr.mxu0 0.0
      %1547 = vmatpush1.msra.mxu0 0.0
      %1548 = vmatprep.subr.mxu0 0.0
      %1549 = vmatpush1.msra.mxu0 0.0
      %1550 = vmatprep.subr.mxu0 0.0
      %1551 = vmatpush1.msra.mxu0 0.0
      %1552 = vmatprep.subr.mxu0 0.0
      %1553 = vmatpush1.msra.mxu0 0.0
      %1554 = vmatprep.subr.mxu0 0.0
      %1555 = vmatpush1.msra.mxu0 0.0
      %1556 = vmatprep.subr.mxu0 0.0
      %1557 = vmatpush1.msra.mxu0 0.0
      %1558 = vmatprep.subr.mxu0 0.0
      %1559 = vmatpush1.msra.mxu0 0.0
      %1560 = vmatprep.subr.mxu0 0.0
      %1561 = vmatpush1.msra.mxu0 0.0
      %1562 = vmatprep.subr.mxu0 0.0
      %1563 = vmatpush1.msra.mxu0 0.0
      %1564 = vmatprep.subr.mxu0 0.0
      %1565 = vmatpush1.msra.mxu0 0.0
      %1566 = vmatprep.subr.mxu0 0.0
      %1567 = vmatpush1.msra.mxu0 0.0
      %1568 = vmatprep.subr.mxu0 0.0
      %1569 = vmatpush1.msra.mxu0 0.0
      %1570 = vmatprep.subr.mxu0 0.0
      %1571 = vmatpush1.msra.mxu0 0.0
      %1572 = vmatprep.subr.mxu0 0.0
      %1573 = vmatpush1.msra.mxu0 0.0
      %1574 = vmatprep.mubr.f32.mxu0 0.0
      %v1575 = vand.u32 %v1193, 4294901760
      %1576 = vmatmul.mubr.f32.gmra.mrb[0].mxu0 %v1575
      %v1577 = vpop.f32.mrb[0].mxu0
      %v1578 = vadd.f32 %v1501, %v1577
      %v1579 = vpop.f32.mrb[0].mxu0
      %1580 = vdwg.mxu0
      %1581 = vmatprep.subr.mxu0 0.0
      %v1582 = vand.u32 %v1190, 4294901760
      %1583 = vmatpush1.msra.mxu0 %v1582
      %1584 = vmatprep.subr.mxu0 0.0
      %v1585 = vand.u32 %v1191, 4294901760
      %1586 = vmatpush1.msra.mxu0 %v1585
      %1587 = vmatprep.subr.mxu0 0.0
      %1588 = vmatpush1.msra.mxu0 0.0
      %1589 = vmatprep.subr.mxu0 0.0
      %1590 = vmatpush1.msra.mxu0 0.0
      %1591 = vmatprep.subr.mxu0 0.0
      %1592 = vmatpush1.msra.mxu0 0.0
      %1593 = vmatprep.subr.mxu0 0.0
      %1594 = vmatpush1.msra.mxu0 0.0
      %1595 = vmatprep.subr.mxu0 0.0
      %1596 = vmatpush1.msra.mxu0 0.0
      %1597 = vmatprep.subr.mxu0 0.0
      %1598 = vmatpush1.msra.mxu0 0.0
      %1599 = vmatprep.subr.mxu0 0.0
      %1600 = vmatpush1.msra.mxu0 0.0
      %1601 = vmatprep.subr.mxu0 0.0
      %1602 = vmatpush1.msra.mxu0 0.0
      %1603 = vmatprep.subr.mxu0 0.0
      %1604 = vmatpush1.msra.mxu0 0.0
      %1605 = vmatprep.subr.mxu0 0.0
      %1606 = vmatpush1.msra.mxu0 0.0
      %1607 = vmatprep.subr.mxu0 0.0
      %1608 = vmatpush1.msra.mxu0 0.0
      %1609 = vmatprep.subr.mxu0 0.0
      %1610 = vmatpush1.msra.mxu0 0.0
      %1611 = vmatprep.subr.mxu0 0.0
      %1612 = vmatpush1.msra.mxu0 0.0
      %1613 = vmatprep.subr.mxu0 0.0
      %1614 = vmatpush1.msra.mxu0 0.0
      %1615 = vmatprep.subr.mxu0 0.0
      %1616 = vmatpush1.msra.mxu0 0.0
      %1617 = vmatprep.subr.mxu0 0.0
      %1618 = vmatpush1.msra.mxu0 0.0
      %1619 = vmatprep.subr.mxu0 0.0
      %1620 = vmatpush1.msra.mxu0 0.0
      %1621 = vmatprep.subr.mxu0 0.0
      %1622 = vmatpush1.msra.mxu0 0.0
      %1623 = vmatprep.subr.mxu0 0.0
      %1624 = vmatpush1.msra.mxu0 0.0
      %1625 = vmatprep.subr.mxu0 0.0
      %1626 = vmatpush1.msra.mxu0 0.0
      %1627 = vmatprep.subr.mxu0 0.0
      %1628 = vmatpush1.msra.mxu0 0.0
      %1629 = vmatprep.subr.mxu0 0.0
      %1630 = vmatpush1.msra.mxu0 0.0
      %1631 = vmatprep.subr.mxu0 0.0
      %1632 = vmatpush1.msra.mxu0 0.0
      %1633 = vmatprep.subr.mxu0 0.0
      %1634 = vmatpush1.msra.mxu0 0.0
      %1635 = vmatprep.subr.mxu0 0.0
      %1636 = vmatpush1.msra.mxu0 0.0
      %1637 = vmatprep.subr.mxu0 0.0
      %1638 = vmatpush1.msra.mxu0 0.0
      %1639 = vmatprep.subr.mxu0 0.0
      %1640 = vmatpush1.msra.mxu0 0.0
      %1641 = vmatprep.subr.mxu0 0.0
      %1642 = vmatpush1.msra.mxu0 0.0
      %1643 = vmatprep.subr.mxu0 0.0
      %1644 = vmatpush1.msra.mxu0 0.0
      %1645 = vmatprep.subr.mxu0 0.0
      %1646 = vmatpush1.msra.mxu0 0.0
      %1647 = vmatprep.mubr.f32.mxu0 0.0
      %v1648 = vand.u32 %v1193, 4294901760
      %1649 = vmatmul.mubr.f32.gmra.mrb[0].mxu0 %v1648
      %v1650 = vpop.f32.mrb[0].mxu0
      %v1651 = vadd.f32 %v1578, %v1650
      %v1652 = vpop.f32.mrb[0].mxu0
      %1653 = vdwg.mxu0
      %v1654 = vadd.f32 %v1187, %v1651
      %v1655 = vmul.f32 %v1187, %v1651
      %vm1656 = vcmask 123904
      %v1657 = vsel %vm1656, %v1655, -inf
      %1658 = vmax.xlane.f32.xlu0 %v1657
      %v1659 = vpop.xlane.xlu0 %1658
      %v1660 = vsub.f32 %v1655, %v1659
      %v1661 = vmul.f32 %v1660, 1.442695
      %v1662 = vpow.pop %v1661
      %v1663 = vsel %vm1656, %v1662, 0.0
      %1664 = vadd.xlane.f32.xlu0 %v1663
      %v1665 = vpop.xlane.xlu0 %1664
      %v1666 = vrcp.pop %v1665
      %v1667 = vmul.f32 %v1665, %v1666
      %v1668 = vsub.f32 2.0, %v1667
      %v1669 = vmul.f32 %v1666, %v1668
      %v1670 = vmul.f32 %v1662, %v1669
      %1672 = vrot.lane.b32.xlu0 %v1654, 112
      %v1673 = vpop.permute.xlu0 %1672
      %v1675 = vmul.f32 %v1670, %v1673
      %v1676 = vld [vmem:[#allocation14] sm:$0xff]
      %v1677 = vld [vmem:[#allocation14 + $0x8] sm:$0xff]
      %v1679 = vsel %vm727, %v1675, 0
      %1681 = vmatprep.subr.mxu0 0.0
      %v1682 = vand.u32 %v1676, 4294901760
      %1683 = vmatpush1.msra.mxu0 %v1682
      %1684 = vmatprep.subr.mxu0 0.0
      %v1685 = vand.u32 %v1677, 4294901760
      %1686 = vmatpush1.msra.mxu0 %v1685
      %1687 = vmatprep.subr.mxu0 0.0
      %1688 = vmatpush1.msra.mxu0 0.0
      %1689 = vmatprep.subr.mxu0 0.0
      %1690 = vmatpush1.msra.mxu0 0.0
      %1691 = vmatprep.subr.mxu0 0.0
      %1692 = vmatpush1.msra.mxu0 0.0
      %1693 = vmatprep.subr.mxu0 0.0
      %1694 = vmatpush1.msra.mxu0 0.0
      %1695 = vmatprep.subr.mxu0 0.0
      %1696 = vmatpush1.msra.mxu0 0.0
      %1697 = vmatprep.subr.mxu0 0.0
      %1698 = vmatpush1.msra.mxu0 0.0
      %1699 = vmatprep.subr.mxu0 0.0
      %1700 = vmatpush1.msra.mxu0 0.0
      %1701 = vmatprep.subr.mxu0 0.0
      %1702 = vmatpush1.msra.mxu0 0.0
      %1703 = vmatprep.subr.mxu0 0.0
      %1704 = vmatpush1.msra.mxu0 0.0
      %1705 = vmatprep.subr.mxu0 0.0
      %1706 = vmatpush1.msra.mxu0 0.0
      %1707 = vmatprep.subr.mxu0 0.0
      %1708 = vmatpush1.msra.mxu0 0.0
      %1709 = vmatprep.subr.mxu0 0.0
      %1710 = vmatpush1.msra.mxu0 0.0
      %1711 = vmatprep.subr.mxu0 0.0
      %1712 = vmatpush1.msra.mxu0 0.0
      %1713 = vmatprep.subr.mxu0 0.0
      %1714 = vmatpush1.msra.mxu0 0.0
      %1715 = vmatprep.subr.mxu0 0.0
      %1716 = vmatpush1.msra.mxu0 0.0
      %1717 = vmatprep.subr.mxu0 0.0
      %1718 = vmatpush1.msra.mxu0 0.0
      %1719 = vmatprep.subr.mxu0 0.0
      %1720 = vmatpush1.msra.mxu0 0.0
      %1721 = vmatprep.subr.mxu0 0.0
      %1722 = vmatpush1.msra.mxu0 0.0
      %1723 = vmatprep.subr.mxu0 0.0
      %1724 = vmatpush1.msra.mxu0 0.0
      %1725 = vmatprep.subr.mxu0 0.0
      %1726 = vmatpush1.msra.mxu0 0.0
      %1727 = vmatprep.subr.mxu0 0.0
      %1728 = vmatpush1.msra.mxu0 0.0
      %1729 = vmatprep.subr.mxu0 0.0
      %1730 = vmatpush1.msra.mxu0 0.0
      %1731 = vmatprep.subr.mxu0 0.0
      %1732 = vmatpush1.msra.mxu0 0.0
      %1733 = vmatprep.subr.mxu0 0.0
      %1734 = vmatpush1.msra.mxu0 0.0
      %1735 = vmatprep.subr.mxu0 0.0
      %1736 = vmatpush1.msra.mxu0 0.0
      %1737 = vmatprep.subr.mxu0 0.0
      %1738 = vmatpush1.msra.mxu0 0.0
      %1739 = vmatprep.subr.mxu0 0.0
      %1740 = vmatpush1.msra.mxu0 0.0
      %1741 = vmatprep.subr.mxu0 0.0
      %1742 = vmatpush1.msra.mxu0 0.0
      %1743 = vmatprep.subr.mxu0 0.0
      %1744 = vmatpush1.msra.mxu0 0.0
      %1745 = vmatprep.subr.mxu0 0.0
      %1746 = vmatpush1.msra.mxu0 0.0
      %1747 = vmatprep.mubr.f32.mxu0 0.0
      %v1748 = vand.u32 %v1679, 4294901760
      %v1749 = vsub.f32 %v1679, %v1748
      %v1750 = vand.u32 %v1749, 4294901760
      %v1751 = vsub.f32 %v1749, %v1750
      %v1752 = vand.u32 %v1751, 4294901760
      %1753 = vmatmul.mubr.f32.gmra.mrb[0].mxu0 %v1752
      %v1754 = vpop.f32.mrb[0].mxu0
      %v1755 = vadd.f32 0.0, %v1754
      %v1756 = vpop.f32.mrb[0].mxu0
      %1757 = vdwg.mxu0
      %1758 = vmatprep.subr.mxu0 0.0
      %v1759 = vand.u32 %v1676, 4294901760
      %v1760 = vsub.f32 %v1676, %v1759
      %v1761 = vand.u32 %v1760, 4294901760
      %v1762 = vsub.f32 %v1760, %v1761
      %v1763 = vand.u32 %v1762, 4294901760
      %1764 = vmatpush1.msra.mxu0 %v1763
      %1765 = vmatprep.subr.mxu0 0.0
      %v1766 = vand.u32 %v1677, 4294901760
      %v1767 = vsub.f32 %v1677, %v1766
      %v1768 = vand.u32 %v1767, 4294901760
      %v1769 = vsub.f32 %v1767, %v1768
      %v1770 = vand.u32 %v1769, 4294901760
      %1771 = vmatpush1.msra.mxu0 %v1770
      %1772 = vmatprep.subr.mxu0 0.0
      %1773 = vmatpush1.msra.mxu0 0.0
      %1774 = vmatprep.subr.mxu0 0.0
      %1775 = vmatpush1.msra.mxu0 0.0
      %1776 = vmatprep.subr.mxu0 0.0
      %1777 = vmatpush1.msra.mxu0 0.0
      %1778 = vmatprep.subr.mxu0 0.0
      %1779 = vmatpush1.msra.mxu0 0.0
      %1780 = vmatprep.subr.mxu0 0.0
      %1781 = vmatpush1.msra.mxu0 0.0
      %1782 = vmatprep.subr.mxu0 0.0
      %1783 = vmatpush1.msra.mxu0 0.0
      %1784 = vmatprep.subr.mxu0 0.0
      %1785 = vmatpush1.msra.mxu0 0.0
      %1786 = vmatprep.subr.mxu0 0.0
      %1787 = vmatpush1.msra.mxu0 0.0
      %1788 = vmatprep.subr.mxu0 0.0
      %1789 = vmatpush1.msra.mxu0 0.0
      %1790 = vmatprep.subr.mxu0 0.0
      %1791 = vmatpush1.msra.mxu0 0.0
      %1792 = vmatprep.subr.mxu0 0.0
      %1793 = vmatpush1.msra.mxu0 0.0
      %1794 = vmatprep.subr.mxu0 0.0
      %1795 = vmatpush1.msra.mxu0 0.0
      %1796 = vmatprep.subr.mxu0 0.0
      %1797 = vmatpush1.msra.mxu0 0.0
      %1798 = vmatprep.subr.mxu0 0.0
      %1799 = vmatpush1.msra.mxu0 0.0
      %1800 = vmatprep.subr.mxu0 0.0
      %1801 = vmatpush1.msra.mxu0 0.0
      %1802 = vmatprep.subr.mxu0 0.0
      %1803 = vmatpush1.msra.mxu0 0.0
      %1804 = vmatprep.subr.mxu0 0.0
      %1805 = vmatpush1.msra.mxu0 0.0
      %1806 = vmatprep.subr.mxu0 0.0
      %1807 = vmatpush1.msra.mxu0 0.0
      %1808 = vmatprep.subr.mxu0 0.0
      %1809 = vmatpush1.msra.mxu0 0.0
      %1810 = vmatprep.subr.mxu0 0.0
      %1811 = vmatpush1.msra.mxu0 0.0
      %1812 = vmatprep.subr.mxu0 0.0
      %1813 = vmatpush1.msra.mxu0 0.0
      %1814 = vmatprep.subr.mxu0 0.0
      %1815 = vmatpush1.msra.mxu0 0.0
      %1816 = vmatprep.subr.mxu0 0.0
      %1817 = vmatpush1.msra.mxu0 0.0
      %1818 = vmatprep.subr.mxu0 0.0
      %1819 = vmatpush1.msra.mxu0 0.0
      %1820 = vmatprep.subr.mxu0 0.0
      %1821 = vmatpush1.msra.mxu0 0.0
      %1822 = vmatprep.subr.mxu0 0.0
      %1823 = vmatpush1.msra.mxu0 0.0
      %1824 = vmatprep.subr.mxu0 0.0
      %1825 = vmatpush1.msra.mxu0 0.0
      %1826 = vmatprep.subr.mxu0 0.0
      %1827 = vmatpush1.msra.mxu0 0.0
      %1828 = vmatprep.subr.mxu0 0.0
      %1829 = vmatpush1.msra.mxu0 0.0
      %1830 = vmatprep.subr.mxu0 0.0
      %1831 = vmatpush1.msra.mxu0 0.0
      %1832 = vmatprep.mubr.f32.mxu0 0.0
      %v1833 = vand.u32 %v1679, 4294901760
      %1834 = vmatmul.mubr.f32.gmra.mrb[0].mxu0 %v1833
      %v1835 = vpop.f32.mrb[0].mxu0
      %v1836 = vadd.f32 %v1755, %v1835
      %v1837 = vpop.f32.mrb[0].mxu0
      %1838 = vdwg.mxu0
      %1839 = vmatprep.subr.mxu0 0.0
      %v1840 = vand.u32 %v1676, 4294901760
      %v1841 = vsub.f32 %v1676, %v1840
      %1842 = vmatpush1.msra.mxu0 %v1841
      %1843 = vmatprep.subr.mxu0 0.0
      %v1844 = vand.u32 %v1677, 4294901760
      %v1845 = vsub.f32 %v1677, %v1844
      %1846 = vmatpush1.msra.mxu0 %v1845
      %1847 = vmatprep.subr.mxu0 0.0
      %1848 = vmatpush1.msra.mxu0 0.0
      %1849 = vmatprep.subr.mxu0 0.0
      %1850 = vmatpush1.msra.mxu0 0.0
      %1851 = vmatprep.subr.mxu0 0.0
      %1852 = vmatpush1.msra.mxu0 0.0
      %1853 = vmatprep.subr.mxu0 0.0
      %1854 = vmatpush1.msra.mxu0 0.0
      %1855 = vmatprep.subr.mxu0 0.0
      %1856 = vmatpush1.msra.mxu0 0.0
      %1857 = vmatprep.subr.mxu0 0.0
      %1858 = vmatpush1.msra.mxu0 0.0
      %1859 = vmatprep.subr.mxu0 0.0
      %1860 = vmatpush1.msra.mxu0 0.0
      %1861 = vmatprep.subr.mxu0 0.0
      %1862 = vmatpush1.msra.mxu0 0.0
      %1863 = vmatprep.subr.mxu0 0.0
      %1864 = vmatpush1.msra.mxu0 0.0
      %1865 = vmatprep.subr.mxu0 0.0
      %1866 = vmatpush1.msra.mxu0 0.0
      %1867 = vmatprep.subr.mxu0 0.0
      %1868 = vmatpush1.msra.mxu0 0.0
      %1869 = vmatprep.subr.mxu0 0.0
      %1870 = vmatpush1.msra.mxu0 0.0
      %1871 = vmatprep.subr.mxu0 0.0
      %1872 = vmatpush1.msra.mxu0 0.0
      %1873 = vmatprep.subr.mxu0 0.0
      %1874 = vmatpush1.msra.mxu0 0.0
      %1875 = vmatprep.subr.mxu0 0.0
      %1876 = vmatpush1.msra.mxu0 0.0
      %1877 = vmatprep.subr.mxu0 0.0
      %1878 = vmatpush1.msra.mxu0 0.0
      %1879 = vmatprep.subr.mxu0 0.0
      %1880 = vmatpush1.msra.mxu0 0.0
      %1881 = vmatprep.subr.mxu0 0.0
      %1882 = vmatpush1.msra.mxu0 0.0
      %1883 = vmatprep.subr.mxu0 0.0
      %1884 = vmatpush1.msra.mxu0 0.0
      %1885 = vmatprep.subr.mxu0 0.0
      %1886 = vmatpush1.msra.mxu0 0.0
      %1887 = vmatprep.subr.mxu0 0.0
      %1888 = vmatpush1.msra.mxu0 0.0
      %1889 = vmatprep.subr.mxu0 0.0
      %1890 = vmatpush1.msra.mxu0 0.0
      %1891 = vmatprep.subr.mxu0 0.0
      %1892 = vmatpush1.msra.mxu0 0.0
      %1893 = vmatprep.subr.mxu0 0.0
      %1894 = vmatpush1.msra.mxu0 0.0
      %1895 = vmatprep.subr.mxu0 0.0
      %1896 = vmatpush1.msra.mxu0 0.0
      %1897 = vmatprep.subr.mxu0 0.0
      %1898 = vmatpush1.msra.mxu0 0.0
      %1899 = vmatprep.subr.mxu0 0.0
      %1900 = vmatpush1.msra.mxu0 0.0
      %1901 = vmatprep.subr.mxu0 0.0
      %1902 = vmatpush1.msra.mxu0 0.0
      %1903 = vmatprep.subr.mxu0 0.0
      %1904 = vmatpush1.msra.mxu0 0.0
      %1905 = vmatprep.subr.mxu0 0.0
      %1906 = vmatpush1.msra.mxu0 0.0
      %1907 = vmatprep.mubr.f32.mxu0 0.0
      %v1908 = vand.u32 %v1679, 4294901760
      %v1909 = vsub.f32 %v1679, %v1908
      %1910 = vmatmul.mubr.f32.gmra.mrb[0].mxu0 %v1909
      %v1911 = vpop.f32.mrb[0].mxu0
      %v1912 = vadd.f32 %v1836, %v1911
      %v1913 = vpop.f32.mrb[0].mxu0
      %1914 = vdwg.mxu0
      %1915 = vmatprep.subr.mxu0 0.0
      %v1916 = vand.u32 %v1676, 4294901760
      %1917 = vmatpush1.msra.mxu0 %v1916
      %1918 = vmatprep.subr.mxu0 0.0
      %v1919 = vand.u32 %v1677, 4294901760
      %1920 = vmatpush1.msra.mxu0 %v1919
      %1921 = vmatprep.subr.mxu0 0.0
      %1922 = vmatpush1.msra.mxu0 0.0
      %1923 = vmatprep.subr.mxu0 0.0
      %1924 = vmatpush1.msra.mxu0 0.0
      %1925 = vmatprep.subr.mxu0 0.0
      %1926 = vmatpush1.msra.mxu0 0.0
      %1927 = vmatprep.subr.mxu0 0.0
      %1928 = vmatpush1.msra.mxu0 0.0
      %1929 = vmatprep.subr.mxu0 0.0
      %1930 = vmatpush1.msra.mxu0 0.0
      %1931 = vmatprep.subr.mxu0 0.0
      %1932 = vmatpush1.msra.mxu0 0.0
      %1933 = vmatprep.subr.mxu0 0.0
      %1934 = vmatpush1.msra.mxu0 0.0
      %1935 = vmatprep.subr.mxu0 0.0
      %1936 = vmatpush1.msra.mxu0 0.0
      %1937 = vmatprep.subr.mxu0 0.0
      %1938 = vmatpush1.msra.mxu0 0.0
      %1939 = vmatprep.subr.mxu0 0.0
      %1940 = vmatpush1.msra.mxu0 0.0
      %1941 = vmatprep.subr.mxu0 0.0
      %1942 = vmatpush1.msra.mxu0 0.0
      %1943 = vmatprep.subr.mxu0 0.0
      %1944 = vmatpush1.msra.mxu0 0.0
      %1945 = vmatprep.subr.mxu0 0.0
      %1946 = vmatpush1.msra.mxu0 0.0
      %1947 = vmatprep.subr.mxu0 0.0
      %1948 = vmatpush1.msra.mxu0 0.0
      %1949 = vmatprep.subr.mxu0 0.0
      %1950 = vmatpush1.msra.mxu0 0.0
      %1951 = vmatprep.subr.mxu0 0.0
      %1952 = vmatpush1.msra.mxu0 0.0
      %1953 = vmatprep.subr.mxu0 0.0
      %1954 = vmatpush1.msra.mxu0 0.0
      %1955 = vmatprep.subr.mxu0 0.0
      %1956 = vmatpush1.msra.mxu0 0.0
      %1957 = vmatprep.subr.mxu0 0.0
      %1958 = vmatpush1.msra.mxu0 0.0
      %1959 = vmatprep.subr.mxu0 0.0
      %1960 = vmatpush1.msra.mxu0 0.0
      %1961 = vmatprep.subr.mxu0 0.0
      %1962 = vmatpush1.msra.mxu0 0.0
      %1963 = vmatprep.subr.mxu0 0.0
      %1964 = vmatpush1.msra.mxu0 0.0
      %1965 = vmatprep.subr.mxu0 0.0
      %1966 = vmatpush1.msra.mxu0 0.0
      %1967 = vmatprep.subr.mxu0 0.0
      %1968 = vmatpush1.msra.mxu0 0.0
      %1969 = vmatprep.subr.mxu0 0.0
      %1970 = vmatpush1.msra.mxu0 0.0
      %1971 = vmatprep.subr.mxu0 0.0
      %1972 = vmatpush1.msra.mxu0 0.0
      %1973 = vmatprep.subr.mxu0 0.0
      %1974 = vmatpush1.msra.mxu0 0.0
      %1975 = vmatprep.subr.mxu0 0.0
      %1976 = vmatpush1.msra.mxu0 0.0
      %1977 = vmatprep.subr.mxu0 0.0
      %1978 = vmatpush1.msra.mxu0 0.0
      %1979 = vmatprep.subr.mxu0 0.0
      %1980 = vmatpush1.msra.mxu0 0.0
      %1981 = vmatprep.mubr.f32.mxu0 0.0
      %v1982 = vand.u32 %v1679, 4294901760
      %v1983 = vsub.f32 %v1679, %v1982
      %v1984 = vand.u32 %v1983, 4294901760
      %1985 = vmatmul.mubr.f32.gmra.mrb[0].mxu0 %v1984
      %v1986 = vpop.f32.mrb[0].mxu0
      %v1987 = vadd.f32 %v1912, %v1986
      %v1988 = vpop.f32.mrb[0].mxu0
      %1989 = vdwg.mxu0
      %1990 = vmatprep.subr.mxu0 0.0
      %v1991 = vand.u32 %v1676, 4294901760
      %v1992 = vsub.f32 %v1676, %v1991
      %v1993 = vand.u32 %v1992, 4294901760
      %1994 = vmatpush1.msra.mxu0 %v1993
      %1995 = vmatprep.subr.mxu0 0.0
      %v1996 = vand.u32 %v1677, 4294901760
      %v1997 = vsub.f32 %v1677, %v1996
      %v1998 = vand.u32 %v1997, 4294901760
      %1999 = vmatpush1.msra.mxu0 %v1998
      %2000 = vmatprep.subr.mxu0 0.0
      %2001 = vmatpush1.msra.mxu0 0.0
      %2002 = vmatprep.subr.mxu0 0.0
      %2003 = vmatpush1.msra.mxu0 0.0
      %2004 = vmatprep.subr.mxu0 0.0
      %2005 = vmatpush1.msra.mxu0 0.0
      %2006 = vmatprep.subr.mxu0 0.0
      %2007 = vmatpush1.msra.mxu0 0.0
      %2008 = vmatprep.subr.mxu0 0.0
      %2009 = vmatpush1.msra.mxu0 0.0
      %2010 = vmatprep.subr.mxu0 0.0
      %2011 = vmatpush1.msra.mxu0 0.0
      %2012 = vmatprep.subr.mxu0 0.0
      %2013 = vmatpush1.msra.mxu0 0.0
      %2014 = vmatprep.subr.mxu0 0.0
      %2015 = vmatpush1.msra.mxu0 0.0
      %2016 = vmatprep.subr.mxu0 0.0
      %2017 = vmatpush1.msra.mxu0 0.0
      %2018 = vmatprep.subr.mxu0 0.0
      %2019 = vmatpush1.msra.mxu0 0.0
      %2020 = vmatprep.subr.mxu0 0.0
      %2021 = vmatpush1.msra.mxu0 0.0
      %2022 = vmatprep.subr.mxu0 0.0
      %2023 = vmatpush1.msra.mxu0 0.0
      %2024 = vmatprep.subr.mxu0 0.0
      %2025 = vmatpush1.msra.mxu0 0.0
      %2026 = vmatprep.subr.mxu0 0.0
      %2027 = vmatpush1.msra.mxu0 0.0
      %2028 = vmatprep.subr.mxu0 0.0
      %2029 = vmatpush1.msra.mxu0 0.0
      %2030 = vmatprep.subr.mxu0 0.0
      %2031 = vmatpush1.msra.mxu0 0.0
      %2032 = vmatprep.subr.mxu0 0.0
      %2033 = vmatpush1.msra.mxu0 0.0
      %2034 = vmatprep.subr.mxu0 0.0
      %2035 = vmatpush1.msra.mxu0 0.0
      %2036 = vmatprep.subr.mxu0 0.0
      %2037 = vmatpush1.msra.mxu0 0.0
      %2038 = vmatprep.subr.mxu0 0.0
      %2039 = vmatpush1.msra.mxu0 0.0
      %2040 = vmatprep.subr.mxu0 0.0
      %2041 = vmatpush1.msra.mxu0 0.0
      %2042 = vmatprep.subr.mxu0 0.0
      %2043 = vmatpush1.msra.mxu0 0.0
      %2044 = vmatprep.subr.mxu0 0.0
      %2045 = vmatpush1.msra.mxu0 0.0
      %2046 = vmatprep.subr.mxu0 0.0
      %2047 = vmatpush1.msra.mxu0 0.0
      %2048 = vmatprep.subr.mxu0 0.0
      %2049 = vmatpush1.msra.mxu0 0.0
      %2050 = vmatprep.subr.mxu0 0.0
      %2051 = vmatpush1.msra.mxu0 0.0
      %2052 = vmatprep.subr.mxu0 0.0
      %2053 = vmatpush1.msra.mxu0 0.0
      %2054 = vmatprep.subr.mxu0 0.0
      %2055 = vmatpush1.msra.mxu0 0.0
      %2056 = vmatprep.subr.mxu0 0.0
      %2057 = vmatpush1.msra.mxu0 0.0
      %2058 = vmatprep.subr.mxu0 0.0
      %2059 = vmatpush1.msra.mxu0 0.0
      %2060 = vmatprep.mubr.f32.mxu0 0.0
      %v2061 = vand.u32 %v1679, 4294901760
      %2062 = vmatmul.mubr.f32.gmra.mrb[0].mxu0 %v2061
      %v2063 = vpop.f32.mrb[0].mxu0
      %v2064 = vadd.f32 %v1987, %v2063
      %v2065 = vpop.f32.mrb[0].mxu0
      %2066 = vdwg.mxu0
      %2067 = vmatprep.subr.mxu0 0.0
      %v2068 = vand.u32 %v1676, 4294901760
      %2069 = vmatpush1.msra.mxu0 %v2068
      %2070 = vmatprep.subr.mxu0 0.0
      %v2071 = vand.u32 %v1677, 4294901760
      %2072 = vmatpush1.msra.mxu0 %v2071
      %2073 = vmatprep.subr.mxu0 0.0
      %2074 = vmatpush1.msra.mxu0 0.0
      %2075 = vmatprep.subr.mxu0 0.0
      %2076 = vmatpush1.msra.mxu0 0.0
      %2077 = vmatprep.subr.mxu0 0.0
      %2078 = vmatpush1.msra.mxu0 0.0
      %2079 = vmatprep.subr.mxu0 0.0
      %2080 = vmatpush1.msra.mxu0 0.0
      %2081 = vmatprep.subr.mxu0 0.0
      %2082 = vmatpush1.msra.mxu0 0.0
      %2083 = vmatprep.subr.mxu0 0.0
      %2084 = vmatpush1.msra.mxu0 0.0
      %2085 = vmatprep.subr.mxu0 0.0
      %2086 = vmatpush1.msra.mxu0 0.0
      %2087 = vmatprep.subr.mxu0 0.0
      %2088 = vmatpush1.msra.mxu0 0.0
      %2089 = vmatprep.subr.mxu0 0.0
      %2090 = vmatpush1.msra.mxu0 0.0
      %2091 = vmatprep.subr.mxu0 0.0
      %2092 = vmatpush1.msra.mxu0 0.0
      %2093 = vmatprep.subr.mxu0 0.0
      %2094 = vmatpush1.msra.mxu0 0.0
      %2095 = vmatprep.subr.mxu0 0.0
      %2096 = vmatpush1.msra.mxu0 0.0
      %2097 = vmatprep.subr.mxu0 0.0
      %2098 = vmatpush1.msra.mxu0 0.0
      %2099 = vmatprep.subr.mxu0 0.0
      %2100 = vmatpush1.msra.mxu0 0.0
      %2101 = vmatprep.subr.mxu0 0.0
      %2102 = vmatpush1.msra.mxu0 0.0
      %2103 = vmatprep.subr.mxu0 0.0
      %2104 = vmatpush1.msra.mxu0 0.0
      %2105 = vmatprep.subr.mxu0 0.0
      %2106 = vmatpush1.msra.mxu0 0.0
      %2107 = vmatprep.subr.mxu0 0.0
      %2108 = vmatpush1.msra.mxu0 0.0
      %2109 = vmatprep.subr.mxu0 0.0
      %2110 = vmatpush1.msra.mxu0 0.0
      %2111 = vmatprep.subr.mxu0 0.0
      %2112 = vmatpush1.msra.mxu0 0.0
      %2113 = vmatprep.subr.mxu0 0.0
      %2114 = vmatpush1.msra.mxu0 0.0
      %2115 = vmatprep.subr.mxu0 0.0
      %2116 = vmatpush1.msra.mxu0 0.0
      %2117 = vmatprep.subr.mxu0 0.0
      %2118 = vmatpush1.msra.mxu0 0.0
      %2119 = vmatprep.subr.mxu0 0.0
      %2120 = vmatpush1.msra.mxu0 0.0
      %2121 = vmatprep.subr.mxu0 0.0
      %2122 = vmatpush1.msra.mxu0 0.0
      %2123 = vmatprep.subr.mxu0 0.0
      %2124 = vmatpush1.msra.mxu0 0.0
      %2125 = vmatprep.subr.mxu0 0.0
      %2126 = vmatpush1.msra.mxu0 0.0
      %2127 = vmatprep.subr.mxu0 0.0
      %2128 = vmatpush1.msra.mxu0 0.0
      %2129 = vmatprep.subr.mxu0 0.0
      %2130 = vmatpush1.msra.mxu0 0.0
      %2131 = vmatprep.subr.mxu0 0.0
      %2132 = vmatpush1.msra.mxu0 0.0
      %2133 = vmatprep.mubr.f32.mxu0 0.0
      %v2134 = vand.u32 %v1679, 4294901760
      %2135 = vmatmul.mubr.f32.gmra.mrb[0].mxu0 %v2134
      %v2136 = vpop.f32.mrb[0].mxu0
      %v2137 = vadd.f32 %v2064, %v2136
      %v2138 = vpop.f32.mrb[0].mxu0
      %2139 = vdwg.mxu0
      %v2140 = vsel %vm1656, %v2137, 0.0
      %v2141 = vrot.slane %v2140, 4
      %v2142 = vadd.f32 %v2140, %v2141
      %v2143 = vrot.slane %v2142, 2
      %v2144 = vadd.f32 %v2142, %v2143
      %v2145 = vrot.slane %v2144, 1
      %v2146 = vadd.f32 %v2144, %v2145
      %v2147 = vrcp.pop 2.0
      %v2148 = vmul.f32 %v2146, %v2147
      %v2149 = vsub.f32 %v2137, %v2148
      %v2150 = vmul.f32 %v2149, %v2149
      %v2151 = vsel %vm1656, %v2150, 0.0
      %v2152 = vrot.slane %v2151, 4
      %v2153 = vadd.f32 %v2151, %v2152
      %v2154 = vrot.slane %v2153, 2
      %v2155 = vadd.f32 %v2153, %v2154
      %v2156 = vrot.slane %v2155, 1
      %v2157 = vadd.f32 %v2155, %v2156
      %v2158 = vmul.f32 %v2157, %v2147
      %v2159 = vadd.f32 %v2158, 1e-05
      %v2160 = vrsqrt.pop %v2159
      %v2161 = vmul.f32 %v2149, %v2160
      %v2162 = vld [vmem:[%s5] sm:$0x1]
      %v2164 = vlaneseq
      %v2165 = vshrl.u32 %v2164, 7
      %v2166 = vsub.s32 0, %v2165
      %v2167 = vrot.slane %v2162, %v2166
      %v2169 = vmul.f32 %v2161, %v2167
      %v2170 = vld [vmem:[%s6] sm:$0x1]
      %v2172 = vlaneseq
      %v2173 = vshrl.u32 %v2172, 7
      %v2174 = vsub.s32 0, %v2173
      %v2175 = vrot.slane %v2170, %v2174
      %v2177 = vadd.f32 %v2169, %v2175
      %v2178 = vmax.f32 %v2177, 0.0
      %v2179 = vld [vmem:[%s7] sm:$0xff]
      %v2180 = vld [vmem:[%s7 + $0x8] sm:$0xff]
      %v2181 = vld [vmem:[%s8] sm:$0x1]
      %v2183 = vlaneseq
      %v2184 = vshrl.u32 %v2183, 7
      %v2185 = vsub.s32 0, %v2184
      %v2186 = vrot.slane %v2181, %v2185
      %v2189 = vsel %vm727, %v2178, 0
      %2191 = vmatprep.subr.mxu0 0.0
      %v2192 = vand.u32 %v2179, 4294901760
      %2193 = vmatpush1.msra.mxu0 %v2192
      %2194 = vmatprep.subr.mxu0 0.0
      %v2195 = vand.u32 %v2180, 4294901760
      %2196 = vmatpush1.msra.mxu0 %v2195
      %2197 = vmatprep.subr.mxu0 0.0
      %2198 = vmatpush1.msra.mxu0 0.0
      %2199 = vmatprep.subr.mxu0 0.0
      %2200 = vmatpush1.msra.mxu0 0.0
      %2201 = vmatprep.subr.mxu0 0.0
      %2202 = vmatpush1.msra.mxu0 0.0
      %2203 = vmatprep.subr.mxu0 0.0
      %2204 = vmatpush1.msra.mxu0 0.0
      %2205 = vmatprep.subr.mxu0 0.0
      %2206 = vmatpush1.msra.mxu0 0.0
      %2207 = vmatprep.subr.mxu0 0.0
      %2208 = vmatpush1.msra.mxu0 0.0
      %2209 = vmatprep.subr.mxu0 0.0
      %2210 = vmatpush1.msra.mxu0 0.0
      %2211 = vmatprep.subr.mxu0 0.0
      %2212 = vmatpush1.msra.mxu0 0.0
      %2213 = vmatprep.subr.mxu0 0.0
      %2214 = vmatpush1.msra.mxu0 0.0
      %2215 = vmatprep.subr.mxu0 0.0
      %2216 = vmatpush1.msra.mxu0 0.0
      %2217 = vmatprep.subr.mxu0 0.0
      %2218 = vmatpush1.msra.mxu0 0.0
      %2219 = vmatprep.subr.mxu0 0.0
      %2220 = vmatpush1.msra.mxu0 0.0
      %2221 = vmatprep.subr.mxu0 0.0
      %2222 = vmatpush1.msra.mxu0 0.0
      %2223 = vmatprep.subr.mxu0 0.0
      %2224 = vmatpush1.msra.mxu0 0.0
      %2225 = vmatprep.subr.mxu0 0.0
      %2226 = vmatpush1.msra.mxu0 0.0
      %2227 = vmatprep.subr.mxu0 0.0
      %2228 = vmatpush1.msra.mxu0 0.0
      %2229 = vmatprep.subr.mxu0 0.0
      %2230 = vmatpush1.msra.mxu0 0.0
      %2231 = vmatprep.subr.mxu0 0.0
      %2232 = vmatpush1.msra.mxu0 0.0
      %2233 = vmatprep.subr.mxu0 0.0
      %2234 = vmatpush1.msra.mxu0 0.0
      %2235 = vmatprep.subr.mxu0 0.0
      %2236 = vmatpush1.msra.mxu0 0.0
      %2237 = vmatprep.subr.mxu0 0.0
      %2238 = vmatpush1.msra.mxu0 0.0
      %2239 = vmatprep.subr.mxu0 0.0
      %2240 = vmatpush1.msra.mxu0 0.0
      %2241 = vmatprep.subr.mxu0 0.0
      %2242 = vmatpush1.msra.mxu0 0.0
      %2243 = vmatprep.subr.mxu0 0.0
      %2244 = vmatpush1.msra.mxu0 0.0
      %2245 = vmatprep.subr.mxu0 0.0
      %2246 = vmatpush1.msra.mxu0 0.0
      %2247 = vmatprep.subr.mxu0 0.0
      %2248 = vmatpush1.msra.mxu0 0.0
      %2249 = vmatprep.subr.mxu0 0.0
      %2250 = vmatpush1.msra.mxu0 0.0
      %2251 = vmatprep.subr.mxu0 0.0
      %2252 = vmatpush1.msra.mxu0 0.0
      %2253 = vmatprep.subr.mxu0 0.0
      %2254 = vmatpush1.msra.mxu0 0.0
      %2255 = vmatprep.subr.mxu0 0.0
      %2256 = vmatpush1.msra.mxu0 0.0
      %2257 = vmatprep.mubr.f32.mxu0 0.0
      %v2258 = vand.u32 %v2189, 4294901760
      %v2259 = vsub.f32 %v2189, %v2258
      %v2260 = vand.u32 %v2259, 4294901760
      %v2261 = vsub.f32 %v2259, %v2260
      %v2262 = vand.u32 %v2261, 4294901760
      %2263 = vmatmul.mubr.f32.gmra.mrb[0].mxu0 %v2262
      %v2264 = vpop.f32.mrb[0].mxu0
      %v2265 = vadd.f32 %v2186, %v2264
      %v2266 = vpop.f32.mrb[0].mxu0
      %2267 = vdwg.mxu0
      %2268 = vmatprep.subr.mxu0 0.0
      %v2269 = vand.u32 %v2179, 4294901760
      %v2270 = vsub.f32 %v2179, %v2269
      %v2271 = vand.u32 %v2270, 4294901760
      %v2272 = vsub.f32 %v2270, %v2271
      %v2273 = vand.u32 %v2272, 4294901760
      %2274 = vmatpush1.msra.mxu0 %v2273
      %2275 = vmatprep.subr.mxu0 0.0
      %v2276 = vand.u32 %v2180, 4294901760
      %v2277 = vsub.f32 %v2180, %v2276
      %v2278 = vand.u32 %v2277, 4294901760
      %v2279 = vsub.f32 %v2277, %v2278
      %v2280 = vand.u32 %v2279, 4294901760
      %2281 = vmatpush1.msra.mxu0 %v2280
      %2282 = vmatprep.subr.mxu0 0.0
      %2283 = vmatpush1.msra.mxu0 0.0
      %2284 = vmatprep.subr.mxu0 0.0
      %2285 = vmatpush1.msra.mxu0 0.0
      %2286 = vmatprep.subr.mxu0 0.0
      %2287 = vmatpush1.msra.mxu0 0.0
      %2288 = vmatprep.subr.mxu0 0.0
      %2289 = vmatpush1.msra.mxu0 0.0
      %2290 = vmatprep.subr.mxu0 0.0
      %2291 = vmatpush1.msra.mxu0 0.0
      %2292 = vmatprep.subr.mxu0 0.0
      %2293 = vmatpush1.msra.mxu0 0.0
      %2294 = vmatprep.subr.mxu0 0.0
      %2295 = vmatpush1.msra.mxu0 0.0
      %2296 = vmatprep.subr.mxu0 0.0
      %2297 = vmatpush1.msra.mxu0 0.0
      %2298 = vmatprep.subr.mxu0 0.0
      %2299 = vmatpush1.msra.mxu0 0.0
      %2300 = vmatprep.subr.mxu0 0.0
      %2301 = vmatpush1.msra.mxu0 0.0
      %2302 = vmatprep.subr.mxu0 0.0
      %2303 = vmatpush1.msra.mxu0 0.0
      %2304 = vmatprep.subr.mxu0 0.0
      %2305 = vmatpush1.msra.mxu0 0.0
      %2306 = vmatprep.subr.mxu0 0.0
      %2307 = vmatpush1.msra.mxu0 0.0
      %2308 = vmatprep.subr.mxu0 0.0
      %2309 = vmatpush1.msra.mxu0 0.0
      %2310 = vmatprep.subr.mxu0 0.0
      %2311 = vmatpush1.msra.mxu0 0.0
      %2312 = vmatprep.subr.mxu0 0.0
      %2313 = vmatpush1.msra.mxu0 0.0
      %2314 = vmatprep.subr.mxu0 0.0
      %2315 = vmatpush1.msra.mxu0 0.0
      %2316 = vmatprep.subr.mxu0 0.0
      %2317 = vmatpush1.msra.mxu0 0.0
      %2318 = vmatprep.subr.mxu0 0.0
      %2319 = vmatpush1.msra.mxu0 0.0
      %2320 = vmatprep.subr.mxu0 0.0
      %2321 = vmatpush1.msra.mxu0 0.0
      %2322 = vmatprep.subr.mxu0 0.0
      %2323 = vmatpush1.msra.mxu0 0.0
      %2324 = vmatprep.subr.mxu0 0.0
      %2325 = vmatpush1.msra.mxu0 0.0
      %2326 = vmatprep.subr.mxu0 0.0
      %2327 = vmatpush1.msra.mxu0 0.0
      %2328 = vmatprep.subr.mxu0 0.0
      %2329 = vmatpush1.msra.mxu0 0.0
      %2330 = vmatprep.subr.mxu0 0.0
      %2331 = vmatpush1.msra.mxu0 0.0
      %2332 = vmatprep.subr.mxu0 0.0
      %2333 = vmatpush1.msra.mxu0 0.0
      %2334 = vmatprep.subr.mxu0 0.0
      %2335 = vmatpush1.msra.mxu0 0.0
      %2336 = vmatprep.subr.mxu0 0.0
      %2337 = vmatpush1.msra.mxu0 0.0
      %2338 = vmatprep.subr.mxu0 0.0
      %2339 = vmatpush1.msra.mxu0 0.0
      %2340 = vmatprep.subr.mxu0 0.0
      %2341 = vmatpush1.msra.mxu0 0.0
      %2342 = vmatprep.mubr.f32.mxu0 0.0
      %v2343 = vand.u32 %v2189, 4294901760
      %2344 = vmatmul.mubr.f32.gmra.mrb[0].mxu0 %v2343
      %v2345 = vpop.f32.mrb[0].mxu0
      %v2346 = vadd.f32 %v2265, %v2345
      %v2347 = vpop.f32.mrb[0].mxu0
      %2348 = vdwg.mxu0
      %2349 = vmatprep.subr.mxu0 0.0
      %v2350 = vand.u32 %v2179, 4294901760
      %v2351 = vsub.f32 %v2179, %v2350
      %2352 = vmatpush1.msra.mxu0 %v2351
      %2353 = vmatprep.subr.mxu0 0.0
      %v2354 = vand.u32 %v2180, 4294901760
      %v2355 = vsub.f32 %v2180, %v2354
      %2356 = vmatpush1.msra.mxu0 %v2355
      %2357 = vmatprep.subr.mxu0 0.0
      %2358 = vmatpush1.msra.mxu0 0.0
      %2359 = vmatprep.subr.mxu0 0.0
      %2360 = vmatpush1.msra.mxu0 0.0
      %2361 = vmatprep.subr.mxu0 0.0
      %2362 = vmatpush1.msra.mxu0 0.0
      %2363 = vmatprep.subr.mxu0 0.0
      %2364 = vmatpush1.msra.mxu0 0.0
      %2365 = vmatprep.subr.mxu0 0.0
      %2366 = vmatpush1.msra.mxu0 0.0
      %2367 = vmatprep.subr.mxu0 0.0
      %2368 = vmatpush1.msra.mxu0 0.0
      %2369 = vmatprep.subr.mxu0 0.0
      %2370 = vmatpush1.msra.mxu0 0.0
      %2371 = vmatprep.subr.mxu0 0.0
      %2372 = vmatpush1.msra.mxu0 0.0
      %2373 = vmatprep.subr.mxu0 0.0
      %2374 = vmatpush1.msra.mxu0 0.0
      %2375 = vmatprep.subr.mxu0 0.0
      %2376 = vmatpush1.msra.mxu0 0.0
      %2377 = vmatprep.subr.mxu0 0.0
      %2378 = vmatpush1.msra.mxu0 0.0
      %2379 = vmatprep.subr.mxu0 0.0
      %2380 = vmatpush1.msra.mxu0 0.0
      %2381 = vmatprep.subr.mxu0 0.0
      %2382 = vmatpush1.msra.mxu0 0.0
      %2383 = vmatprep.subr.mxu0 0.0
      %2384 = vmatpush1.msra.mxu0 0.0
      %2385 = vmatprep.subr.mxu0 0.0
      %2386 = vmatpush1.msra.mxu0 0.0
      %2387 = vmatprep.subr.mxu0 0.0
      %2388 = vmatpush1.msra.mxu0 0.0
      %2389 = vmatprep.subr.mxu0 0.0
      %2390 = vmatpush1.msra.mxu0 0.0
      %2391 = vmatprep.subr.mxu0 0.0
      %2392 = vmatpush1.msra.mxu0 0.0
      %2393 = vmatprep.subr.mxu0 0.0
      %2394 = vmatpush1.msra.mxu0 0.0
      %2395 = vmatprep.subr.mxu0 0.0
      %2396 = vmatpush1.msra.mxu0 0.0
      %2397 = vmatprep.subr.mxu0 0.0
      %2398 = vmatpush1.msra.mxu0 0.0
      %2399 = vmatprep.subr.mxu0 0.0
      %2400 = vmatpush1.msra.mxu0 0.0
      %2401 = vmatprep.subr.mxu0 0.0
      %2402 = vmatpush1.msra.mxu0 0.0
      %2403 = vmatprep.subr.mxu0 0.0
      %2404 = vmatpush1.msra.mxu0 0.0
      %2405 = vmatprep.subr.mxu0 0.0
      %2406 = vmatpush1.msra.mxu0 0.0
      %2407 = vmatprep.subr.mxu0 0.0
      %2408 = vmatpush1.msra.mxu0 0.0
      %2409 = vmatprep.subr.mxu0 0.0
      %2410 = vmatpush1.msra.mxu0 0.0
      %2411 = vmatprep.subr.mxu0 0.0
      %2412 = vmatpush1.msra.mxu0 0.0
      %2413 = vmatprep.subr.mxu0 0.0
      %2414 = vmatpush1.msra.mxu0 0.0
      %2415 = vmatprep.subr.mxu0 0.0
      %2416 = vmatpush1.msra.mxu0 0.0
      %2417 = vmatprep.mubr.f32.mxu0 0.0
      %v2418 = vand.u32 %v2189, 4294901760
      %v2419 = vsub.f32 %v2189, %v2418
      %2420 = vmatmul.mubr.f32.gmra.mrb[0].mxu0 %v2419
      %v2421 = vpop.f32.mrb[0].mxu0
      %v2422 = vadd.f32 %v2346, %v2421
      %v2423 = vpop.f32.mrb[0].mxu0
      %2424 = vdwg.mxu0
      %2425 = vmatprep.subr.mxu0 0.0
      %v2426 = vand.u32 %v2179, 4294901760
      %2427 = vmatpush1.msra.mxu0 %v2426
      %2428 = vmatprep.subr.mxu0 0.0
      %v2429 = vand.u32 %v2180, 4294901760
      %2430 = vmatpush1.msra.mxu0 %v2429
      %2431 = vmatprep.subr.mxu0 0.0
      %2432 = vmatpush1.msra.mxu0 0.0
      %2433 = vmatprep.subr.mxu0 0.0
      %2434 = vmatpush1.msra.mxu0 0.0
      %2435 = vmatprep.subr.mxu0 0.0
      %2436 = vmatpush1.msra.mxu0 0.0
      %2437 = vmatprep.subr.mxu0 0.0
      %2438 = vmatpush1.msra.mxu0 0.0
      %2439 = vmatprep.subr.mxu0 0.0
      %2440 = vmatpush1.msra.mxu0 0.0
      %2441 = vmatprep.subr.mxu0 0.0
      %2442 = vmatpush1.msra.mxu0 0.0
      %2443 = vmatprep.subr.mxu0 0.0
      %2444 = vmatpush1.msra.mxu0 0.0
      %2445 = vmatprep.subr.mxu0 0.0
      %2446 = vmatpush1.msra.mxu0 0.0
      %2447 = vmatprep.subr.mxu0 0.0
      %2448 = vmatpush1.msra.mxu0 0.0
      %2449 = vmatprep.subr.mxu0 0.0
      %2450 = vmatpush1.msra.mxu0 0.0
      %2451 = vmatprep.subr.mxu0 0.0
      %2452 = vmatpush1.msra.mxu0 0.0
      %2453 = vmatprep.subr.mxu0 0.0
      %2454 = vmatpush1.msra.mxu0 0.0
      %2455 = vmatprep.subr.mxu0 0.0
      %2456 = vmatpush1.msra.mxu0 0.0
      %2457 = vmatprep.subr.mxu0 0.0
      %2458 = vmatpush1.msra.mxu0 0.0
      %2459 = vmatprep.subr.mxu0 0.0
      %2460 = vmatpush1.msra.mxu0 0.0
      %2461 = vmatprep.subr.mxu0 0.0
      %2462 = vmatpush1.msra.mxu0 0.0
      %2463 = vmatprep.subr.mxu0 0.0
      %2464 = vmatpush1.msra.mxu0 0.0
      %2465 = vmatprep.subr.mxu0 0.0
      %2466 = vmatpush1.msra.mxu0 0.0
      %2467 = vmatprep.subr.mxu0 0.0
      %2468 = vmatpush1.msra.mxu0 0.0
      %2469 = vmatprep.subr.mxu0 0.0
      %2470 = vmatpush1.msra.mxu0 0.0
      %2471 = vmatprep.subr.mxu0 0.0
      %2472 = vmatpush1.msra.mxu0 0.0
      %2473 = vmatprep.subr.mxu0 0.0
      %2474 = vmatpush1.msra.mxu0 0.0
      %2475 = vmatprep.subr.mxu0 0.0
      %2476 = vmatpush1.msra.mxu0 0.0
      %2477 = vmatprep.subr.mxu0 0.0
      %2478 = vmatpush1.msra.mxu0 0.0
      %2479 = vmatprep.subr.mxu0 0.0
      %2480 = vmatpush1.msra.mxu0 0.0
      %2481 = vmatprep.subr.mxu0 0.0
      %2482 = vmatpush1.msra.mxu0 0.0
      %2483 = vmatprep.subr.mxu0 0.0
      %2484 = vmatpush1.msra.mxu0 0.0
      %2485 = vmatprep.subr.mxu0 0.0
      %2486 = vmatpush1.msra.mxu0 0.0
      %2487 = vmatprep.subr.mxu0 0.0
      %2488 = vmatpush1.msra.mxu0 0.0
      %2489 = vmatprep.subr.mxu0 0.0
      %2490 = vmatpush1.msra.mxu0 0.0
      %2491 = vmatprep.mubr.f32.mxu0 0.0
      %v2492 = vand.u32 %v2189, 4294901760
      %v2493 = vsub.f32 %v2189, %v2492
      %v2494 = vand.u32 %v2493, 4294901760
      %2495 = vmatmul.mubr.f32.gmra.mrb[0].mxu0 %v2494
      %v2496 = vpop.f32.mrb[0].mxu0
      %v2497 = vadd.f32 %v2422, %v2496
      %v2498 = vpop.f32.mrb[0].mxu0
      %2499 = vdwg.mxu0
      %2500 = vmatprep.subr.mxu0 0.0
      %v2501 = vand.u32 %v2179, 4294901760
      %v2502 = vsub.f32 %v2179, %v2501
      %v2503 = vand.u32 %v2502, 4294901760
      %2504 = vmatpush1.msra.mxu0 %v2503
      %2505 = vmatprep.subr.mxu0 0.0
      %v2506 = vand.u32 %v2180, 4294901760
      %v2507 = vsub.f32 %v2180, %v2506
      %v2508 = vand.u32 %v2507, 4294901760
      %2509 = vmatpush1.msra.mxu0 %v2508
      %2510 = vmatprep.subr.mxu0 0.0
      %2511 = vmatpush1.msra.mxu0 0.0
      %2512 = vmatprep.subr.mxu0 0.0
      %2513 = vmatpush1.msra.mxu0 0.0
      %2514 = vmatprep.subr.mxu0 0.0
      %2515 = vmatpush1.msra.mxu0 0.0
      %2516 = vmatprep.subr.mxu0 0.0
      %2517 = vmatpush1.msra.mxu0 0.0
      %2518 = vmatprep.subr.mxu0 0.0
      %2519 = vmatpush1.msra.mxu0 0.0
      %2520 = vmatprep.subr.mxu0 0.0
      %2521 = vmatpush1.msra.mxu0 0.0
      %2522 = vmatprep.subr.mxu0 0.0
      %2523 = vmatpush1.msra.mxu0 0.0
      %2524 = vmatprep.subr.mxu0 0.0
      %2525 = vmatpush1.msra.mxu0 0.0
      %2526 = vmatprep.subr.mxu0 0.0
      %2527 = vmatpush1.msra.mxu0 0.0
      %2528 = vmatprep.subr.mxu0 0.0
      %2529 = vmatpush1.msra.mxu0 0.0
      %2530 = vmatprep.subr.mxu0 0.0
      %2531 = vmatpush1.msra.mxu0 0.0
      %2532 = vmatprep.subr.mxu0 0.0
      %2533 = vmatpush1.msra.mxu0 0.0
      %2534 = vmatprep.subr.mxu0 0.0
      %2535 = vmatpush1.msra.mxu0 0.0
      %2536 = vmatprep.subr.mxu0 0.0
      %2537 = vmatpush1.msra.mxu0 0.0
      %2538 = vmatprep.subr.mxu0 0.0
      %2539 = vmatpush1.msra.mxu0 0.0
      %2540 = vmatprep.subr.mxu0 0.0
      %2541 = vmatpush1.msra.mxu0 0.0
      %2542 = vmatprep.subr.mxu0 0.0
      %2543 = vmatpush1.msra.mxu0 0.0
      %2544 = vmatprep.subr.mxu0 0.0
      %2545 = vmatpush1.msra.mxu0 0.0
      %2546 = vmatprep.subr.mxu0 0.0
      %2547 = vmatpush1.msra.mxu0 0.0
      %2548 = vmatprep.subr.mxu0 0.0
      %2549 = vmatpush1.msra.mxu0 0.0
      %2550 = vmatprep.subr.mxu0 0.0
      %2551 = vmatpush1.msra.mxu0 0.0
      %2552 = vmatprep.subr.mxu0 0.0
      %2553 = vmatpush1.msra.mxu0 0.0
      %2554 = vmatprep.subr.mxu0 0.0
      %2555 = vmatpush1.msra.mxu0 0.0
      %2556 = vmatprep.subr.mxu0 0.0
      %2557 = vmatpush1.msra.mxu0 0.0
      %2558 = vmatprep.subr.mxu0 0.0
      %2559 = vmatpush1.msra.mxu0 0.0
      %2560 = vmatprep.subr.mxu0 0.0
      %2561 = vmatpush1.msra.mxu0 0.0
      %2562 = vmatprep.subr.mxu0 0.0
      %2563 = vmatpush1.msra.mxu0 0.0
      %2564 = vmatprep.subr.mxu0 0.0
      %2565 = vmatpush1.msra.mxu0 0.0
      %2566 = vmatprep.subr.mxu0 0.0
      %2567 = vmatpush1.msra.mxu0 0.0
      %2568 = vmatprep.subr.mxu0 0.0
      %2569 = vmatpush1.msra.mxu0 0.0
      %2570 = vmatprep.mubr.f32.mxu0 0.0
      %v2571 = vand.u32 %v2189, 4294901760
      %2572 = vmatmul.mubr.f32.gmra.mrb[0].mxu0 %v2571
      %v2573 = vpop.f32.mrb[0].mxu0
      %v2574 = vadd.f32 %v2497, %v2573
      %v2575 = vpop.f32.mrb[0].mxu0
      %2576 = vdwg.mxu0
      %2577 = vmatprep.subr.mxu0 0.0
      %v2578 = vand.u32 %v2179, 4294901760
      %2579 = vmatpush1.msra.mxu0 %v2578
      %2580 = vmatprep.subr.mxu0 0.0
      %v2581 = vand.u32 %v2180, 4294901760
      %2582 = vmatpush1.msra.mxu0 %v2581
      %2583 = vmatprep.subr.mxu0 0.0
      %2584 = vmatpush1.msra.mxu0 0.0
      %2585 = vmatprep.subr.mxu0 0.0
      %2586 = vmatpush1.msra.mxu0 0.0
      %2587 = vmatprep.subr.mxu0 0.0
      %2588 = vmatpush1.msra.mxu0 0.0
      %2589 = vmatprep.subr.mxu0 0.0
      %2590 = vmatpush1.msra.mxu0 0.0
      %2591 = vmatprep.subr.mxu0 0.0
      %2592 = vmatpush1.msra.mxu0 0.0
      %2593 = vmatprep.subr.mxu0 0.0
      %2594 = vmatpush1.msra.mxu0 0.0
      %2595 = vmatprep.subr.mxu0 0.0
      %2596 = vmatpush1.msra.mxu0 0.0
      %2597 = vmatprep.subr.mxu0 0.0
      %2598 = vmatpush1.msra.mxu0 0.0
      %2599 = vmatprep.subr.mxu0 0.0
      %2600 = vmatpush1.msra.mxu0 0.0
      %2601 = vmatprep.subr.mxu0 0.0
      %2602 = vmatpush1.msra.mxu0 0.0
      %2603 = vmatprep.subr.mxu0 0.0
      %2604 = vmatpush1.msra.mxu0 0.0
      %2605 = vmatprep.subr.mxu0 0.0
      %2606 = vmatpush1.msra.mxu0 0.0
      %2607 = vmatprep.subr.mxu0 0.0
      %2608 = vmatpush1.msra.mxu0 0.0
      %2609 = vmatprep.subr.mxu0 0.0
      %2610 = vmatpush1.msra.mxu0 0.0
      %2611 = vmatprep.subr.mxu0 0.0
      %2612 = vmatpush1.msra.mxu0 0.0
      %2613 = vmatprep.subr.mxu0 0.0
      %2614 = vmatpush1.msra.mxu0 0.0
      %2615 = vmatprep.subr.mxu0 0.0
      %2616 = vmatpush1.msra.mxu0 0.0
      %2617 = vmatprep.subr.mxu0 0.0
      %2618 = vmatpush1.msra.mxu0 0.0
      %2619 = vmatprep.subr.mxu0 0.0
      %2620 = vmatpush1.msra.mxu0 0.0
      %2621 = vmatprep.subr.mxu0 0.0
      %2622 = vmatpush1.msra.mxu0 0.0
      %2623 = vmatprep.subr.mxu0 0.0
      %2624 = vmatpush1.msra.mxu0 0.0
      %2625 = vmatprep.subr.mxu0 0.0
      %2626 = vmatpush1.msra.mxu0 0.0
      %2627 = vmatprep.subr.mxu0 0.0
      %2628 = vmatpush1.msra.mxu0 0.0
      %2629 = vmatprep.subr.mxu0 0.0
      %2630 = vmatpush1.msra.mxu0 0.0
      %2631 = vmatprep.subr.mxu0 0.0
      %2632 = vmatpush1.msra.mxu0 0.0
      %2633 = vmatprep.subr.mxu0 0.0
      %2634 = vmatpush1.msra.mxu0 0.0
      %2635 = vmatprep.subr.mxu0 0.0
      %2636 = vmatpush1.msra.mxu0 0.0
      %2637 = vmatprep.subr.mxu0 0.0
      %2638 = vmatpush1.msra.mxu0 0.0
      %2639 = vmatprep.subr.mxu0 0.0
      %2640 = vmatpush1.msra.mxu0 0.0
      %2641 = vmatprep.subr.mxu0 0.0
      %2642 = vmatpush1.msra.mxu0 0.0
      %2643 = vmatprep.mubr.f32.mxu0 0.0
      %v2644 = vand.u32 %v2189, 4294901760
      %2645 = vmatmul.mubr.f32.gmra.mrb[0].mxu0 %v2644
      %v2646 = vpop.f32.mrb[0].mxu0
      %v2647 = vadd.f32 %v2574, %v2646
      %v2648 = vpop.f32.mrb[0].mxu0
      %2649 = vdwg.mxu0
      %v2650 = vlaneseq
      %v2651 = vand.u32 %v2650, 127
      %vm2652 = vcmp.ge.s32.totalorder %v2651, 41
      %vm2653 = vcmp.lt.s32.totalorder %v2651, 45
      %vm2654 = vmand %vm2652, %vm2653
      %v2655 = vsub.f32 0.0, %v2647
      %v2656 = vmul.f32 %v2655, 1.442695
      %v2657 = vpow.pop %v2656
      %v2658 = vadd.f32 %v2657, 1.0
      %v2659 = vrcp.pop %v2658
      %v2660 = vmul.f32 %v2658, %v2659
      %v2661 = vsub.f32 2.0, %v2660
      %v2662 = vmul.f32 %v2659, %v2661
      %v2663 = vsel %vm2654, %v2647, -3.4028235e+38
      %vm2664 = vcmask 1041408
      %v2665 = vsel %vm2664, %v2663, -inf
      %2666 = vmax.xlane.f32.xlu0 %v2665
      %v2667 = vpop.xlane.xlu0 %2666
      %v2668 = vsub.f32 %v2663, %v2667
      %v2669 = vmul.f32 %v2668, 1.442695
      %v2670 = vpow.pop %v2669
      %v2671 = vsel %vm2654, %v2670, 0.0
      %v2672 = vsel %vm2664, %v2671, 0.0
      %2673 = vadd.xlane.f32.xlu0 %v2672
      %v2674 = vpop.xlane.xlu0 %2673
      %v2675 = vrcp.pop %v2674
      %v2676 = vmul.f32 %v2674, %v2675
      %v2677 = vsub.f32 2.0, %v2676
      %v2678 = vmul.f32 %v2675, %v2677
      %v2679 = vmul.f32 %v2671, %v2678
      %v2680 = vsel %vm2653, %v2662, 0.0
      %v2681 = vsel %vm2654, %v2679, %v2680
      %2682 = vst [vmem:[#allocation15] sm:$0x3] %v2681
    $region69: #{tpu_custom_call.1} parent=1 // pred_fallthru
      _
    // Predicated region
    $region70: #{tpu_custom_call.1} parent=1 // pred_check
      _
    $region71: #{tpu_custom_call.1} parent=1 // pred_check_branch
      %2684 = sbr.rel (0) target = $region73
    $region72: #{tpu_custom_call.1} parent=1 // pred_region
      %s2686 = ssub.s32 32, 32
      %2687 = vsyncadd [#allocation8], %s2686
      %s2689 = sshll.u32 [#allocation15], 4
      %s2690 = int_to_ptr.vmem [resolvable:$true] %s2689
      %2692 = dma.vmem_to_hbm [thread:$0]  %s2690, 32, %s9, [#allocation8]
    $region73: #{tpu_custom_call.1} parent=1 // pred_fallthru
      _
    // Predicated region
    $region74: #{tpu_custom_call.1} parent=1 // pred_check
      _
    $region75: #{tpu_custom_call.1} parent=1 // pred_check_branch
      %2694 = sbr.rel (0) target = $region77
    $region76: #{tpu_custom_call.1} parent=1 // pred_region
      %2695 = dma.done [#allocation8], 32
    $region77: #{tpu_custom_call.1} parent=1 // pred_fallthru
      _
    %2696 = vsyncpa [#allocation7], 1
    %2697 = vsyncpa [#allocation10], 1
    %2698 = vsyncpa [#allocation13], 1
    %2699 = vsyncpa [#allocation8], 1

</llo_original>
